<compile_context>
chip_gen: v7x
topology: tpu7x:2x2x1
jax: 0.10.0
libtpu: 0.0.40
codegen_flags: <defaults>
</compile_context>

<pallas_src>
import functools

import jax
import jax.numpy as jnp
from jax import lax
from jax.experimental import pallas as pl
from jax.experimental.pallas import tpu as pltpu

_BT_CAP = 64                       # batch-tile cap: <~10 MiB peak VMEM/step everywhere
_VMEM_LIMIT = 32 * 1024 * 1024     # explicit scoped-VMEM limit (safe on v5e/v6e/v7x)


# ---------------------------------------------------------------------------
# Fused whole-network kernel (one grid step = one batch tile of `bt` images)
# ---------------------------------------------------------------------------
def _lenet_kernel(x_ref, w1_ref, b1_ref, w2_ref, b2_ref,
                  wf1_ref, bf1_ref, wf2_ref, bf2_ref, wf3_ref, bf3_ref,
                  out_ref, *, bt):
    f32, bf16 = jnp.float32, jnp.bfloat16

    # conv1 (pad=2 applied on host): 5 per-kh MXU matmuls.  x rows = (h_pad, n),
    # so each kh tap is one contiguous 28*bt-row slice; the kw taps and the
    # (dw, pw, c) output lane layout are folded into w1[kh] (zeros elsewhere).
    x = x_ref[0]                                                   # [32*bt, 32] bf16
    y1 = jnp.dot(x[0:28 * bt, :], w1_ref[0], preferred_element_type=f32)
    for kh in range(1, 5):
        y1 = y1 + jnp.dot(x[kh * bt:(kh + 28) * bt, :], w1_ref[kh],
                          preferred_element_type=f32)
    y1 = jnp.maximum(y1 + b1_ref[...], 0.0)                        # [28*bt, 256] f32

    # maxpool1: dw = aligned 128-lane halves, dh = aligned bt-row pairs.
    pw1 = jnp.maximum(y1[:, :128], y1[:, 128:])                    # [28*bt, 128]
    p1 = jnp.concatenate(
        [jnp.maximum(pw1[(2 * ph) * bt:(2 * ph + 1) * bt, :],
                     pw1[(2 * ph + 1) * bt:(2 * ph + 2) * bt, :])
         for ph in range(14)], axis=0).astype(bf16)                # [14*bt, 128]

    # conv2: 5 per-kh matmuls; kw/channel selection folded into zero-padded w2.
    y2 = jnp.dot(p1[0:10 * bt, :], w2_ref[0], preferred_element_type=f32)
    for kh in range(1, 5):
        y2 = y2 + jnp.dot(p1[kh * bt:(kh + 10) * bt, :], w2_ref[kh],
                          preferred_element_type=f32)
    y2 = jnp.maximum(y2 + b2_ref[...], 0.0)                        # [10*bt, 256] f32

    # maxpool2 (same aligned halves / pairs); keep the five ih row-blocks apart,
    # they feed fc1 directly (the flatten is absorbed into wf1).
    pw2 = jnp.maximum(y2[:, :128], y2[:, 128:])                    # [10*bt, 128]
    p2 = [jnp.maximum(pw2[(2 * ih) * bt:(2 * ih + 1) * bt, :],
                      pw2[(2 * ih + 1) * bt:(2 * ih + 2) * bt, :]).astype(bf16)
          for ih in range(5)]                                      # 5 x [bt, 128]

    # fc1: PyTorch (C,H,W) flatten absorbed into 5 per-ih zero-padded weight blocks.
    h = jnp.dot(p2[0], wf1_ref[0], preferred_element_type=f32)
    for ih in range(1, 5):
        h = h + jnp.dot(p2[ih], wf1_ref[ih], preferred_element_type=f32)
    h = jnp.maximum(h + bf1_ref[...], 0.0)                         # [bt, 120]

    # fc2 -> fc3 (dropout = identity at inference).
    h = jnp.maximum(
        jnp.dot(h.astype(bf16), wf2_ref[...], preferred_element_type=f32)
        + bf2_ref[...], 0.0)                                       # [bt, 84]
    out = (jnp.dot(h.astype(bf16), wf3_ref[...], preferred_element_type=f32)
           + bf3_ref[...])                                         # [bt, 128] lane-dense
    out_ref[0] = out.astype(out_ref.dtype)


# ---------------------------------------------------------------------------
# Host-side glue: batch padding, conv1 pad=2, (h, n) row layout, pallas_call
# ---------------------------------------------------------------------------
def _round_up(a, m):
    return ((a + m - 1) // m) * m


def _pick_batch_tile(n):
    # bt multiple of 8 (all row slices stay sublane-tile aligned); aim for >=2
    # grid steps so both v7x TensorCores get work; cap by the VMEM budget.
    # (On v6e one could raise _BT_CAP further; on v5e pl.Buffered(3) on the input
    #  spec could hide the slower HBM, but the input is tiny after de-inflation.)
    return max(8, min(_BT_CAP, _round_up(max(n // 2, 1), 8)))


def _prep_input(x_nchw, bt):
    """Pad batch to a multiple of bt, apply conv1's pad=2, and lay rows out as
    (h_pad, n) so the kernel's per-kh conv1 taps are contiguous row slices."""
    n = x_nchw.shape[0]
    n_pad = _round_up(n, bt)
    g = n_pad // bt
    x = jnp.pad(x_nchw[:, 0], ((0, n_pad - n), (2, 2), (2, 2)))    # [n_pad, 32, 32]
    x = x.reshape(g, bt, 32, 32).transpose(0, 2, 1, 3).reshape(g, 32 * bt, 32)
    return x.astype(jnp.bfloat16), g, n_pad


def lenet_forward(x_nchw, kp, *, num_classes=10):
    n = x_nchw.shape[0]
    bt = _pick_batch_tile(n)
    xh, g, n_pad = _prep_input(x_nchw, bt)

    def full(a):  # grid-invariant weight block: DMA'd once, stays VMEM-resident
        nd = a.ndim
        return pl.BlockSpec(a.shape, lambda i, _nd=nd: (0,) * _nd)

    weight_names = ("w1", "b1", "w2", "b2", "wf1", "bf1", "wf2", "bf2", "wf3", "bf3")
    in_specs = [pl.BlockSpec((1, 32 * bt, 32), lambda i: (i, 0, 0))]
    in_specs += [full(kp[name]) for name in weight_names]

    out = pl.pallas_call(
        functools.partial(_lenet_kernel, bt=bt),
        out_shape=jax.ShapeDtypeStruct((g, bt, 128), jnp.float32),
        grid=(g,),
        in_specs=in_specs,
        out_specs=pl.BlockSpec((1, bt, 128), lambda i: (i, 0, 0)),
        compiler_params=pltpu.CompilerParams(
            dimension_semantics=("parallel",),
            vmem_limit_bytes=_VMEM_LIMIT),
    )(xh, *[kp[name] for name in weight_names])
    return out.reshape(n_pad, 128)[:n, :num_classes]


# ---------------------------------------------------------------------------
# Parameters: synthetic PyTorch-layout init + conversion to kernel layouts
# ---------------------------------------------------------------------------
def init_torch_params(key, num_classes=10):
    shapes = [
        ("conv1.weight", (6, 1, 5, 5)), ("conv1.bias", (6,)),
        ("conv2.weight", (16, 6, 5, 5)), ("conv2.bias", (16,)),
        ("fc1.weight", (120, 400)), ("fc1.bias", (120,)),
        ("fc2.weight", (84, 120)), ("fc2.bias", (84,)),
        ("fc3.weight", (num_classes, 84)), ("fc3.bias", (num_classes,)),
    ]
    ks = jax.random.split(key, len(shapes))
    return {name: jax.random.normal(k, shp, jnp.float32) * 0.1
            for (name, shp), k in zip(shapes, ks)}


def prepare_params(tp, num_classes=10):
    """PyTorch-layout LeNet parameters -> fused-kernel layouts.

    Conv / fc weights become zero-padded block matrices so every in-kernel step
    is a tile-aligned slice, a lane/row-half max, or a plain 2-D matmul.  Matmul
    weights are bf16 (f32 MXU accumulation); biases stay f32.
    """
    f32, bf16 = jnp.float32, jnp.bfloat16
    c1w, c1b = tp["conv1.weight"].astype(f32), tp["conv1.bias"].astype(f32)
    c2w, c2b = tp["conv2.weight"].astype(f32), tp["conv2.bias"].astype(f32)
    f1w, f1b = tp["fc1.weight"].astype(f32), tp["fc1.bias"].astype(f32)
    f2w, f2b = tp["fc2.weight"].astype(f32), tp["fc2.bias"].astype(f32)
    f3w, f3b = tp["fc3.weight"].astype(f32), tp["fc3.bias"].astype(f32)
    nc = f3w.shape[0]

    # conv1 -> w1[kh] in [32, 256]: maps input w_pad lanes to output lanes
    # l = dw*128 + pw*6 + c with w_out = 2*pw + dw (pool halves land on lane 128).
    w_out = jnp.arange(28)
    lane1 = (w_out % 2) * 128 + (w_out // 2) * 6
    L1 = jax.nn.one_hot(lane1[:, None] + jnp.arange(6)[None, :], 256, dtype=f32)   # [o,c,l]
    S1 = jax.nn.one_hot(w_out[None, :] + jnp.arange(5)[:, None], 32, dtype=f32)    # [kw,o,p]
    w1 = jnp.einsum("chk,kop,ocl->hpl", c1w[:, 0], S1, L1)                         # [5,32,256]
    b1 = jnp.einsum("ocl,c->l", L1, c1b).reshape(1, 256)

    # conv2 -> w2[kh] in [128, 256]: input lanes (pw*6 + ci) -> output lanes
    # l = dj*128 + pjh*16 + co with j = 2*pjh + dj; kw selection folded in.
    j_out = jnp.arange(10)
    lane2 = (j_out % 2) * 128 + (j_out // 2) * 16
    L2 = jax.nn.one_hot(lane2[:, None] + jnp.arange(16)[None, :], 256, dtype=f32)  # [j,co,l]
    row2 = (j_out[None, :] + jnp.arange(5)[:, None]) * 6
    R2 = jax.nn.one_hot(row2[:, :, None] + jnp.arange(6)[None, None, :], 128,
                        dtype=f32)                                                 # [kw,j,ci,p]
    w2 = jnp.einsum("oihk,kjip,jol->hpl", c2w, R2, L2)                             # [5,128,256]
    b2 = jnp.einsum("jol,o->l", L2, c2b).reshape(1, 256)

    # fc1 -> wf1[ih] in [128, 120]: absorbs the PyTorch (C,H,W) flatten; rows use
    # the pool2 lane layout (iw*16 + co), zero-padded 80 -> 128.
    wf1 = jnp.transpose(f1w.reshape(120, 16, 5, 5), (2, 3, 1, 0)).reshape(5, 80, 120)
    wf1 = jnp.pad(wf1, ((0, 0), (0, 48), (0, 0)))

    # fc3 -> lane-dense [84, 128] (classes zero-padded) for unmasked lane stores.
    wf3 = jnp.pad(f3w.T, ((0, 0), (0, 128 - nc)))
    bf3 = jnp.pad(f3b, (0, 128 - nc)).reshape(1, 128)

    return {
        "w1": w1.astype(bf16), "b1": b1,
        "w2": w2.astype(bf16), "b2": b2,
        "wf1": wf1.astype(bf16), "bf1": f1b.reshape(1, 120),
        "wf2": f2w.T.astype(bf16), "bf2": f2b.reshape(1, 84),
        "wf3": wf3.astype(bf16), "bf3": bf3,
    }


# ---------------------------------------------------------------------------
# Pure-XLA reference (for correctness check)
# ---------------------------------------------------------------------------
def reference_forward(x, tp):
    dn = ("NCHW", "OIHW", "NCHW")
    y = lax.conv_general_dilated(x, tp["conv1.weight"], (1, 1), ((2, 2), (2, 2)),
                                 dimension_numbers=dn)
    y = jnp.maximum(y + tp["conv1.bias"][None, :, None, None], 0.0)
    y = lax.reduce_window(y, -jnp.inf, lax.max, (1, 1, 2, 2), (1, 1, 2, 2), "VALID")
    y = lax.conv_general_dilated(y, tp["conv2.weight"], (1, 1), "VALID",
                                 dimension_numbers=dn)
    y = jnp.maximum(y + tp["conv2.bias"][None, :, None, None], 0.0)
    y = lax.reduce_window(y, -jnp.inf, lax.max, (1, 1, 2, 2), (1, 1, 2, 2), "VALID")
    h = y.reshape(y.shape[0], -1)
    h = jnp.maximum(h @ tp["fc1.weight"].T + tp["fc1.bias"], 0.0)
    h = jnp.maximum(h @ tp["fc2.weight"].T + tp["fc2.bias"], 0.0)
    return h @ tp["fc3.weight"].T + tp["fc3.bias"]


if __name__ == "__main__":
    root = jax.random.PRNGKey(0)
    k_in, k_par = jax.random.split(root)
    # LeNet as defined implies 1-channel 28x28 inputs (fc1_input_size = 16*5*5).
    x = jax.random.normal(k_in, (2, 1, 28, 28), jnp.float32)
    torch_params = init_torch_params(k_par, num_classes=10)
    kparams = prepare_params(torch_params, num_classes=10)

    fwd = jax.jit(lambda xx: lenet_forward(xx, kparams, num_classes=10))
    logits = jax.block_until_ready(fwd(x))
    assert logits.shape == (2, 10) and logits.dtype == jnp.float32

    ref = jax.block_until_ready(jax.jit(lambda xx: reference_forward(xx, torch_params))(x))
    # bf16 operands / f32 accumulation vs the f32 XLA reference -> loose tolerance;
    # layout/permutation bugs would still blow far past this.
    if not bool(jnp.allclose(logits, ref, atol=5e-2, rtol=5e-2)):
        raise AssertionError(
            "kernel/reference mismatch, max abs err = "
            f"{float(jnp.max(jnp.abs(logits - ref)))}")
    print("KERNEL_OK")
</pallas_src>

<mosaic_0001>
module attributes {stable_mosaic.version = 11 : i64} {
  func.func @_lenet_kernel(%arg0: i32, %arg1: memref<1x256x32xbf16, #tpu.memory_space<vmem>>, %arg2: memref<5x32x256xbf16, #tpu.memory_space<vmem>>, %arg3: memref<1x256xf32, #tpu.memory_space<vmem>>, %arg4: memref<5x128x256xbf16, #tpu.memory_space<vmem>>, %arg5: memref<1x256xf32, #tpu.memory_space<vmem>>, %arg6: memref<5x128x120xbf16, #tpu.memory_space<vmem>>, %arg7: memref<1x120xf32, #tpu.memory_space<vmem>>, %arg8: memref<120x84xbf16, #tpu.memory_space<vmem>>, %arg9: memref<1x84xf32, #tpu.memory_space<vmem>>, %arg10: memref<84x128xbf16, #tpu.memory_space<vmem>>, %arg11: memref<1x128xf32, #tpu.memory_space<vmem>>, %arg12: memref<1x8x128xf32, #tpu.memory_space<vmem>>) attributes {dimension_semantics = [#tpu.dimension_semantics<parallel>], iteration_bounds = array<i64: 1>, scalar_prefetch = 0 : i64, scratch_operands = 0 : i64, tpu.core_type = #tpu.core_type<tc>, window_params = [{transform_indices = @transform_0, window_bounds = array<i64: 1, 256, 32>}, {pipeline_mode = #tpu.pipeline_mode<synchronous>, transform_indices = @transform_1, window_bounds = array<i64: 5, 32, 256>}, {pipeline_mode = #tpu.pipeline_mode<synchronous>, transform_indices = @transform_2, window_bounds = array<i64: 1, 256>}, {pipeline_mode = #tpu.pipeline_mode<synchronous>, transform_indices = @transform_3, window_bounds = array<i64: 5, 128, 256>}, {pipeline_mode = #tpu.pipeline_mode<synchronous>, transform_indices = @transform_4, window_bounds = array<i64: 1, 256>}, {pipeline_mode = #tpu.pipeline_mode<synchronous>, transform_indices = @transform_5, window_bounds = array<i64: 5, 128, 120>}, {pipeline_mode = #tpu.pipeline_mode<synchronous>, transform_indices = @transform_6, window_bounds = array<i64: 1, 120>}, {pipeline_mode = #tpu.pipeline_mode<synchronous>, transform_indices = @transform_7, window_bounds = array<i64: 120, 84>}, {pipeline_mode = #tpu.pipeline_mode<synchronous>, transform_indices = @transform_8, window_bounds = array<i64: 1, 84>}, {pipeline_mode = #tpu.pipeline_mode<synchronous>, transform_indices = @transform_9, window_bounds = array<i64: 84, 128>}, {pipeline_mode = #tpu.pipeline_mode<synchronous>, transform_indices = @transform_10, window_bounds = array<i64: 1, 128>}, {transform_indices = @transform_11, window_bounds = array<i64: 1, 8, 128>}]} {
    %c0 = arith.constant 0 : index
    %c0_0 = arith.constant 0 : index
    %c0_1 = arith.constant 0 : index
    %0 = vector.load %arg1[%c0, %c0_0, %c0_1] : memref<1x256x32xbf16, #tpu.memory_space<vmem>>, vector<1x256x32xbf16>
    %1 = vector.shape_cast %0 : vector<1x256x32xbf16> to vector<256x32xbf16>
    %2 = vector.extract_strided_slice %1 {offsets = [0, 0], sizes = [224, 32], strides = [1, 1]} : vector<256x32xbf16> to vector<224x32xbf16>
    %c0_2 = arith.constant 0 : index
    %c0_3 = arith.constant 0 : index
    %c0_4 = arith.constant 0 : index
    %3 = vector.load %arg2[%c0_2, %c0_3, %c0_4] : memref<5x32x256xbf16, #tpu.memory_space<vmem>>, vector<1x32x256xbf16>
    %4 = vector.shape_cast %3 : vector<1x32x256xbf16> to vector<32x256xbf16>
    %cst = arith.constant dense<0.000000e+00> : vector<224x256xf32>
    %5 = tpu.matmul %2, %4, %cst {dimension_numbers = #tpu.dot_dimension_numbers<[1], [0], [0], [1], [0, 0, 1, 1], [], []>} : vector<224x32xbf16>, vector<32x256xbf16>, vector<224x256xf32> -> vector<224x256xf32>
    %6 = vector.extract_strided_slice %1 {offsets = [8, 0], sizes = [224, 32], strides = [1, 1]} : vector<256x32xbf16> to vector<224x32xbf16>
    %c1 = arith.constant 1 : index
    %c0_5 = arith.constant 0 : index
    %c0_6 = arith.constant 0 : index
    %7 = vector.load %arg2[%c1, %c0_5, %c0_6] : memref<5x32x256xbf16, #tpu.memory_space<vmem>>, vector<1x32x256xbf16>
    %8 = vector.shape_cast %7 : vector<1x32x256xbf16> to vector<32x256xbf16>
    %cst_7 = arith.constant dense<0.000000e+00> : vector<224x256xf32>
    %9 = tpu.matmul %6, %8, %cst_7 {dimension_numbers = #tpu.dot_dimension_numbers<[1], [0], [0], [1], [0, 0, 1, 1], [], []>} : vector<224x32xbf16>, vector<32x256xbf16>, vector<224x256xf32> -> vector<224x256xf32>
    %10 = arith.addf %5, %9 : vector<224x256xf32>
    %11 = vector.extract_strided_slice %1 {offsets = [16, 0], sizes = [224, 32], strides = [1, 1]} : vector<256x32xbf16> to vector<224x32xbf16>
    %c2 = arith.constant 2 : index
    %c0_8 = arith.constant 0 : index
    %c0_9 = arith.constant 0 : index
    %12 = vector.load %arg2[%c2, %c0_8, %c0_9] : memref<5x32x256xbf16, #tpu.memory_space<vmem>>, vector<1x32x256xbf16>
    %13 = vector.shape_cast %12 : vector<1x32x256xbf16> to vector<32x256xbf16>
    %cst_10 = arith.constant dense<0.000000e+00> : vector<224x256xf32>
    %14 = tpu.matmul %11, %13, %cst_10 {dimension_numbers = #tpu.dot_dimension_numbers<[1], [0], [0], [1], [0, 0, 1, 1], [], []>} : vector<224x32xbf16>, vector<32x256xbf16>, vector<224x256xf32> -> vector<224x256xf32>
    %15 = arith.addf %10, %14 : vector<224x256xf32>
    %16 = vector.extract_strided_slice %1 {offsets = [24, 0], sizes = [224, 32], strides = [1, 1]} : vector<256x32xbf16> to vector<224x32xbf16>
    %c3 = arith.constant 3 : index
    %c0_11 = arith.constant 0 : index
    %c0_12 = arith.constant 0 : index
    %17 = vector.load %arg2[%c3, %c0_11, %c0_12] : memref<5x32x256xbf16, #tpu.memory_space<vmem>>, vector<1x32x256xbf16>
    %18 = vector.shape_cast %17 : vector<1x32x256xbf16> to vector<32x256xbf16>
    %cst_13 = arith.constant dense<0.000000e+00> : vector<224x256xf32>
    %19 = tpu.matmul %16, %18, %cst_13 {dimension_numbers = #tpu.dot_dimension_numbers<[1], [0], [0], [1], [0, 0, 1, 1], [], []>} : vector<224x32xbf16>, vector<32x256xbf16>, vector<224x256xf32> -> vector<224x256xf32>
    %20 = arith.addf %15, %19 : vector<224x256xf32>
    %21 = vector.extract_strided_slice %1 {offsets = [32, 0], sizes = [224, 32], strides = [1, 1]} : vector<256x32xbf16> to vector<224x32xbf16>
    %c4 = arith.constant 4 : index
    %c0_14 = arith.constant 0 : index
    %c0_15 = arith.constant 0 : index
    %22 = vector.load %arg2[%c4, %c0_14, %c0_15] : memref<5x32x256xbf16, #tpu.memory_space<vmem>>, vector<1x32x256xbf16>
    %23 = vector.shape_cast %22 : vector<1x32x256xbf16> to vector<32x256xbf16>
    %cst_16 = arith.constant dense<0.000000e+00> : vector<224x256xf32>
    %24 = tpu.matmul %21, %23, %cst_16 {dimension_numbers = #tpu.dot_dimension_numbers<[1], [0], [0], [1], [0, 0, 1, 1], [], []>} : vector<224x32xbf16>, vector<32x256xbf16>, vector<224x256xf32> -> vector<224x256xf32>
    %25 = arith.addf %20, %24 : vector<224x256xf32>
    %c0_17 = arith.constant 0 : index
    %c0_18 = arith.constant 0 : index
    %26 = vector.load %arg3[%c0_17, %c0_18] : memref<1x256xf32, #tpu.memory_space<vmem>>, vector<1x256xf32>
    %27 = vector.broadcast %26 : vector<1x256xf32> to vector<224x256xf32>
    %28 = arith.addf %25, %27 : vector<224x256xf32>
    %cst_19 = arith.constant 0.000000e+00 : f32
    %29 = vector.broadcast %cst_19 : f32 to vector<224x256xf32>
    %30 = arith.maximumf %28, %29 : vector<224x256xf32>
    %31 = vector.extract_strided_slice %30 {offsets = [0, 0], sizes = [224, 128], strides = [1, 1]} : vector<224x256xf32> to vector<224x128xf32>
    %32 = vector.extract_strided_slice %30 {offsets = [0, 128], sizes = [224, 128], strides = [1, 1]} : vector<224x256xf32> to vector<224x128xf32>
    %33 = arith.maximumf %31, %32 : vector<224x128xf32>
    %34 = vector.extract_strided_slice %33 {offsets = [0, 0], sizes = [8, 128], strides = [1, 1]} : vector<224x128xf32> to vector<8x128xf32>
    %35 = vector.extract_strided_slice %33 {offsets = [8, 0], sizes = [8, 128], strides = [1, 1]} : vector<224x128xf32> to vector<8x128xf32>
    %36 = arith.maximumf %34, %35 : vector<8x128xf32>
    %37 = vector.extract_strided_slice %33 {offsets = [16, 0], sizes = [8, 128], strides = [1, 1]} : vector<224x128xf32> to vector<8x128xf32>
    %38 = vector.extract_strided_slice %33 {offsets = [24, 0], sizes = [8, 128], strides = [1, 1]} : vector<224x128xf32> to vector<8x128xf32>
    %39 = arith.maximumf %37, %38 : vector<8x128xf32>
    %40 = vector.extract_strided_slice %33 {offsets = [32, 0], sizes = [8, 128], strides = [1, 1]} : vector<224x128xf32> to vector<8x128xf32>
    %41 = vector.extract_strided_slice %33 {offsets = [40, 0], sizes = [8, 128], strides = [1, 1]} : vector<224x128xf32> to vector<8x128xf32>
    %42 = arith.maximumf %40, %41 : vector<8x128xf32>
    %43 = vector.extract_strided_slice %33 {offsets = [48, 0], sizes = [8, 128], strides = [1, 1]} : vector<224x128xf32> to vector<8x128xf32>
    %44 = vector.extract_strided_slice %33 {offsets = [56, 0], sizes = [8, 128], strides = [1, 1]} : vector<224x128xf32> to vector<8x128xf32>
    %45 = arith.maximumf %43, %44 : vector<8x128xf32>
    %46 = vector.extract_strided_slice %33 {offsets = [64, 0], sizes = [8, 128], strides = [1, 1]} : vector<224x128xf32> to vector<8x128xf32>
    %47 = vector.extract_strided_slice %33 {offsets = [72, 0], sizes = [8, 128], strides = [1, 1]} : vector<224x128xf32> to vector<8x128xf32>
    %48 = arith.maximumf %46, %47 : vector<8x128xf32>
    %49 = vector.extract_strided_slice %33 {offsets = [80, 0], sizes = [8, 128], strides = [1, 1]} : vector<224x128xf32> to vector<8x128xf32>
    %50 = vector.extract_strided_slice %33 {offsets = [88, 0], sizes = [8, 128], strides = [1, 1]} : vector<224x128xf32> to vector<8x128xf32>
    %51 = arith.maximumf %49, %50 : vector<8x128xf32>
    %52 = vector.extract_strided_slice %33 {offsets = [96, 0], sizes = [8, 128], strides = [1, 1]} : vector<224x128xf32> to vector<8x128xf32>
    %53 = vector.extract_strided_slice %33 {offsets = [104, 0], sizes = [8, 128], strides = [1, 1]} : vector<224x128xf32> to vector<8x128xf32>
    %54 = arith.maximumf %52, %53 : vector<8x128xf32>
    %55 = vector.extract_strided_slice %33 {offsets = [112, 0], sizes = [8, 128], strides = [1, 1]} : vector<224x128xf32> to vector<8x128xf32>
    %56 = vector.extract_strided_slice %33 {offsets = [120, 0], sizes = [8, 128], strides = [1, 1]} : vector<224x128xf32> to vector<8x128xf32>
    %57 = arith.maximumf %55, %56 : vector<8x128xf32>
    %58 = vector.extract_strided_slice %33 {offsets = [128, 0], sizes = [8, 128], strides = [1, 1]} : vector<224x128xf32> to vector<8x128xf32>
    %59 = vector.extract_strided_slice %33 {offsets = [136, 0], sizes = [8, 128], strides = [1, 1]} : vector<224x128xf32> to vector<8x128xf32>
    %60 = arith.maximumf %58, %59 : vector<8x128xf32>
    %61 = vector.extract_strided_slice %33 {offsets = [144, 0], sizes = [8, 128], strides = [1, 1]} : vector<224x128xf32> to vector<8x128xf32>
    %62 = vector.extract_strided_slice %33 {offsets = [152, 0], sizes = [8, 128], strides = [1, 1]} : vector<224x128xf32> to vector<8x128xf32>
    %63 = arith.maximumf %61, %62 : vector<8x128xf32>
    %64 = vector.extract_strided_slice %33 {offsets = [160, 0], sizes = [8, 128], strides = [1, 1]} : vector<224x128xf32> to vector<8x128xf32>
    %65 = vector.extract_strided_slice %33 {offsets = [168, 0], sizes = [8, 128], strides = [1, 1]} : vector<224x128xf32> to vector<8x128xf32>
    %66 = arith.maximumf %64, %65 : vector<8x128xf32>
    %67 = vector.extract_strided_slice %33 {offsets = [176, 0], sizes = [8, 128], strides = [1, 1]} : vector<224x128xf32> to vector<8x128xf32>
    %68 = vector.extract_strided_slice %33 {offsets = [184, 0], sizes = [8, 128], strides = [1, 1]} : vector<224x128xf32> to vector<8x128xf32>
    %69 = arith.maximumf %67, %68 : vector<8x128xf32>
    %70 = vector.extract_strided_slice %33 {offsets = [192, 0], sizes = [8, 128], strides = [1, 1]} : vector<224x128xf32> to vector<8x128xf32>
    %71 = vector.extract_strided_slice %33 {offsets = [200, 0], sizes = [8, 128], strides = [1, 1]} : vector<224x128xf32> to vector<8x128xf32>
    %72 = arith.maximumf %70, %71 : vector<8x128xf32>
    %73 = vector.extract_strided_slice %33 {offsets = [208, 0], sizes = [8, 128], strides = [1, 1]} : vector<224x128xf32> to vector<8x128xf32>
    %74 = vector.extract_strided_slice %33 {offsets = [216, 0], sizes = [8, 128], strides = [1, 1]} : vector<224x128xf32> to vector<8x128xf32>
    %75 = arith.maximumf %73, %74 : vector<8x128xf32>
    %76 = tpu.concatenate %36, %39, %42, %45, %48, %51, %54, %57, %60, %63, %66, %69, %72, %75 in 0 : vector<8x128xf32>, vector<8x128xf32>, vector<8x128xf32>, vector<8x128xf32>, vector<8x128xf32>, vector<8x128xf32>, vector<8x128xf32>, vector<8x128xf32>, vector<8x128xf32>, vector<8x128xf32>, vector<8x128xf32>, vector<8x128xf32>, vector<8x128xf32>, vector<8x128xf32> -> vector<112x128xf32>
    %77 = arith.truncf %76 : vector<112x128xf32> to vector<112x128xbf16>
    %78 = vector.extract_strided_slice %77 {offsets = [0, 0], sizes = [80, 128], strides = [1, 1]} : vector<112x128xbf16> to vector<80x128xbf16>
    %c0_20 = arith.constant 0 : index
    %c0_21 = arith.constant 0 : index
    %c0_22 = arith.constant 0 : index
    %79 = vector.load %arg4[%c0_20, %c0_21, %c0_22] : memref<5x128x256xbf16, #tpu.memory_space<vmem>>, vector<1x128x256xbf16>
    %80 = vector.shape_cast %79 : vector<1x128x256xbf16> to vector<128x256xbf16>
    %cst_23 = arith.constant dense<0.000000e+00> : vector<80x256xf32>
    %81 = tpu.matmul %78, %80, %cst_23 {dimension_numbers = #tpu.dot_dimension_numbers<[1], [0], [0], [1], [0, 0, 1, 1], [], []>} : vector<80x128xbf16>, vector<128x256xbf16>, vector<80x256xf32> -> vector<80x256xf32>
    %82 = vector.extract_strided_slice %77 {offsets = [8, 0], sizes = [80, 128], strides = [1, 1]} : vector<112x128xbf16> to vector<80x128xbf16>
    %c1_24 = arith.constant 1 : index
    %c0_25 = arith.constant 0 : index
    %c0_26 = arith.constant 0 : index
    %83 = vector.load %arg4[%c1_24, %c0_25, %c0_26] : memref<5x128x256xbf16, #tpu.memory_space<vmem>>, vector<1x128x256xbf16>
    %84 = vector.shape_cast %83 : vector<1x128x256xbf16> to vector<128x256xbf16>
    %cst_27 = arith.constant dense<0.000000e+00> : vector<80x256xf32>
    %85 = tpu.matmul %82, %84, %cst_27 {dimension_numbers = #tpu.dot_dimension_numbers<[1], [0], [0], [1], [0, 0, 1, 1], [], []>} : vector<80x128xbf16>, vector<128x256xbf16>, vector<80x256xf32> -> vector<80x256xf32>
    %86 = arith.addf %81, %85 : vector<80x256xf32>
    %87 = vector.extract_strided_slice %77 {offsets = [16, 0], sizes = [80, 128], strides = [1, 1]} : vector<112x128xbf16> to vector<80x128xbf16>
    %c2_28 = arith.constant 2 : index
    %c0_29 = arith.constant 0 : index
    %c0_30 = arith.constant 0 : index
    %88 = vector.load %arg4[%c2_28, %c0_29, %c0_30] : memref<5x128x256xbf16, #tpu.memory_space<vmem>>, vector<1x128x256xbf16>
    %89 = vector.shape_cast %88 : vector<1x128x256xbf16> to vector<128x256xbf16>
    %cst_31 = arith.constant dense<0.000000e+00> : vector<80x256xf32>
    %90 = tpu.matmul %87, %89, %cst_31 {dimension_numbers = #tpu.dot_dimension_numbers<[1], [0], [0], [1], [0, 0, 1, 1], [], []>} : vector<80x128xbf16>, vector<128x256xbf16>, vector<80x256xf32> -> vector<80x256xf32>
    %91 = arith.addf %86, %90 : vector<80x256xf32>
    %92 = vector.extract_strided_slice %77 {offsets = [24, 0], sizes = [80, 128], strides = [1, 1]} : vector<112x128xbf16> to vector<80x128xbf16>
    %c3_32 = arith.constant 3 : index
    %c0_33 = arith.constant 0 : index
    %c0_34 = arith.constant 0 : index
    %93 = vector.load %arg4[%c3_32, %c0_33, %c0_34] : memref<5x128x256xbf16, #tpu.memory_space<vmem>>, vector<1x128x256xbf16>
    %94 = vector.shape_cast %93 : vector<1x128x256xbf16> to vector<128x256xbf16>
    %cst_35 = arith.constant dense<0.000000e+00> : vector<80x256xf32>
    %95 = tpu.matmul %92, %94, %cst_35 {dimension_numbers = #tpu.dot_dimension_numbers<[1], [0], [0], [1], [0, 0, 1, 1], [], []>} : vector<80x128xbf16>, vector<128x256xbf16>, vector<80x256xf32> -> vector<80x256xf32>
    %96 = arith.addf %91, %95 : vector<80x256xf32>
    %97 = vector.extract_strided_slice %77 {offsets = [32, 0], sizes = [80, 128], strides = [1, 1]} : vector<112x128xbf16> to vector<80x128xbf16>
    %c4_36 = arith.constant 4 : index
    %c0_37 = arith.constant 0 : index
    %c0_38 = arith.constant 0 : index
    %98 = vector.load %arg4[%c4_36, %c0_37, %c0_38] : memref<5x128x256xbf16, #tpu.memory_space<vmem>>, vector<1x128x256xbf16>
    %99 = vector.shape_cast %98 : vector<1x128x256xbf16> to vector<128x256xbf16>
    %cst_39 = arith.constant dense<0.000000e+00> : vector<80x256xf32>
    %100 = tpu.matmul %97, %99, %cst_39 {dimension_numbers = #tpu.dot_dimension_numbers<[1], [0], [0], [1], [0, 0, 1, 1], [], []>} : vector<80x128xbf16>, vector<128x256xbf16>, vector<80x256xf32> -> vector<80x256xf32>
    %101 = arith.addf %96, %100 : vector<80x256xf32>
    %c0_40 = arith.constant 0 : index
    %c0_41 = arith.constant 0 : index
    %102 = vector.load %arg5[%c0_40, %c0_41] : memref<1x256xf32, #tpu.memory_space<vmem>>, vector<1x256xf32>
    %103 = vector.broadcast %102 : vector<1x256xf32> to vector<80x256xf32>
    %104 = arith.addf %101, %103 : vector<80x256xf32>
    %cst_42 = arith.constant 0.000000e+00 : f32
    %105 = vector.broadcast %cst_42 : f32 to vector<80x256xf32>
    %106 = arith.maximumf %104, %105 : vector<80x256xf32>
    %107 = vector.extract_strided_slice %106 {offsets = [0, 0], sizes = [80, 128], strides = [1, 1]} : vector<80x256xf32> to vector<80x128xf32>
    %108 = vector.extract_strided_slice %106 {offsets = [0, 128], sizes = [80, 128], strides = [1, 1]} : vector<80x256xf32> to vector<80x128xf32>
    %109 = arith.maximumf %107, %108 : vector<80x128xf32>
    %110 = vector.extract_strided_slice %109 {offsets = [0, 0], sizes = [8, 128], strides = [1, 1]} : vector<80x128xf32> to vector<8x128xf32>
    %111 = vector.extract_strided_slice %109 {offsets = [8, 0], sizes = [8, 128], strides = [1, 1]} : vector<80x128xf32> to vector<8x128xf32>
    %112 = arith.maximumf %110, %111 : vector<8x128xf32>
    %113 = arith.truncf %112 : vector<8x128xf32> to vector<8x128xbf16>
    %114 = vector.extract_strided_slice %109 {offsets = [16, 0], sizes = [8, 128], strides = [1, 1]} : vector<80x128xf32> to vector<8x128xf32>
    %115 = vector.extract_strided_slice %109 {offsets = [24, 0], sizes = [8, 128], strides = [1, 1]} : vector<80x128xf32> to vector<8x128xf32>
    %116 = arith.maximumf %114, %115 : vector<8x128xf32>
    %117 = arith.truncf %116 : vector<8x128xf32> to vector<8x128xbf16>
    %118 = vector.extract_strided_slice %109 {offsets = [32, 0], sizes = [8, 128], strides = [1, 1]} : vector<80x128xf32> to vector<8x128xf32>
    %119 = vector.extract_strided_slice %109 {offsets = [40, 0], sizes = [8, 128], strides = [1, 1]} : vector<80x128xf32> to vector<8x128xf32>
    %120 = arith.maximumf %118, %119 : vector<8x128xf32>
    %121 = arith.truncf %120 : vector<8x128xf32> to vector<8x128xbf16>
    %122 = vector.extract_strided_slice %109 {offsets = [48, 0], sizes = [8, 128], strides = [1, 1]} : vector<80x128xf32> to vector<8x128xf32>
    %123 = vector.extract_strided_slice %109 {offsets = [56, 0], sizes = [8, 128], strides = [1, 1]} : vector<80x128xf32> to vector<8x128xf32>
    %124 = arith.maximumf %122, %123 : vector<8x128xf32>
    %125 = arith.truncf %124 : vector<8x128xf32> to vector<8x128xbf16>
    %126 = vector.extract_strided_slice %109 {offsets = [64, 0], sizes = [8, 128], strides = [1, 1]} : vector<80x128xf32> to vector<8x128xf32>
    %127 = vector.extract_strided_slice %109 {offsets = [72, 0], sizes = [8, 128], strides = [1, 1]} : vector<80x128xf32> to vector<8x128xf32>
    %128 = arith.maximumf %126, %127 : vector<8x128xf32>
    %129 = arith.truncf %128 : vector<8x128xf32> to vector<8x128xbf16>
    %c0_43 = arith.constant 0 : index
    %c0_44 = arith.constant 0 : index
    %c0_45 = arith.constant 0 : index
    %130 = vector.load %arg6[%c0_43, %c0_44, %c0_45] : memref<5x128x120xbf16, #tpu.memory_space<vmem>>, vector<1x128x120xbf16>
    %131 = vector.shape_cast %130 : vector<1x128x120xbf16> to vector<128x120xbf16>
    %cst_46 = arith.constant dense<0.000000e+00> : vector<8x120xf32>
    %132 = tpu.matmul %113, %131, %cst_46 {dimension_numbers = #tpu.dot_dimension_numbers<[1], [0], [0], [1], [0, 0, 1, 1], [], []>} : vector<8x128xbf16>, vector<128x120xbf16>, vector<8x120xf32> -> vector<8x120xf32>
    %c1_47 = arith.constant 1 : index
    %c0_48 = arith.constant 0 : index
    %c0_49 = arith.constant 0 : index
    %133 = vector.load %arg6[%c1_47, %c0_48, %c0_49] : memref<5x128x120xbf16, #tpu.memory_space<vmem>>, vector<1x128x120xbf16>
    %134 = vector.shape_cast %133 : vector<1x128x120xbf16> to vector<128x120xbf16>
    %cst_50 = arith.constant dense<0.000000e+00> : vector<8x120xf32>
    %135 = tpu.matmul %117, %134, %cst_50 {dimension_numbers = #tpu.dot_dimension_numbers<[1], [0], [0], [1], [0, 0, 1, 1], [], []>} : vector<8x128xbf16>, vector<128x120xbf16>, vector<8x120xf32> -> vector<8x120xf32>
    %136 = arith.addf %132, %135 : vector<8x120xf32>
    %c2_51 = arith.constant 2 : index
    %c0_52 = arith.constant 0 : index
    %c0_53 = arith.constant 0 : index
    %137 = vector.load %arg6[%c2_51, %c0_52, %c0_53] : memref<5x128x120xbf16, #tpu.memory_space<vmem>>, vector<1x128x120xbf16>
    %138 = vector.shape_cast %137 : vector<1x128x120xbf16> to vector<128x120xbf16>
    %cst_54 = arith.constant dense<0.000000e+00> : vector<8x120xf32>
    %139 = tpu.matmul %121, %138, %cst_54 {dimension_numbers = #tpu.dot_dimension_numbers<[1], [0], [0], [1], [0, 0, 1, 1], [], []>} : vector<8x128xbf16>, vector<128x120xbf16>, vector<8x120xf32> -> vector<8x120xf32>
    %140 = arith.addf %136, %139 : vector<8x120xf32>
    %c3_55 = arith.constant 3 : index
    %c0_56 = arith.constant 0 : index
    %c0_57 = arith.constant 0 : index
    %141 = vector.load %arg6[%c3_55, %c0_56, %c0_57] : memref<5x128x120xbf16, #tpu.memory_space<vmem>>, vector<1x128x120xbf16>
    %142 = vector.shape_cast %141 : vector<1x128x120xbf16> to vector<128x120xbf16>
    %cst_58 = arith.constant dense<0.000000e+00> : vector<8x120xf32>
    %143 = tpu.matmul %125, %142, %cst_58 {dimension_numbers = #tpu.dot_dimension_numbers<[1], [0], [0], [1], [0, 0, 1, 1], [], []>} : vector<8x128xbf16>, vector<128x120xbf16>, vector<8x120xf32> -> vector<8x120xf32>
    %144 = arith.addf %140, %143 : vector<8x120xf32>
    %c4_59 = arith.constant 4 : index
    %c0_60 = arith.constant 0 : index
    %c0_61 = arith.constant 0 : index
    %145 = vector.load %arg6[%c4_59, %c0_60, %c0_61] : memref<5x128x120xbf16, #tpu.memory_space<vmem>>, vector<1x128x120xbf16>
    %146 = vector.shape_cast %145 : vector<1x128x120xbf16> to vector<128x120xbf16>
    %cst_62 = arith.constant dense<0.000000e+00> : vector<8x120xf32>
    %147 = tpu.matmul %129, %146, %cst_62 {dimension_numbers = #tpu.dot_dimension_numbers<[1], [0], [0], [1], [0, 0, 1, 1], [], []>} : vector<8x128xbf16>, vector<128x120xbf16>, vector<8x120xf32> -> vector<8x120xf32>
    %148 = arith.addf %144, %147 : vector<8x120xf32>
    %c0_63 = arith.constant 0 : index
    %c0_64 = arith.constant 0 : index
    %149 = vector.load %arg7[%c0_63, %c0_64] : memref<1x120xf32, #tpu.memory_space<vmem>>, vector<1x120xf32>
    %150 = vector.broadcast %149 : vector<1x120xf32> to vector<8x120xf32>
    %151 = arith.addf %148, %150 : vector<8x120xf32>
    %cst_65 = arith.constant 0.000000e+00 : f32
    %152 = vector.broadcast %cst_65 : f32 to vector<8x120xf32>
    %153 = arith.maximumf %151, %152 : vector<8x120xf32>
    %154 = arith.truncf %153 : vector<8x120xf32> to vector<8x120xbf16>
    %c0_66 = arith.constant 0 : index
    %c0_67 = arith.constant 0 : index
    %155 = vector.load %arg8[%c0_66, %c0_67] : memref<120x84xbf16, #tpu.memory_space<vmem>>, vector<120x84xbf16>
    %cst_68 = arith.constant dense<0.000000e+00> : vector<8x84xf32>
    %156 = tpu.matmul %154, %155, %cst_68 {dimension_numbers = #tpu.dot_dimension_numbers<[1], [0], [0], [1], [0, 0, 1, 1], [], []>} : vector<8x120xbf16>, vector<120x84xbf16>, vector<8x84xf32> -> vector<8x84xf32>
    %c0_69 = arith.constant 0 : index
    %c0_70 = arith.constant 0 : index
    %157 = vector.load %arg9[%c0_69, %c0_70] : memref<1x84xf32, #tpu.memory_space<vmem>>, vector<1x84xf32>
    %158 = vector.broadcast %157 : vector<1x84xf32> to vector<8x84xf32>
    %159 = arith.addf %156, %158 : vector<8x84xf32>
    %cst_71 = arith.constant 0.000000e+00 : f32
    %160 = vector.broadcast %cst_71 : f32 to vector<8x84xf32>
    %161 = arith.maximumf %159, %160 : vector<8x84xf32>
    %162 = arith.truncf %161 : vector<8x84xf32> to vector<8x84xbf16>
    %c0_72 = arith.constant 0 : index
    %c0_73 = arith.constant 0 : index
    %163 = vector.load %arg10[%c0_72, %c0_73] : memref<84x128xbf16, #tpu.memory_space<vmem>>, vector<84x128xbf16>
    %cst_74 = arith.constant dense<0.000000e+00> : vector<8x128xf32>
    %164 = tpu.matmul %162, %163, %cst_74 {dimension_numbers = #tpu.dot_dimension_numbers<[1], [0], [0], [1], [0, 0, 1, 1], [], []>} : vector<8x84xbf16>, vector<84x128xbf16>, vector<8x128xf32> -> vector<8x128xf32>
    %c0_75 = arith.constant 0 : index
    %c0_76 = arith.constant 0 : index
    %165 = vector.load %arg11[%c0_75, %c0_76] : memref<1x128xf32, #tpu.memory_space<vmem>>, vector<1x128xf32>
    %166 = vector.broadcast %165 : vector<1x128xf32> to vector<8x128xf32>
    %167 = arith.addf %164, %166 : vector<8x128xf32>
    %c0_77 = arith.constant 0 : index
    %c0_78 = arith.constant 0 : index
    %c0_79 = arith.constant 0 : index
    %168 = vector.load %arg12[%c0_77, %c0_78, %c0_79] : memref<1x8x128xf32, #tpu.memory_space<vmem>>, vector<1x8x128xf32>
    %169 = vector.shape_cast %168 : vector<1x8x128xf32> to vector<8x128xf32>
    %170 = vector.shape_cast %167 : vector<8x128xf32> to vector<1x8x128xf32>
    tpu.vector_store %arg12[%c0_77, %c0_78, %c0_79], %170 {strides = array<i32>} : memref<1x8x128xf32, #tpu.memory_space<vmem>>, vector<1x8x128xf32>,
    return
  }
  func.func @transform_0(%arg0: i32) -> (i32, i32, i32) {
    %c0_i32 = arith.constant 0 : i32
    %c0_i32_0 = arith.constant 0 : i32
    %c0_i32_1 = arith.constant 0 : i32
    return %arg0, %c0_i32, %c0_i32_0 : i32, i32, i32
  }
  func.func @transform_1(%arg0: i32) -> (i32, i32, i32) {
    %c0_i32 = arith.constant 0 : i32
    %c0_i32_0 = arith.constant 0 : i32
    %c0_i32_1 = arith.constant 0 : i32
    %c0_i32_2 = arith.constant 0 : i32
    return %c0_i32, %c0_i32_0, %c0_i32_1 : i32, i32, i32
  }
  func.func @transform_2(%arg0: i32) -> (i32, i32) {
    %c0_i32 = arith.constant 0 : i32
    %c0_i32_0 = arith.constant 0 : i32
    %c0_i32_1 = arith.constant 0 : i32
    return %c0_i32, %c0_i32_0 : i32, i32
  }
  func.func @transform_3(%arg0: i32) -> (i32, i32, i32) {
    %c0_i32 = arith.constant 0 : i32
    %c0_i32_0 = arith.constant 0 : i32
    %c0_i32_1 = arith.constant 0 : i32
    %c0_i32_2 = arith.constant 0 : i32
    return %c0_i32, %c0_i32_0, %c0_i32_1 : i32, i32, i32
  }
  func.func @transform_4(%arg0: i32) -> (i32, i32) {
    %c0_i32 = arith.constant 0 : i32
    %c0_i32_0 = arith.constant 0 : i32
    %c0_i32_1 = arith.constant 0 : i32
    return %c0_i32, %c0_i32_0 : i32, i32
  }
  func.func @transform_5(%arg0: i32) -> (i32, i32, i32) {
    %c0_i32 = arith.constant 0 : i32
    %c0_i32_0 = arith.constant 0 : i32
    %c0_i32_1 = arith.constant 0 : i32
    %c0_i32_2 = arith.constant 0 : i32
    return %c0_i32, %c0_i32_0, %c0_i32_1 : i32, i32, i32
  }
  func.func @transform_6(%arg0: i32) -> (i32, i32) {
    %c0_i32 = arith.constant 0 : i32
    %c0_i32_0 = arith.constant 0 : i32
    %c0_i32_1 = arith.constant 0 : i32
    return %c0_i32, %c0_i32_0 : i32, i32
  }
  func.func @transform_7(%arg0: i32) -> (i32, i32) {
    %c0_i32 = arith.constant 0 : i32
    %c0_i32_0 = arith.constant 0 : i32
    %c0_i32_1 = arith.constant 0 : i32
    return %c0_i32, %c0_i32_0 : i32, i32
  }
  func.func @transform_8(%arg0: i32) -> (i32, i32) {
    %c0_i32 = arith.constant 0 : i32
    %c0_i32_0 = arith.constant 0 : i32
    %c0_i32_1 = arith.constant 0 : i32
    return %c0_i32, %c0_i32_0 : i32, i32
  }
  func.func @transform_9(%arg0: i32) -> (i32, i32) {
    %c0_i32 = arith.constant 0 : i32
    %c0_i32_0 = arith.constant 0 : i32
    %c0_i32_1 = arith.constant 0 : i32
    return %c0_i32, %c0_i32_0 : i32, i32
  }
  func.func @transform_10(%arg0: i32) -> (i32, i32) {
    %c0_i32 = arith.constant 0 : i32
    %c0_i32_0 = arith.constant 0 : i32
    %c0_i32_1 = arith.constant 0 : i32
    return %c0_i32, %c0_i32_0 : i32, i32
  }
  func.func @transform_11(%arg0: i32) -> (i32, i32, i32) {
    %c0_i32 = arith.constant 0 : i32
    %c0_i32_0 = arith.constant 0 : i32
    %c0_i32_1 = arith.constant 0 : i32
    return %arg0, %c0_i32, %c0_i32_0 : i32, i32, i32
  }
}

</mosaic_0001>

<llo_original>
// kernel: _lambda_.1
$region0: #{_lambda_.1}
  #allocation0 [shape = 'u32[]', space=smem, size = 0x4, offset = 0x4, fixed_abs, tag = 'smem constant byte address 0x4 - core index']
  #allocation1 [shape = 'u32[144,128]{1,0:T(1,128)}', space=vmem, size = 0x12000, scoped, tag = 'internal scratch']
  %s0 = inlined_call_operand.vmem [shape: bf16[1,256,32], index: 0, kind: input, shape index: {}]
  %s1 = inlined_call_operand.vmem [shape: bf16[5,32,256], index: 1, kind: input, shape index: {}]
  %s2 = inlined_call_operand.vmem [shape: f32[1,256], index: 2, kind: input, shape index: {}]
  %s3 = inlined_call_operand.vmem [shape: bf16[5,128,256], index: 3, kind: input, shape index: {}]
  %s4 = inlined_call_operand.vmem [shape: f32[1,256], index: 4, kind: input, shape index: {}]
  %s5 = inlined_call_operand.vmem [shape: bf16[5,128,120], index: 5, kind: input, shape index: {}]
  %s6 = inlined_call_operand.vmem [shape: f32[1,120], index: 6, kind: input, shape index: {}]
  %s7 = inlined_call_operand.vmem [shape: bf16[120,84], index: 7, kind: input, shape index: {}]
  %s8 = inlined_call_operand.vmem [shape: f32[1,84], index: 8, kind: input, shape index: {}]
  %s9 = inlined_call_operand.vmem [shape: bf16[84,128], index: 9, kind: input, shape index: {}]
  %s10 = inlined_call_operand.vmem [shape: f32[1,128], index: 10, kind: input, shape index: {}]
  %s11 = inlined_call_operand.vmem [shape: f32[1,8,128], index: 11, kind: output, shape index: {}]
  %s12 = sld [smem:[#allocation0]]
  $region54: #{_lambda_.1} parent=0
    _
  %s14 = ssub.s32 1, %s12
  %s15 = scalar_select 0, %s14, %s12
  // Predicated region
  $region2: #{_lambda_.1} parent=0 // pred_check
    _
  $region3: #{_lambda_.1} parent=0 // pred_check_branch
    %17 = sbr.rel (0) target = $region5
  $region4: #{_lambda_.1} parent=0 // pred_region
    _
  $region5: #{_lambda_.1} parent=0 // pred_fallthru
    _
  // Predicated region
  $region6: #{_lambda_.1} parent=0 // pred_check
    _
  $region7: #{_lambda_.1} parent=0 // pred_check_branch
    %19 = sbr.rel (0) target = $region9
  $region8: #{_lambda_.1} parent=0 // pred_region
    _
  $region9: #{_lambda_.1} parent=0 // pred_fallthru
    _
  // Predicated region
  $region10: #{_lambda_.1} parent=0 // pred_check
    _
  $region11: #{_lambda_.1} parent=0 // pred_check_branch
    %21 = sbr.rel (0) target = $region13
  $region12: #{_lambda_.1} parent=0 // pred_region
    _
  $region13: #{_lambda_.1} parent=0 // pred_fallthru
    _
  // Predicated region
  $region14: #{_lambda_.1} parent=0 // pred_check
    _
  $region15: #{_lambda_.1} parent=0 // pred_check_branch
    %23 = sbr.rel (0) target = $region17
  $region16: #{_lambda_.1} parent=0 // pred_region
    _
  $region17: #{_lambda_.1} parent=0 // pred_fallthru
    _
  // Predicated region
  $region18: #{_lambda_.1} parent=0 // pred_check
    _
  $region19: #{_lambda_.1} parent=0 // pred_check_branch
    %25 = sbr.rel (0) target = $region21
  $region20: #{_lambda_.1} parent=0 // pred_region
    _
  $region21: #{_lambda_.1} parent=0 // pred_fallthru
    _
  // Predicated region
  $region22: #{_lambda_.1} parent=0 // pred_check
    _
  $region23: #{_lambda_.1} parent=0 // pred_check_branch
    %27 = sbr.rel (0) target = $region25
  $region24: #{_lambda_.1} parent=0 // pred_region
    _
  $region25: #{_lambda_.1} parent=0 // pred_fallthru
    _
  // Predicated region
  $region26: #{_lambda_.1} parent=0 // pred_check
    _
  $region27: #{_lambda_.1} parent=0 // pred_check_branch
    %29 = sbr.rel (0) target = $region29
  $region28: #{_lambda_.1} parent=0 // pred_region
    _
  $region29: #{_lambda_.1} parent=0 // pred_fallthru
    _
  // Predicated region
  $region30: #{_lambda_.1} parent=0 // pred_check
    _
  $region31: #{_lambda_.1} parent=0 // pred_check_branch
    %31 = sbr.rel (0) target = $region33
  $region32: #{_lambda_.1} parent=0 // pred_region
    _
  $region33: #{_lambda_.1} parent=0 // pred_fallthru
    _
  // Predicated region
  $region34: #{_lambda_.1} parent=0 // pred_check
    _
  $region35: #{_lambda_.1} parent=0 // pred_check_branch
    %33 = sbr.rel (0) target = $region37
  $region36: #{_lambda_.1} parent=0 // pred_region
    _
  $region37: #{_lambda_.1} parent=0 // pred_fallthru
    _
  // Predicated region
  $region38: #{_lambda_.1} parent=0 // pred_check
    _
  $region39: #{_lambda_.1} parent=0 // pred_check_branch
    %35 = sbr.rel (0) target = $region41
  $region40: #{_lambda_.1} parent=0 // pred_region
    _
  $region41: #{_lambda_.1} parent=0 // pred_fallthru
    _
  // Predicated region
  $region42: #{_lambda_.1} parent=0 // pred_check
    _
  $region43: #{_lambda_.1} parent=0 // pred_check_branch
    %37 = sbr.rel (0) target = $region45
  $region44: #{_lambda_.1} parent=0 // pred_region
    _
  $region45: #{_lambda_.1} parent=0 // pred_fallthru
    _
  %v39 = vld [vmem:[%s0] sm:$0xf]
  %v40 = vld [vmem:[%s0 + $0x4] sm:$0xf]
  %v41 = vld [vmem:[%s0 + $0x8] sm:$0xf]
  %v42 = vld [vmem:[%s0 + $0xc] sm:$0xf]
  %v43 = vld [vmem:[%s0 + $0x10] sm:$0xf]
  %v44 = vld [vmem:[%s0 + $0x14] sm:$0xf]
  %v45 = vld [vmem:[%s0 + $0x18] sm:$0xf]
  %v46 = vld [vmem:[%s0 + $0x1c] sm:$0xf]
  %v47 = vld [vmem:[%s0 + $0x20] sm:$0xf]
  %v48 = vld [vmem:[%s0 + $0x24] sm:$0xf]
  %v49 = vld [vmem:[%s0 + $0x28] sm:$0xf]
  %v50 = vld [vmem:[%s0 + $0x2c] sm:$0xf]
  %v51 = vld [vmem:[%s0 + $0x30] sm:$0xf]
  %v52 = vld [vmem:[%s0 + $0x34] sm:$0xf]
  %v53 = vld [vmem:[%s0 + $0x38] sm:$0xf]
  %v54 = vld [vmem:[%s0 + $0x3c] sm:$0xf]
  %v55 = vld [vmem:[%s0 + $0x40] sm:$0xf]
  %v56 = vld [vmem:[%s0 + $0x44] sm:$0xf]
  %v57 = vld [vmem:[%s0 + $0x48] sm:$0xf]
  %v58 = vld [vmem:[%s0 + $0x4c] sm:$0xf]
  %v59 = vld [vmem:[%s0 + $0x50] sm:$0xf]
  %v60 = vld [vmem:[%s0 + $0x54] sm:$0xf]
  %v61 = vld [vmem:[%s0 + $0x58] sm:$0xf]
  %v62 = vld [vmem:[%s0 + $0x5c] sm:$0xf]
  %v63 = vld [vmem:[%s0 + $0x60] sm:$0xf]
  %v64 = vld [vmem:[%s0 + $0x64] sm:$0xf]
  %v65 = vld [vmem:[%s0 + $0x68] sm:$0xf]
  %v66 = vld [vmem:[%s0 + $0x6c] sm:$0xf]
  %v67 = vld [vmem:[%s0 + $0x70] sm:$0xf]
  %v68 = vld [vmem:[%s0 + $0x74] sm:$0xf]
  %v69 = vld [vmem:[%s0 + $0x78] sm:$0xf]
  %v70 = vld [vmem:[%s0 + $0x7c] sm:$0xf]
  %v71 = vld [vmem:[%s1] sm:$0xff]
  %v72 = vld [vmem:[%s1 + $0x8] sm:$0xff]
  %v73 = vld [vmem:[%s1 + $0x10] sm:$0xff]
  %v74 = vld [vmem:[%s1 + $0x18] sm:$0xff]
  %s75 = scalar_lea.vmem %s1, 32
  %v76 = vld [vmem:[%s75] sm:$0xff]
  %v77 = vld [vmem:[%s75 + $0x8] sm:$0xff]
  %v78 = vld [vmem:[%s75 + $0x10] sm:$0xff]
  %v79 = vld [vmem:[%s75 + $0x18] sm:$0xff]
  %v108 = vunpack.c.l.b16 %v40
  %v109 = vunpack.c.l.b16 %v41
  %v110 = vunpack.c.l.b16 %v42
  %v111 = vunpack.c.l.b16 %v43
  %v112 = vunpack.c.l.b16 %v44
  %v113 = vunpack.c.l.b16 %v45
  %v114 = vunpack.c.l.b16 %v46
  %v115 = vunpack.c.l.b16 %v47
  %v116 = vunpack.c.l.b16 %v48
  %v117 = vunpack.c.l.b16 %v49
  %v118 = vunpack.c.l.b16 %v50
  %v119 = vunpack.c.l.b16 %v51
  %v120 = vunpack.c.l.b16 %v52
  %v121 = vunpack.c.l.b16 %v53
  %v122 = vunpack.c.l.b16 %v54
  %v123 = vunpack.c.l.b16 %v55
  %v124 = vunpack.c.l.b16 %v56
  %v125 = vunpack.c.l.b16 %v57
  %v126 = vunpack.c.l.b16 %v58
  %v127 = vunpack.c.l.b16 %v59
  %v128 = vunpack.c.l.b16 %v60
  %v129 = vunpack.c.l.b16 %v61
  %v130 = vunpack.c.l.b16 %v62
  %v131 = vunpack.c.l.b16 %v63
  %v132 = vunpack.c.l.b16 %v64
  %v133 = vunpack.c.l.b16 %v65
  %v134 = vunpack.c.l.b16 %v66
  %v135 = vunpack.c.l.b16 %v67
  %v136 = vpack.c.b16 %v109, %v108
  %v137 = vpack.c.b16 %v111, %v110
  %v138 = vpack.c.b16 %v113, %v112
  %v139 = vpack.c.b16 %v115, %v114
  %v140 = vpack.c.b16 %v117, %v116
  %v141 = vpack.c.b16 %v119, %v118
  %v142 = vpack.c.b16 %v121, %v120
  %v143 = vpack.c.b16 %v123, %v122
  %v144 = vpack.c.b16 %v125, %v124
  %v145 = vpack.c.b16 %v127, %v126
  %v146 = vpack.c.b16 %v129, %v128
  %v147 = vpack.c.b16 %v131, %v130
  %v148 = vpack.c.b16 %v133, %v132
  %v149 = vpack.c.b16 %v135, %v134
  %v154 = vunpack.c.l.b16 %v76
  %v155 = vunpack.c.h.b16 %v76
  %v156 = vunpack.c.l.b16 %v77
  %v157 = vunpack.c.h.b16 %v77
  %v158 = vunpack.c.l.b16 %v78
  %v159 = vunpack.c.h.b16 %v78
  %v160 = vunpack.c.l.b16 %v79
  %v161 = vunpack.c.h.b16 %v79
  %v162 = vpack.c.b16 %v156, %v154
  %v163 = vpack.c.b16 %v157, %v155
  %v164 = vpack.c.b16 %v160, %v158
  %v165 = vpack.c.b16 %v161, %v159
  %vm170 = vcmask 261120
  %v172 = vsel %vm170, %v136, 0
  %v175 = vsel %vm170, %v137, 0
  %v178 = vsel %vm170, %v138, 0
  %v181 = vsel %vm170, %v139, 0
  %v184 = vsel %vm170, %v140, 0
  %v187 = vsel %vm170, %v141, 0
  %v190 = vsel %vm170, %v142, 0
  %v193 = vsel %vm170, %v143, 0
  %v196 = vsel %vm170, %v144, 0
  %v199 = vsel %vm170, %v145, 0
  %v202 = vsel %vm170, %v146, 0
  %v205 = vsel %vm170, %v147, 0
  %v208 = vsel %vm170, %v148, 0
  %v211 = vsel %vm170, %v149, 0
  %213 = vmatprep.subr.bf16.mxu0 %v163
  %214 = vmatpush1.bf16.msra.mxu0 %v162
  %215 = vmatprep.subr.bf16.mxu0 %v165
  %216 = vmatpush1.bf16.msra.mxu0 %v164
  %217 = vmatprep.subr.bf16.mxu0 0
  %218 = vmatpush1.bf16.msra.mxu0 0
  %219 = vmatprep.subr.bf16.mxu0 0
  %220 = vmatpush1.bf16.msra.mxu0 0
  %221 = vmatprep.subr.bf16.mxu0 0
  %222 = vmatpush1.bf16.msra.mxu0 0
  %223 = vmatprep.subr.bf16.mxu0 0
  %224 = vmatpush1.bf16.msra.mxu0 0
  %225 = vmatprep.subr.bf16.mxu0 0
  %226 = vmatpush1.bf16.msra.mxu0 0
  %227 = vmatprep.subr.bf16.mxu0 0
  %228 = vmatpush1.bf16.msra.mxu0 0
  %229 = vmatprep.subr.bf16.mxu0 0
  %230 = vmatpush1.bf16.msra.mxu0 0
  %231 = vmatprep.subr.bf16.mxu0 0
  %232 = vmatpush1.bf16.msra.mxu0 0
  %233 = vmatprep.subr.bf16.mxu0 0
  %234 = vmatpush1.bf16.msra.mxu0 0
  %235 = vmatprep.subr.bf16.mxu0 0
  %236 = vmatpush1.bf16.msra.mxu0 0
  %237 = vmatprep.subr.bf16.mxu0 0
  %238 = vmatpush1.bf16.msra.mxu0 0
  %239 = vmatprep.subr.bf16.mxu0 0
  %240 = vmatpush1.bf16.msra.mxu0 0
  %241 = vmatprep.subr.bf16.mxu0 0
  %242 = vmatpush1.bf16.msra.mxu0 0
  %243 = vmatprep.subr.bf16.mxu0 0
  %244 = vmatpush1.bf16.msra.mxu0 0
  %245 = vmatprep.mubr.bf16.mxu0 0
  %246 = vmatmul.mubr.bf16.gmra.mrb[0].mxu0 %v172
  %v247 = vpop.f32.mrb[0].mxu0
  %v248 = vadd.f32 0.0, %v247
  %v249 = vpop.f32.mrb[0].mxu0
  %v250 = vadd.f32 0.0, %v249
  %v251 = vpop.f32.mrb[0].mxu0
  %v252 = vadd.f32 0.0, %v251
  %v253 = vpop.f32.mrb[0].mxu0
  %v254 = vadd.f32 0.0, %v253
  %255 = vmatprep.mubr.bf16.mxu0 0
  %256 = vmatmul.mubr.bf16.gmra.mrb[0].mxu0 %v175
  %v257 = vpop.f32.mrb[0].mxu0
  %v258 = vadd.f32 0.0, %v257
  %v259 = vpop.f32.mrb[0].mxu0
  %v260 = vadd.f32 0.0, %v259
  %v261 = vpop.f32.mrb[0].mxu0
  %v262 = vadd.f32 0.0, %v261
  %v263 = vpop.f32.mrb[0].mxu0
  %v264 = vadd.f32 0.0, %v263
  %265 = vmatprep.mubr.bf16.mxu0 0
  %266 = vmatmul.mubr.bf16.gmra.mrb[0].mxu0 %v178
  %v267 = vpop.f32.mrb[0].mxu0
  %v268 = vadd.f32 0.0, %v267
  %v269 = vpop.f32.mrb[0].mxu0
  %v270 = vadd.f32 0.0, %v269
  %v271 = vpop.f32.mrb[0].mxu0
  %v272 = vadd.f32 0.0, %v271
  %v273 = vpop.f32.mrb[0].mxu0
  %v274 = vadd.f32 0.0, %v273
  %275 = vmatprep.mubr.bf16.mxu0 0
  %276 = vmatmul.mubr.bf16.gmra.mrb[0].mxu0 %v181
  %v277 = vpop.f32.mrb[0].mxu0
  %v278 = vadd.f32 0.0, %v277
  %v279 = vpop.f32.mrb[0].mxu0
  %v280 = vadd.f32 0.0, %v279
  %v281 = vpop.f32.mrb[0].mxu0
  %v282 = vadd.f32 0.0, %v281
  %v283 = vpop.f32.mrb[0].mxu0
  %v284 = vadd.f32 0.0, %v283
  %285 = vmatprep.mubr.bf16.mxu0 0
  %286 = vmatmul.mubr.bf16.gmra.mrb[0].mxu0 %v184
  %v287 = vpop.f32.mrb[0].mxu0
  %v288 = vadd.f32 0.0, %v287
  %v289 = vpop.f32.mrb[0].mxu0
  %v290 = vadd.f32 0.0, %v289
  %v291 = vpop.f32.mrb[0].mxu0
  %v292 = vadd.f32 0.0, %v291
  %v293 = vpop.f32.mrb[0].mxu0
  %v294 = vadd.f32 0.0, %v293
  %295 = vmatprep.mubr.bf16.mxu0 0
  %296 = vmatmul.mubr.bf16.gmra.mrb[0].mxu0 %v187
  %v297 = vpop.f32.mrb[0].mxu0
  %v298 = vadd.f32 0.0, %v297
  %v299 = vpop.f32.mrb[0].mxu0
  %v300 = vadd.f32 0.0, %v299
  %v301 = vpop.f32.mrb[0].mxu0
  %v302 = vadd.f32 0.0, %v301
  %v303 = vpop.f32.mrb[0].mxu0
  %v304 = vadd.f32 0.0, %v303
  %305 = vmatprep.mubr.bf16.mxu0 0
  %306 = vmatmul.mubr.bf16.gmra.mrb[0].mxu0 %v190
  %v307 = vpop.f32.mrb[0].mxu0
  %v308 = vadd.f32 0.0, %v307
  %v309 = vpop.f32.mrb[0].mxu0
  %v310 = vadd.f32 0.0, %v309
  %v311 = vpop.f32.mrb[0].mxu0
  %v312 = vadd.f32 0.0, %v311
  %v313 = vpop.f32.mrb[0].mxu0
  %v314 = vadd.f32 0.0, %v313
  %315 = vmatprep.mubr.bf16.mxu0 0
  %316 = vmatmul.mubr.bf16.gmra.mrb[0].mxu0 %v193
  %v317 = vpop.f32.mrb[0].mxu0
  %v318 = vadd.f32 0.0, %v317
  %v319 = vpop.f32.mrb[0].mxu0
  %v320 = vadd.f32 0.0, %v319
  %v321 = vpop.f32.mrb[0].mxu0
  %v322 = vadd.f32 0.0, %v321
  %v323 = vpop.f32.mrb[0].mxu0
  %v324 = vadd.f32 0.0, %v323
  %325 = vmatprep.mubr.bf16.mxu0 0
  %326 = vmatmul.mubr.bf16.gmra.mrb[0].mxu0 %v196
  %v327 = vpop.f32.mrb[0].mxu0
  %v328 = vadd.f32 0.0, %v327
  %v329 = vpop.f32.mrb[0].mxu0
  %v330 = vadd.f32 0.0, %v329
  %v331 = vpop.f32.mrb[0].mxu0
  %v332 = vadd.f32 0.0, %v331
  %v333 = vpop.f32.mrb[0].mxu0
  %v334 = vadd.f32 0.0, %v333
  %335 = vmatprep.mubr.bf16.mxu0 0
  %336 = vmatmul.mubr.bf16.gmra.mrb[0].mxu0 %v199
  %v337 = vpop.f32.mrb[0].mxu0
  %v338 = vadd.f32 0.0, %v337
  %v339 = vpop.f32.mrb[0].mxu0
  %v340 = vadd.f32 0.0, %v339
  %v341 = vpop.f32.mrb[0].mxu0
  %v342 = vadd.f32 0.0, %v341
  %v343 = vpop.f32.mrb[0].mxu0
  %v344 = vadd.f32 0.0, %v343
  %345 = vmatprep.mubr.bf16.mxu0 0
  %346 = vmatmul.mubr.bf16.gmra.mrb[0].mxu0 %v202
  %v347 = vpop.f32.mrb[0].mxu0
  %v348 = vadd.f32 0.0, %v347
  %v349 = vpop.f32.mrb[0].mxu0
  %v350 = vadd.f32 0.0, %v349
  %v351 = vpop.f32.mrb[0].mxu0
  %v352 = vadd.f32 0.0, %v351
  %v353 = vpop.f32.mrb[0].mxu0
  %v354 = vadd.f32 0.0, %v353
  %355 = vmatprep.mubr.bf16.mxu0 0
  %356 = vmatmul.mubr.bf16.gmra.mrb[0].mxu0 %v205
  %v357 = vpop.f32.mrb[0].mxu0
  %v358 = vadd.f32 0.0, %v357
  %v359 = vpop.f32.mrb[0].mxu0
  %v360 = vadd.f32 0.0, %v359
  %v361 = vpop.f32.mrb[0].mxu0
  %v362 = vadd.f32 0.0, %v361
  %v363 = vpop.f32.mrb[0].mxu0
  %v364 = vadd.f32 0.0, %v363
  %365 = vmatprep.mubr.bf16.mxu0 0
  %366 = vmatmul.mubr.bf16.gmra.mrb[0].mxu0 %v208
  %v367 = vpop.f32.mrb[0].mxu0
  %v368 = vadd.f32 0.0, %v367
  %v369 = vpop.f32.mrb[0].mxu0
  %v370 = vadd.f32 0.0, %v369
  %v371 = vpop.f32.mrb[0].mxu0
  %v372 = vadd.f32 0.0, %v371
  %v373 = vpop.f32.mrb[0].mxu0
  %v374 = vadd.f32 0.0, %v373
  %375 = vmatprep.mubr.bf16.mxu0 0
  %376 = vmatmul.mubr.bf16.gmra.mrb[0].mxu0 %v211
  %v377 = vpop.f32.mrb[0].mxu0
  %v378 = vadd.f32 0.0, %v377
  %v379 = vpop.f32.mrb[0].mxu0
  %v380 = vadd.f32 0.0, %v379
  %v381 = vpop.f32.mrb[0].mxu0
  %v382 = vadd.f32 0.0, %v381
  %v383 = vpop.f32.mrb[0].mxu0
  %v384 = vadd.f32 0.0, %v383
  %385 = vdwg.mxu0
  %v387 = vunpack.c.l.b16 %v39
  %v388 = vpack.c.b16 %v108, %v387
  %v389 = vpack.c.b16 %v110, %v109
  %v390 = vpack.c.b16 %v112, %v111
  %v391 = vpack.c.b16 %v114, %v113
  %v392 = vpack.c.b16 %v116, %v115
  %v393 = vpack.c.b16 %v118, %v117
  %v394 = vpack.c.b16 %v120, %v119
  %v395 = vpack.c.b16 %v122, %v121
  %v396 = vpack.c.b16 %v124, %v123
  %v397 = vpack.c.b16 %v126, %v125
  %v398 = vpack.c.b16 %v128, %v127
  %v399 = vpack.c.b16 %v130, %v129
  %v400 = vpack.c.b16 %v132, %v131
  %v401 = vpack.c.b16 %v134, %v133
  %v406 = vunpack.c.l.b16 %v71
  %v407 = vunpack.c.h.b16 %v71
  %v408 = vunpack.c.l.b16 %v72
  %v409 = vunpack.c.h.b16 %v72
  %v410 = vunpack.c.l.b16 %v73
  %v411 = vunpack.c.h.b16 %v73
  %v412 = vunpack.c.l.b16 %v74
  %v413 = vunpack.c.h.b16 %v74
  %v414 = vpack.c.b16 %v408, %v406
  %v415 = vpack.c.b16 %v409, %v407
  %v416 = vpack.c.b16 %v412, %v410
  %v417 = vpack.c.b16 %v413, %v411
  %v423 = vsel %vm170, %v388, 0
  %v426 = vsel %vm170, %v389, 0
  %v429 = vsel %vm170, %v390, 0
  %v432 = vsel %vm170, %v391, 0
  %v435 = vsel %vm170, %v392, 0
  %v438 = vsel %vm170, %v393, 0
  %v441 = vsel %vm170, %v394, 0
  %v444 = vsel %vm170, %v395, 0
  %v447 = vsel %vm170, %v396, 0
  %v450 = vsel %vm170, %v397, 0
  %v453 = vsel %vm170, %v398, 0
  %v456 = vsel %vm170, %v399, 0
  %v459 = vsel %vm170, %v400, 0
  %v462 = vsel %vm170, %v401, 0
  %464 = vmatprep.subr.bf16.mxu0 %v415
  %465 = vmatpush1.bf16.msra.mxu0 %v414
  %466 = vmatprep.subr.bf16.mxu0 %v417
  %467 = vmatpush1.bf16.msra.mxu0 %v416
  %468 = vmatprep.subr.bf16.mxu0 0
  %469 = vmatpush1.bf16.msra.mxu0 0
  %470 = vmatprep.subr.bf16.mxu0 0
  %471 = vmatpush1.bf16.msra.mxu0 0
  %472 = vmatprep.subr.bf16.mxu0 0
  %473 = vmatpush1.bf16.msra.mxu0 0
  %474 = vmatprep.subr.bf16.mxu0 0
  %475 = vmatpush1.bf16.msra.mxu0 0
  %476 = vmatprep.subr.bf16.mxu0 0
  %477 = vmatpush1.bf16.msra.mxu0 0
  %478 = vmatprep.subr.bf16.mxu0 0
  %479 = vmatpush1.bf16.msra.mxu0 0
  %480 = vmatprep.subr.bf16.mxu0 0
  %481 = vmatpush1.bf16.msra.mxu0 0
  %482 = vmatprep.subr.bf16.mxu0 0
  %483 = vmatpush1.bf16.msra.mxu0 0
  %484 = vmatprep.subr.bf16.mxu0 0
  %485 = vmatpush1.bf16.msra.mxu0 0
  %486 = vmatprep.subr.bf16.mxu0 0
  %487 = vmatpush1.bf16.msra.mxu0 0
  %488 = vmatprep.subr.bf16.mxu0 0
  %489 = vmatpush1.bf16.msra.mxu0 0
  %490 = vmatprep.subr.bf16.mxu0 0
  %491 = vmatpush1.bf16.msra.mxu0 0
  %492 = vmatprep.subr.bf16.mxu0 0
  %493 = vmatpush1.bf16.msra.mxu0 0
  %494 = vmatprep.subr.bf16.mxu0 0
  %495 = vmatpush1.bf16.msra.mxu0 0
  %496 = vmatprep.mubr.bf16.mxu0 0
  %497 = vmatmul.mubr.bf16.gmra.mrb[0].mxu0 %v423
  %v498 = vpop.f32.mrb[0].mxu0
  %v499 = vadd.f32 %v248, %v498
  %v500 = vpop.f32.mrb[0].mxu0
  %v501 = vadd.f32 %v250, %v500
  %v502 = vpop.f32.mrb[0].mxu0
  %v503 = vadd.f32 %v252, %v502
  %v504 = vpop.f32.mrb[0].mxu0
  %v505 = vadd.f32 %v254, %v504
  %506 = vmatprep.mubr.bf16.mxu0 0
  %507 = vmatmul.mubr.bf16.gmra.mrb[0].mxu0 %v426
  %v508 = vpop.f32.mrb[0].mxu0
  %v509 = vadd.f32 %v258, %v508
  %v510 = vpop.f32.mrb[0].mxu0
  %v511 = vadd.f32 %v260, %v510
  %v512 = vpop.f32.mrb[0].mxu0
  %v513 = vadd.f32 %v262, %v512
  %v514 = vpop.f32.mrb[0].mxu0
  %v515 = vadd.f32 %v264, %v514
  %516 = vmatprep.mubr.bf16.mxu0 0
  %517 = vmatmul.mubr.bf16.gmra.mrb[0].mxu0 %v429
  %v518 = vpop.f32.mrb[0].mxu0
  %v519 = vadd.f32 %v268, %v518
  %v520 = vpop.f32.mrb[0].mxu0
  %v521 = vadd.f32 %v270, %v520
  %v522 = vpop.f32.mrb[0].mxu0
  %v523 = vadd.f32 %v272, %v522
  %v524 = vpop.f32.mrb[0].mxu0
  %v525 = vadd.f32 %v274, %v524
  %526 = vmatprep.mubr.bf16.mxu0 0
  %527 = vmatmul.mubr.bf16.gmra.mrb[0].mxu0 %v432
  %v528 = vpop.f32.mrb[0].mxu0
  %v529 = vadd.f32 %v278, %v528
  %v530 = vpop.f32.mrb[0].mxu0
  %v531 = vadd.f32 %v280, %v530
  %v532 = vpop.f32.mrb[0].mxu0
  %v533 = vadd.f32 %v282, %v532
  %v534 = vpop.f32.mrb[0].mxu0
  %v535 = vadd.f32 %v284, %v534
  %536 = vmatprep.mubr.bf16.mxu0 0
  %537 = vmatmul.mubr.bf16.gmra.mrb[0].mxu0 %v435
  %v538 = vpop.f32.mrb[0].mxu0
  %v539 = vadd.f32 %v288, %v538
  %v540 = vpop.f32.mrb[0].mxu0
  %v541 = vadd.f32 %v290, %v540
  %v542 = vpop.f32.mrb[0].mxu0
  %v543 = vadd.f32 %v292, %v542
  %v544 = vpop.f32.mrb[0].mxu0
  %v545 = vadd.f32 %v294, %v544
  %546 = vmatprep.mubr.bf16.mxu0 0
  %547 = vmatmul.mubr.bf16.gmra.mrb[0].mxu0 %v438
  %v548 = vpop.f32.mrb[0].mxu0
  %v549 = vadd.f32 %v298, %v548
  %v550 = vpop.f32.mrb[0].mxu0
  %v551 = vadd.f32 %v300, %v550
  %v552 = vpop.f32.mrb[0].mxu0
  %v553 = vadd.f32 %v302, %v552
  %v554 = vpop.f32.mrb[0].mxu0
  %v555 = vadd.f32 %v304, %v554
  %556 = vmatprep.mubr.bf16.mxu0 0
  %557 = vmatmul.mubr.bf16.gmra.mrb[0].mxu0 %v441
  %v558 = vpop.f32.mrb[0].mxu0
  %v559 = vadd.f32 %v308, %v558
  %v560 = vpop.f32.mrb[0].mxu0
  %v561 = vadd.f32 %v310, %v560
  %v562 = vpop.f32.mrb[0].mxu0
  %v563 = vadd.f32 %v312, %v562
  %v564 = vpop.f32.mrb[0].mxu0
  %v565 = vadd.f32 %v314, %v564
  %566 = vmatprep.mubr.bf16.mxu0 0
  %567 = vmatmul.mubr.bf16.gmra.mrb[0].mxu0 %v444
  %v568 = vpop.f32.mrb[0].mxu0
  %v569 = vadd.f32 %v318, %v568
  %v570 = vpop.f32.mrb[0].mxu0
  %v571 = vadd.f32 %v320, %v570
  %v572 = vpop.f32.mrb[0].mxu0
  %v573 = vadd.f32 %v322, %v572
  %v574 = vpop.f32.mrb[0].mxu0
  %v575 = vadd.f32 %v324, %v574
  %576 = vmatprep.mubr.bf16.mxu0 0
  %577 = vmatmul.mubr.bf16.gmra.mrb[0].mxu0 %v447
  %v578 = vpop.f32.mrb[0].mxu0
  %v579 = vadd.f32 %v328, %v578
  %v580 = vpop.f32.mrb[0].mxu0
  %v581 = vadd.f32 %v330, %v580
  %v582 = vpop.f32.mrb[0].mxu0
  %v583 = vadd.f32 %v332, %v582
  %v584 = vpop.f32.mrb[0].mxu0
  %v585 = vadd.f32 %v334, %v584
  %586 = vmatprep.mubr.bf16.mxu0 0
  %587 = vmatmul.mubr.bf16.gmra.mrb[0].mxu0 %v450
  %v588 = vpop.f32.mrb[0].mxu0
  %v589 = vadd.f32 %v338, %v588
  %v590 = vpop.f32.mrb[0].mxu0
  %v591 = vadd.f32 %v340, %v590
  %v592 = vpop.f32.mrb[0].mxu0
  %v593 = vadd.f32 %v342, %v592
  %v594 = vpop.f32.mrb[0].mxu0
  %v595 = vadd.f32 %v344, %v594
  %596 = vmatprep.mubr.bf16.mxu0 0
  %597 = vmatmul.mubr.bf16.gmra.mrb[0].mxu0 %v453
  %v598 = vpop.f32.mrb[0].mxu0
  %v599 = vadd.f32 %v348, %v598
  %v600 = vpop.f32.mrb[0].mxu0
  %v601 = vadd.f32 %v350, %v600
  %v602 = vpop.f32.mrb[0].mxu0
  %v603 = vadd.f32 %v352, %v602
  %v604 = vpop.f32.mrb[0].mxu0
  %v605 = vadd.f32 %v354, %v604
  %606 = vmatprep.mubr.bf16.mxu0 0
  %607 = vmatmul.mubr.bf16.gmra.mrb[0].mxu0 %v456
  %v608 = vpop.f32.mrb[0].mxu0
  %v609 = vadd.f32 %v358, %v608
  %v610 = vpop.f32.mrb[0].mxu0
  %v611 = vadd.f32 %v360, %v610
  %v612 = vpop.f32.mrb[0].mxu0
  %v613 = vadd.f32 %v362, %v612
  %v614 = vpop.f32.mrb[0].mxu0
  %v615 = vadd.f32 %v364, %v614
  %616 = vmatprep.mubr.bf16.mxu0 0
  %617 = vmatmul.mubr.bf16.gmra.mrb[0].mxu0 %v459
  %v618 = vpop.f32.mrb[0].mxu0
  %v619 = vadd.f32 %v368, %v618
  %v620 = vpop.f32.mrb[0].mxu0
  %v621 = vadd.f32 %v370, %v620
  %v622 = vpop.f32.mrb[0].mxu0
  %v623 = vadd.f32 %v372, %v622
  %v624 = vpop.f32.mrb[0].mxu0
  %v625 = vadd.f32 %v374, %v624
  %626 = vmatprep.mubr.bf16.mxu0 0
  %627 = vmatmul.mubr.bf16.gmra.mrb[0].mxu0 %v462
  %v628 = vpop.f32.mrb[0].mxu0
  %v629 = vadd.f32 %v378, %v628
  %v630 = vpop.f32.mrb[0].mxu0
  %v631 = vadd.f32 %v380, %v630
  %v632 = vpop.f32.mrb[0].mxu0
  %v633 = vadd.f32 %v382, %v632
  %v634 = vpop.f32.mrb[0].mxu0
  %v635 = vadd.f32 %v384, %v634
  %636 = vdwg.mxu0
  %s637 = scalar_lea.vmem %s1, 64
  %v638 = vld [vmem:[%s637] sm:$0xff]
  %v639 = vld [vmem:[%s637 + $0x8] sm:$0xff]
  %v640 = vld [vmem:[%s637 + $0x10] sm:$0xff]
  %v641 = vld [vmem:[%s637 + $0x18] sm:$0xff]
  %v643 = vunpack.c.l.b16 %v68
  %v644 = vpack.c.b16 %v643, %v135
  %v649 = vunpack.c.l.b16 %v638
  %v650 = vunpack.c.h.b16 %v638
  %v651 = vunpack.c.l.b16 %v639
  %v652 = vunpack.c.h.b16 %v639
  %v653 = vunpack.c.l.b16 %v640
  %v654 = vunpack.c.h.b16 %v640
  %v655 = vunpack.c.l.b16 %v641
  %v656 = vunpack.c.h.b16 %v641
  %v657 = vpack.c.b16 %v651, %v649
  %v658 = vpack.c.b16 %v652, %v650
  %v659 = vpack.c.b16 %v655, %v653
  %v660 = vpack.c.b16 %v656, %v654
  %v666 = vsel %vm170, %v644, 0
  %668 = vmatprep.subr.bf16.mxu0 %v658
  %669 = vmatpush1.bf16.msra.mxu0 %v657
  %670 = vmatprep.subr.bf16.mxu0 %v660
  %671 = vmatpush1.bf16.msra.mxu0 %v659
  %672 = vmatprep.subr.bf16.mxu0 0
  %673 = vmatpush1.bf16.msra.mxu0 0
  %674 = vmatprep.subr.bf16.mxu0 0
  %675 = vmatpush1.bf16.msra.mxu0 0
  %676 = vmatprep.subr.bf16.mxu0 0
  %677 = vmatpush1.bf16.msra.mxu0 0
  %678 = vmatprep.subr.bf16.mxu0 0
  %679 = vmatpush1.bf16.msra.mxu0 0
  %680 = vmatprep.subr.bf16.mxu0 0
  %681 = vmatpush1.bf16.msra.mxu0 0
  %682 = vmatprep.subr.bf16.mxu0 0
  %683 = vmatpush1.bf16.msra.mxu0 0
  %684 = vmatprep.subr.bf16.mxu0 0
  %685 = vmatpush1.bf16.msra.mxu0 0
  %686 = vmatprep.subr.bf16.mxu0 0
  %687 = vmatpush1.bf16.msra.mxu0 0
  %688 = vmatprep.subr.bf16.mxu0 0
  %689 = vmatpush1.bf16.msra.mxu0 0
  %690 = vmatprep.subr.bf16.mxu0 0
  %691 = vmatpush1.bf16.msra.mxu0 0
  %692 = vmatprep.subr.bf16.mxu0 0
  %693 = vmatpush1.bf16.msra.mxu0 0
  %694 = vmatprep.subr.bf16.mxu0 0
  %695 = vmatpush1.bf16.msra.mxu0 0
  %696 = vmatprep.subr.bf16.mxu0 0
  %697 = vmatpush1.bf16.msra.mxu0 0
  %698 = vmatprep.subr.bf16.mxu0 0
  %699 = vmatpush1.bf16.msra.mxu0 0
  %700 = vmatprep.mubr.bf16.mxu0 0
  %701 = vmatmul.mubr.bf16.gmra.mrb[0].mxu0 %v426
  %v702 = vpop.f32.mrb[0].mxu0
  %v703 = vadd.f32 0.0, %v702
  %v704 = vpop.f32.mrb[0].mxu0
  %v705 = vadd.f32 0.0, %v704
  %v706 = vpop.f32.mrb[0].mxu0
  %v707 = vadd.f32 0.0, %v706
  %v708 = vpop.f32.mrb[0].mxu0
  %v709 = vadd.f32 0.0, %v708
  %710 = vmatprep.mubr.bf16.mxu0 0
  %711 = vmatmul.mubr.bf16.gmra.mrb[0].mxu0 %v429
  %v712 = vpop.f32.mrb[0].mxu0
  %v713 = vadd.f32 0.0, %v712
  %v714 = vpop.f32.mrb[0].mxu0
  %v715 = vadd.f32 0.0, %v714
  %v716 = vpop.f32.mrb[0].mxu0
  %v717 = vadd.f32 0.0, %v716
  %v718 = vpop.f32.mrb[0].mxu0
  %v719 = vadd.f32 0.0, %v718
  %720 = vmatprep.mubr.bf16.mxu0 0
  %721 = vmatmul.mubr.bf16.gmra.mrb[0].mxu0 %v432
  %v722 = vpop.f32.mrb[0].mxu0
  %v723 = vadd.f32 0.0, %v722
  %v724 = vpop.f32.mrb[0].mxu0
  %v725 = vadd.f32 0.0, %v724
  %v726 = vpop.f32.mrb[0].mxu0
  %v727 = vadd.f32 0.0, %v726
  %v728 = vpop.f32.mrb[0].mxu0
  %v729 = vadd.f32 0.0, %v728
  %730 = vmatprep.mubr.bf16.mxu0 0
  %731 = vmatmul.mubr.bf16.gmra.mrb[0].mxu0 %v435
  %v732 = vpop.f32.mrb[0].mxu0
  %v733 = vadd.f32 0.0, %v732
  %v734 = vpop.f32.mrb[0].mxu0
  %v735 = vadd.f32 0.0, %v734
  %v736 = vpop.f32.mrb[0].mxu0
  %v737 = vadd.f32 0.0, %v736
  %v738 = vpop.f32.mrb[0].mxu0
  %v739 = vadd.f32 0.0, %v738
  %740 = vmatprep.mubr.bf16.mxu0 0
  %741 = vmatmul.mubr.bf16.gmra.mrb[0].mxu0 %v438
  %v742 = vpop.f32.mrb[0].mxu0
  %v743 = vadd.f32 0.0, %v742
  %v744 = vpop.f32.mrb[0].mxu0
  %v745 = vadd.f32 0.0, %v744
  %v746 = vpop.f32.mrb[0].mxu0
  %v747 = vadd.f32 0.0, %v746
  %v748 = vpop.f32.mrb[0].mxu0
  %v749 = vadd.f32 0.0, %v748
  %750 = vmatprep.mubr.bf16.mxu0 0
  %751 = vmatmul.mubr.bf16.gmra.mrb[0].mxu0 %v441
  %v752 = vpop.f32.mrb[0].mxu0
  %v753 = vadd.f32 0.0, %v752
  %v754 = vpop.f32.mrb[0].mxu0
  %v755 = vadd.f32 0.0, %v754
  %v756 = vpop.f32.mrb[0].mxu0
  %v757 = vadd.f32 0.0, %v756
  %v758 = vpop.f32.mrb[0].mxu0
  %v759 = vadd.f32 0.0, %v758
  %760 = vmatprep.mubr.bf16.mxu0 0
  %761 = vmatmul.mubr.bf16.gmra.mrb[0].mxu0 %v444
  %v762 = vpop.f32.mrb[0].mxu0
  %v763 = vadd.f32 0.0, %v762
  %v764 = vpop.f32.mrb[0].mxu0
  %v765 = vadd.f32 0.0, %v764
  %v766 = vpop.f32.mrb[0].mxu0
  %v767 = vadd.f32 0.0, %v766
  %v768 = vpop.f32.mrb[0].mxu0
  %v769 = vadd.f32 0.0, %v768
  %770 = vmatprep.mubr.bf16.mxu0 0
  %771 = vmatmul.mubr.bf16.gmra.mrb[0].mxu0 %v447
  %v772 = vpop.f32.mrb[0].mxu0
  %v773 = vadd.f32 0.0, %v772
  %v774 = vpop.f32.mrb[0].mxu0
  %v775 = vadd.f32 0.0, %v774
  %v776 = vpop.f32.mrb[0].mxu0
  %v777 = vadd.f32 0.0, %v776
  %v778 = vpop.f32.mrb[0].mxu0
  %v779 = vadd.f32 0.0, %v778
  %780 = vmatprep.mubr.bf16.mxu0 0
  %781 = vmatmul.mubr.bf16.gmra.mrb[0].mxu0 %v450
  %v782 = vpop.f32.mrb[0].mxu0
  %v783 = vadd.f32 0.0, %v782
  %v784 = vpop.f32.mrb[0].mxu0
  %v785 = vadd.f32 0.0, %v784
  %v786 = vpop.f32.mrb[0].mxu0
  %v787 = vadd.f32 0.0, %v786
  %v788 = vpop.f32.mrb[0].mxu0
  %v789 = vadd.f32 0.0, %v788
  %790 = vmatprep.mubr.bf16.mxu0 0
  %791 = vmatmul.mubr.bf16.gmra.mrb[0].mxu0 %v453
  %v792 = vpop.f32.mrb[0].mxu0
  %v793 = vadd.f32 0.0, %v792
  %v794 = vpop.f32.mrb[0].mxu0
  %v795 = vadd.f32 0.0, %v794
  %v796 = vpop.f32.mrb[0].mxu0
  %v797 = vadd.f32 0.0, %v796
  %v798 = vpop.f32.mrb[0].mxu0
  %v799 = vadd.f32 0.0, %v798
  %800 = vmatprep.mubr.bf16.mxu0 0
  %801 = vmatmul.mubr.bf16.gmra.mrb[0].mxu0 %v456
  %v802 = vpop.f32.mrb[0].mxu0
  %v803 = vadd.f32 0.0, %v802
  %v804 = vpop.f32.mrb[0].mxu0
  %v805 = vadd.f32 0.0, %v804
  %v806 = vpop.f32.mrb[0].mxu0
  %v807 = vadd.f32 0.0, %v806
  %v808 = vpop.f32.mrb[0].mxu0
  %v809 = vadd.f32 0.0, %v808
  %810 = vmatprep.mubr.bf16.mxu0 0
  %811 = vmatmul.mubr.bf16.gmra.mrb[0].mxu0 %v459
  %v812 = vpop.f32.mrb[0].mxu0
  %v813 = vadd.f32 0.0, %v812
  %v814 = vpop.f32.mrb[0].mxu0
  %v815 = vadd.f32 0.0, %v814
  %v816 = vpop.f32.mrb[0].mxu0
  %v817 = vadd.f32 0.0, %v816
  %v818 = vpop.f32.mrb[0].mxu0
  %v819 = vadd.f32 0.0, %v818
  %820 = vmatprep.mubr.bf16.mxu0 0
  %821 = vmatmul.mubr.bf16.gmra.mrb[0].mxu0 %v462
  %v822 = vpop.f32.mrb[0].mxu0
  %v823 = vadd.f32 0.0, %v822
  %v824 = vpop.f32.mrb[0].mxu0
  %v825 = vadd.f32 0.0, %v824
  %v826 = vpop.f32.mrb[0].mxu0
  %v827 = vadd.f32 0.0, %v826
  %v828 = vpop.f32.mrb[0].mxu0
  %v829 = vadd.f32 0.0, %v828
  %830 = vmatprep.mubr.bf16.mxu0 0
  %831 = vmatmul.mubr.bf16.gmra.mrb[0].mxu0 %v666
  %v832 = vpop.f32.mrb[0].mxu0
  %v833 = vadd.f32 0.0, %v832
  %v834 = vpop.f32.mrb[0].mxu0
  %v835 = vadd.f32 0.0, %v834
  %v836 = vpop.f32.mrb[0].mxu0
  %v837 = vadd.f32 0.0, %v836
  %v838 = vpop.f32.mrb[0].mxu0
  %v839 = vadd.f32 0.0, %v838
  %840 = vdwg.mxu0
  %v841 = vadd.f32 %v499, %v703
  %v842 = vadd.f32 %v501, %v705
  %v843 = vadd.f32 %v503, %v707
  %v844 = vadd.f32 %v505, %v709
  %v845 = vadd.f32 %v509, %v713
  %v846 = vadd.f32 %v511, %v715
  %v847 = vadd.f32 %v513, %v717
  %v848 = vadd.f32 %v515, %v719
  %v849 = vadd.f32 %v519, %v723
  %v850 = vadd.f32 %v521, %v725
  %v851 = vadd.f32 %v523, %v727
  %v852 = vadd.f32 %v525, %v729
  %v853 = vadd.f32 %v529, %v733
  %v854 = vadd.f32 %v531, %v735
  %v855 = vadd.f32 %v533, %v737
  %v856 = vadd.f32 %v535, %v739
  %v857 = vadd.f32 %v539, %v743
  %v858 = vadd.f32 %v541, %v745
  %v859 = vadd.f32 %v543, %v747
  %v860 = vadd.f32 %v545, %v749
  %v861 = vadd.f32 %v549, %v753
  %v862 = vadd.f32 %v551, %v755
  %v863 = vadd.f32 %v553, %v757
  %v864 = vadd.f32 %v555, %v759
  %v865 = vadd.f32 %v559, %v763
  %v866 = vadd.f32 %v561, %v765
  %v867 = vadd.f32 %v563, %v767
  %v868 = vadd.f32 %v565, %v769
  %v869 = vadd.f32 %v569, %v773
  %v870 = vadd.f32 %v571, %v775
  %v871 = vadd.f32 %v573, %v777
  %v872 = vadd.f32 %v575, %v779
  %v873 = vadd.f32 %v579, %v783
  %v874 = vadd.f32 %v581, %v785
  %v875 = vadd.f32 %v583, %v787
  %v876 = vadd.f32 %v585, %v789
  %v877 = vadd.f32 %v589, %v793
  %v878 = vadd.f32 %v591, %v795
  %v879 = vadd.f32 %v593, %v797
  %v880 = vadd.f32 %v595, %v799
  %v881 = vadd.f32 %v599, %v803
  %v882 = vadd.f32 %v601, %v805
  %v883 = vadd.f32 %v603, %v807
  %v884 = vadd.f32 %v605, %v809
  %v885 = vadd.f32 %v609, %v813
  %v886 = vadd.f32 %v611, %v815
  %v887 = vadd.f32 %v613, %v817
  %v888 = vadd.f32 %v615, %v819
  %v889 = vadd.f32 %v619, %v823
  %v890 = vadd.f32 %v621, %v825
  %v891 = vadd.f32 %v623, %v827
  %v892 = vadd.f32 %v625, %v829
  %v893 = vadd.f32 %v629, %v833
  %v894 = vadd.f32 %v631, %v835
  %v895 = vadd.f32 %v633, %v837
  %v896 = vadd.f32 %v635, %v839
  %s897 = scalar_lea.vmem %s1, 96
  %v898 = vld [vmem:[%s897] sm:$0xff]
  %v899 = vld [vmem:[%s897 + $0x8] sm:$0xff]
  %v900 = vld [vmem:[%s897 + $0x10] sm:$0xff]
  %v901 = vld [vmem:[%s897 + $0x18] sm:$0xff]
  %v903 = vunpack.c.l.b16 %v69
  %v904 = vpack.c.b16 %v903, %v643
  %v909 = vunpack.c.l.b16 %v898
  %v910 = vunpack.c.h.b16 %v898
  %v911 = vunpack.c.l.b16 %v899
  %v912 = vunpack.c.h.b16 %v899
  %v913 = vunpack.c.l.b16 %v900
  %v914 = vunpack.c.h.b16 %v900
  %v915 = vunpack.c.l.b16 %v901
  %v916 = vunpack.c.h.b16 %v901
  %v917 = vpack.c.b16 %v911, %v909
  %v918 = vpack.c.b16 %v912, %v910
  %v919 = vpack.c.b16 %v915, %v913
  %v920 = vpack.c.b16 %v916, %v914
  %v926 = vsel %vm170, %v904, 0
  %928 = vmatprep.subr.bf16.mxu0 %v918
  %929 = vmatpush1.bf16.msra.mxu0 %v917
  %930 = vmatprep.subr.bf16.mxu0 %v920
  %931 = vmatpush1.bf16.msra.mxu0 %v919
  %932 = vmatprep.subr.bf16.mxu0 0
  %933 = vmatpush1.bf16.msra.mxu0 0
  %934 = vmatprep.subr.bf16.mxu0 0
  %935 = vmatpush1.bf16.msra.mxu0 0
  %936 = vmatprep.subr.bf16.mxu0 0
  %937 = vmatpush1.bf16.msra.mxu0 0
  %938 = vmatprep.subr.bf16.mxu0 0
  %939 = vmatpush1.bf16.msra.mxu0 0
  %940 = vmatprep.subr.bf16.mxu0 0
  %941 = vmatpush1.bf16.msra.mxu0 0
  %942 = vmatprep.subr.bf16.mxu0 0
  %943 = vmatpush1.bf16.msra.mxu0 0
  %944 = vmatprep.subr.bf16.mxu0 0
  %945 = vmatpush1.bf16.msra.mxu0 0
  %946 = vmatprep.subr.bf16.mxu0 0
  %947 = vmatpush1.bf16.msra.mxu0 0
  %948 = vmatprep.subr.bf16.mxu0 0
  %949 = vmatpush1.bf16.msra.mxu0 0
  %950 = vmatprep.subr.bf16.mxu0 0
  %951 = vmatpush1.bf16.msra.mxu0 0
  %952 = vmatprep.subr.bf16.mxu0 0
  %953 = vmatpush1.bf16.msra.mxu0 0
  %954 = vmatprep.subr.bf16.mxu0 0
  %955 = vmatpush1.bf16.msra.mxu0 0
  %956 = vmatprep.subr.bf16.mxu0 0
  %957 = vmatpush1.bf16.msra.mxu0 0
  %958 = vmatprep.subr.bf16.mxu0 0
  %959 = vmatpush1.bf16.msra.mxu0 0
  %960 = vmatprep.mubr.bf16.mxu0 0
  %961 = vmatmul.mubr.bf16.gmra.mrb[0].mxu0 %v175
  %v962 = vpop.f32.mrb[0].mxu0
  %v963 = vadd.f32 0.0, %v962
  %v964 = vpop.f32.mrb[0].mxu0
  %v965 = vadd.f32 0.0, %v964
  %v966 = vpop.f32.mrb[0].mxu0
  %v967 = vadd.f32 0.0, %v966
  %v968 = vpop.f32.mrb[0].mxu0
  %v969 = vadd.f32 0.0, %v968
  %970 = vmatprep.mubr.bf16.mxu0 0
  %971 = vmatmul.mubr.bf16.gmra.mrb[0].mxu0 %v178
  %v972 = vpop.f32.mrb[0].mxu0
  %v973 = vadd.f32 0.0, %v972
  %v974 = vpop.f32.mrb[0].mxu0
  %v975 = vadd.f32 0.0, %v974
  %v976 = vpop.f32.mrb[0].mxu0
  %v977 = vadd.f32 0.0, %v976
  %v978 = vpop.f32.mrb[0].mxu0
  %v979 = vadd.f32 0.0, %v978
  %980 = vmatprep.mubr.bf16.mxu0 0
  %981 = vmatmul.mubr.bf16.gmra.mrb[0].mxu0 %v181
  %v982 = vpop.f32.mrb[0].mxu0
  %v983 = vadd.f32 0.0, %v982
  %v984 = vpop.f32.mrb[0].mxu0
  %v985 = vadd.f32 0.0, %v984
  %v986 = vpop.f32.mrb[0].mxu0
  %v987 = vadd.f32 0.0, %v986
  %v988 = vpop.f32.mrb[0].mxu0
  %v989 = vadd.f32 0.0, %v988
  %990 = vmatprep.mubr.bf16.mxu0 0
  %991 = vmatmul.mubr.bf16.gmra.mrb[0].mxu0 %v184
  %v992 = vpop.f32.mrb[0].mxu0
  %v993 = vadd.f32 0.0, %v992
  %v994 = vpop.f32.mrb[0].mxu0
  %v995 = vadd.f32 0.0, %v994
  %v996 = vpop.f32.mrb[0].mxu0
  %v997 = vadd.f32 0.0, %v996
  %v998 = vpop.f32.mrb[0].mxu0
  %v999 = vadd.f32 0.0, %v998
  %1000 = vmatprep.mubr.bf16.mxu0 0
  %1001 = vmatmul.mubr.bf16.gmra.mrb[0].mxu0 %v187
  %v1002 = vpop.f32.mrb[0].mxu0
  %v1003 = vadd.f32 0.0, %v1002
  %v1004 = vpop.f32.mrb[0].mxu0
  %v1005 = vadd.f32 0.0, %v1004
  %v1006 = vpop.f32.mrb[0].mxu0
  %v1007 = vadd.f32 0.0, %v1006
  %v1008 = vpop.f32.mrb[0].mxu0
  %v1009 = vadd.f32 0.0, %v1008
  %1010 = vmatprep.mubr.bf16.mxu0 0
  %1011 = vmatmul.mubr.bf16.gmra.mrb[0].mxu0 %v190
  %v1012 = vpop.f32.mrb[0].mxu0
  %v1013 = vadd.f32 0.0, %v1012
  %v1014 = vpop.f32.mrb[0].mxu0
  %v1015 = vadd.f32 0.0, %v1014
  %v1016 = vpop.f32.mrb[0].mxu0
  %v1017 = vadd.f32 0.0, %v1016
  %v1018 = vpop.f32.mrb[0].mxu0
  %v1019 = vadd.f32 0.0, %v1018
  %1020 = vmatprep.mubr.bf16.mxu0 0
  %1021 = vmatmul.mubr.bf16.gmra.mrb[0].mxu0 %v193
  %v1022 = vpop.f32.mrb[0].mxu0
  %v1023 = vadd.f32 0.0, %v1022
  %v1024 = vpop.f32.mrb[0].mxu0
  %v1025 = vadd.f32 0.0, %v1024
  %v1026 = vpop.f32.mrb[0].mxu0
  %v1027 = vadd.f32 0.0, %v1026
  %v1028 = vpop.f32.mrb[0].mxu0
  %v1029 = vadd.f32 0.0, %v1028
  %1030 = vmatprep.mubr.bf16.mxu0 0
  %1031 = vmatmul.mubr.bf16.gmra.mrb[0].mxu0 %v196
  %v1032 = vpop.f32.mrb[0].mxu0
  %v1033 = vadd.f32 0.0, %v1032
  %v1034 = vpop.f32.mrb[0].mxu0
  %v1035 = vadd.f32 0.0, %v1034
  %v1036 = vpop.f32.mrb[0].mxu0
  %v1037 = vadd.f32 0.0, %v1036
  %v1038 = vpop.f32.mrb[0].mxu0
  %v1039 = vadd.f32 0.0, %v1038
  %1040 = vmatprep.mubr.bf16.mxu0 0
  %1041 = vmatmul.mubr.bf16.gmra.mrb[0].mxu0 %v199
  %v1042 = vpop.f32.mrb[0].mxu0
  %v1043 = vadd.f32 0.0, %v1042
  %v1044 = vpop.f32.mrb[0].mxu0
  %v1045 = vadd.f32 0.0, %v1044
  %v1046 = vpop.f32.mrb[0].mxu0
  %v1047 = vadd.f32 0.0, %v1046
  %v1048 = vpop.f32.mrb[0].mxu0
  %v1049 = vadd.f32 0.0, %v1048
  %1050 = vmatprep.mubr.bf16.mxu0 0
  %1051 = vmatmul.mubr.bf16.gmra.mrb[0].mxu0 %v202
  %v1052 = vpop.f32.mrb[0].mxu0
  %v1053 = vadd.f32 0.0, %v1052
  %v1054 = vpop.f32.mrb[0].mxu0
  %v1055 = vadd.f32 0.0, %v1054
  %v1056 = vpop.f32.mrb[0].mxu0
  %v1057 = vadd.f32 0.0, %v1056
  %v1058 = vpop.f32.mrb[0].mxu0
  %v1059 = vadd.f32 0.0, %v1058
  %1060 = vmatprep.mubr.bf16.mxu0 0
  %1061 = vmatmul.mubr.bf16.gmra.mrb[0].mxu0 %v205
  %v1062 = vpop.f32.mrb[0].mxu0
  %v1063 = vadd.f32 0.0, %v1062
  %v1064 = vpop.f32.mrb[0].mxu0
  %v1065 = vadd.f32 0.0, %v1064
  %v1066 = vpop.f32.mrb[0].mxu0
  %v1067 = vadd.f32 0.0, %v1066
  %v1068 = vpop.f32.mrb[0].mxu0
  %v1069 = vadd.f32 0.0, %v1068
  %1070 = vmatprep.mubr.bf16.mxu0 0
  %1071 = vmatmul.mubr.bf16.gmra.mrb[0].mxu0 %v208
  %v1072 = vpop.f32.mrb[0].mxu0
  %v1073 = vadd.f32 0.0, %v1072
  %v1074 = vpop.f32.mrb[0].mxu0
  %v1075 = vadd.f32 0.0, %v1074
  %v1076 = vpop.f32.mrb[0].mxu0
  %v1077 = vadd.f32 0.0, %v1076
  %v1078 = vpop.f32.mrb[0].mxu0
  %v1079 = vadd.f32 0.0, %v1078
  %1080 = vmatprep.mubr.bf16.mxu0 0
  %1081 = vmatmul.mubr.bf16.gmra.mrb[0].mxu0 %v211
  %v1082 = vpop.f32.mrb[0].mxu0
  %v1083 = vadd.f32 0.0, %v1082
  %v1084 = vpop.f32.mrb[0].mxu0
  %v1085 = vadd.f32 0.0, %v1084
  %v1086 = vpop.f32.mrb[0].mxu0
  %v1087 = vadd.f32 0.0, %v1086
  %v1088 = vpop.f32.mrb[0].mxu0
  %v1089 = vadd.f32 0.0, %v1088
  %1090 = vmatprep.mubr.bf16.mxu0 0
  %1091 = vmatmul.mubr.bf16.gmra.mrb[0].mxu0 %v926
  %v1092 = vpop.f32.mrb[0].mxu0
  %v1093 = vadd.f32 0.0, %v1092
  %v1094 = vpop.f32.mrb[0].mxu0
  %v1095 = vadd.f32 0.0, %v1094
  %v1096 = vpop.f32.mrb[0].mxu0
  %v1097 = vadd.f32 0.0, %v1096
  %v1098 = vpop.f32.mrb[0].mxu0
  %v1099 = vadd.f32 0.0, %v1098
  %1100 = vdwg.mxu0
  %v1101 = vadd.f32 %v841, %v963
  %v1102 = vadd.f32 %v842, %v965
  %v1103 = vadd.f32 %v843, %v967
  %v1104 = vadd.f32 %v844, %v969
  %v1105 = vadd.f32 %v845, %v973
  %v1106 = vadd.f32 %v846, %v975
  %v1107 = vadd.f32 %v847, %v977
  %v1108 = vadd.f32 %v848, %v979
  %v1109 = vadd.f32 %v849, %v983
  %v1110 = vadd.f32 %v850, %v985
  %v1111 = vadd.f32 %v851, %v987
  %v1112 = vadd.f32 %v852, %v989
  %v1113 = vadd.f32 %v853, %v993
  %v1114 = vadd.f32 %v854, %v995
  %v1115 = vadd.f32 %v855, %v997
  %v1116 = vadd.f32 %v856, %v999
  %v1117 = vadd.f32 %v857, %v1003
  %v1118 = vadd.f32 %v858, %v1005
  %v1119 = vadd.f32 %v859, %v1007
  %v1120 = vadd.f32 %v860, %v1009
  %v1121 = vadd.f32 %v861, %v1013
  %v1122 = vadd.f32 %v862, %v1015
  %v1123 = vadd.f32 %v863, %v1017
  %v1124 = vadd.f32 %v864, %v1019
  %v1125 = vadd.f32 %v865, %v1023
  %v1126 = vadd.f32 %v866, %v1025
  %v1127 = vadd.f32 %v867, %v1027
  %v1128 = vadd.f32 %v868, %v1029
  %v1129 = vadd.f32 %v869, %v1033
  %v1130 = vadd.f32 %v870, %v1035
  %v1131 = vadd.f32 %v871, %v1037
  %v1132 = vadd.f32 %v872, %v1039
  %v1133 = vadd.f32 %v873, %v1043
  %v1134 = vadd.f32 %v874, %v1045
  %v1135 = vadd.f32 %v875, %v1047
  %v1136 = vadd.f32 %v876, %v1049
  %v1137 = vadd.f32 %v877, %v1053
  %v1138 = vadd.f32 %v878, %v1055
  %v1139 = vadd.f32 %v879, %v1057
  %v1140 = vadd.f32 %v880, %v1059
  %v1141 = vadd.f32 %v881, %v1063
  %v1142 = vadd.f32 %v882, %v1065
  %v1143 = vadd.f32 %v883, %v1067
  %v1144 = vadd.f32 %v884, %v1069
  %v1145 = vadd.f32 %v885, %v1073
  %v1146 = vadd.f32 %v886, %v1075
  %v1147 = vadd.f32 %v887, %v1077
  %v1148 = vadd.f32 %v888, %v1079
  %v1149 = vadd.f32 %v889, %v1083
  %v1150 = vadd.f32 %v890, %v1085
  %v1151 = vadd.f32 %v891, %v1087
  %v1152 = vadd.f32 %v892, %v1089
  %v1153 = vadd.f32 %v893, %v1093
  %v1154 = vadd.f32 %v894, %v1095
  %v1155 = vadd.f32 %v895, %v1097
  %v1156 = vadd.f32 %v896, %v1099
  %s1157 = scalar_lea.vmem %s1, 128
  %v1158 = vld [vmem:[%s1157] sm:$0xff]
  %v1159 = vld [vmem:[%s1157 + $0x8] sm:$0xff]
  %v1160 = vld [vmem:[%s1157 + $0x10] sm:$0xff]
  %v1161 = vld [vmem:[%s1157 + $0x18] sm:$0xff]
  %v1163 = vunpack.c.l.b16 %v70
  %v1164 = vpack.c.b16 %v1163, %v903
  %v1169 = vunpack.c.l.b16 %v1158
  %v1170 = vunpack.c.h.b16 %v1158
  %v1171 = vunpack.c.l.b16 %v1159
  %v1172 = vunpack.c.h.b16 %v1159
  %v1173 = vunpack.c.l.b16 %v1160
  %v1174 = vunpack.c.h.b16 %v1160
  %v1175 = vunpack.c.l.b16 %v1161
  %v1176 = vunpack.c.h.b16 %v1161
  %v1177 = vpack.c.b16 %v1171, %v1169
  %v1178 = vpack.c.b16 %v1172, %v1170
  %v1179 = vpack.c.b16 %v1175, %v1173
  %v1180 = vpack.c.b16 %v1176, %v1174
  %v1186 = vsel %vm170, %v1164, 0
  %1188 = vmatprep.subr.bf16.mxu0 %v1178
  %1189 = vmatpush1.bf16.msra.mxu0 %v1177
  %1190 = vmatprep.subr.bf16.mxu0 %v1180
  %1191 = vmatpush1.bf16.msra.mxu0 %v1179
  %1192 = vmatprep.subr.bf16.mxu0 0
  %1193 = vmatpush1.bf16.msra.mxu0 0
  %1194 = vmatprep.subr.bf16.mxu0 0
  %1195 = vmatpush1.bf16.msra.mxu0 0
  %1196 = vmatprep.subr.bf16.mxu0 0
  %1197 = vmatpush1.bf16.msra.mxu0 0
  %1198 = vmatprep.subr.bf16.mxu0 0
  %1199 = vmatpush1.bf16.msra.mxu0 0
  %1200 = vmatprep.subr.bf16.mxu0 0
  %1201 = vmatpush1.bf16.msra.mxu0 0
  %1202 = vmatprep.subr.bf16.mxu0 0
  %1203 = vmatpush1.bf16.msra.mxu0 0
  %1204 = vmatprep.subr.bf16.mxu0 0
  %1205 = vmatpush1.bf16.msra.mxu0 0
  %1206 = vmatprep.subr.bf16.mxu0 0
  %1207 = vmatpush1.bf16.msra.mxu0 0
  %1208 = vmatprep.subr.bf16.mxu0 0
  %1209 = vmatpush1.bf16.msra.mxu0 0
  %1210 = vmatprep.subr.bf16.mxu0 0
  %1211 = vmatpush1.bf16.msra.mxu0 0
  %1212 = vmatprep.subr.bf16.mxu0 0
  %1213 = vmatpush1.bf16.msra.mxu0 0
  %1214 = vmatprep.subr.bf16.mxu0 0
  %1215 = vmatpush1.bf16.msra.mxu0 0
  %1216 = vmatprep.subr.bf16.mxu0 0
  %1217 = vmatpush1.bf16.msra.mxu0 0
  %1218 = vmatprep.subr.bf16.mxu0 0
  %1219 = vmatpush1.bf16.msra.mxu0 0
  %1220 = vmatprep.mubr.bf16.mxu0 0
  %1221 = vmatmul.mubr.bf16.gmra.mrb[0].mxu0 %v429
  %v1222 = vpop.f32.mrb[0].mxu0
  %v1223 = vadd.f32 0.0, %v1222
  %v1224 = vpop.f32.mrb[0].mxu0
  %v1225 = vadd.f32 0.0, %v1224
  %v1226 = vpop.f32.mrb[0].mxu0
  %v1227 = vadd.f32 0.0, %v1226
  %v1228 = vpop.f32.mrb[0].mxu0
  %v1229 = vadd.f32 0.0, %v1228
  %1230 = vmatprep.mubr.bf16.mxu0 0
  %1231 = vmatmul.mubr.bf16.gmra.mrb[0].mxu0 %v432
  %v1232 = vpop.f32.mrb[0].mxu0
  %v1233 = vadd.f32 0.0, %v1232
  %v1234 = vpop.f32.mrb[0].mxu0
  %v1235 = vadd.f32 0.0, %v1234
  %v1236 = vpop.f32.mrb[0].mxu0
  %v1237 = vadd.f32 0.0, %v1236
  %v1238 = vpop.f32.mrb[0].mxu0
  %v1239 = vadd.f32 0.0, %v1238
  %1240 = vmatprep.mubr.bf16.mxu0 0
  %1241 = vmatmul.mubr.bf16.gmra.mrb[0].mxu0 %v435
  %v1242 = vpop.f32.mrb[0].mxu0
  %v1243 = vadd.f32 0.0, %v1242
  %v1244 = vpop.f32.mrb[0].mxu0
  %v1245 = vadd.f32 0.0, %v1244
  %v1246 = vpop.f32.mrb[0].mxu0
  %v1247 = vadd.f32 0.0, %v1246
  %v1248 = vpop.f32.mrb[0].mxu0
  %v1249 = vadd.f32 0.0, %v1248
  %1250 = vmatprep.mubr.bf16.mxu0 0
  %1251 = vmatmul.mubr.bf16.gmra.mrb[0].mxu0 %v438
  %v1252 = vpop.f32.mrb[0].mxu0
  %v1253 = vadd.f32 0.0, %v1252
  %v1254 = vpop.f32.mrb[0].mxu0
  %v1255 = vadd.f32 0.0, %v1254
  %v1256 = vpop.f32.mrb[0].mxu0
  %v1257 = vadd.f32 0.0, %v1256
  %v1258 = vpop.f32.mrb[0].mxu0
  %v1259 = vadd.f32 0.0, %v1258
  %1260 = vmatprep.mubr.bf16.mxu0 0
  %1261 = vmatmul.mubr.bf16.gmra.mrb[0].mxu0 %v441
  %v1262 = vpop.f32.mrb[0].mxu0
  %v1263 = vadd.f32 0.0, %v1262
  %v1264 = vpop.f32.mrb[0].mxu0
  %v1265 = vadd.f32 0.0, %v1264
  %v1266 = vpop.f32.mrb[0].mxu0
  %v1267 = vadd.f32 0.0, %v1266
  %v1268 = vpop.f32.mrb[0].mxu0
  %v1269 = vadd.f32 0.0, %v1268
  %1270 = vmatprep.mubr.bf16.mxu0 0
  %1271 = vmatmul.mubr.bf16.gmra.mrb[0].mxu0 %v444
  %v1272 = vpop.f32.mrb[0].mxu0
  %v1273 = vadd.f32 0.0, %v1272
  %v1274 = vpop.f32.mrb[0].mxu0
  %v1275 = vadd.f32 0.0, %v1274
  %v1276 = vpop.f32.mrb[0].mxu0
  %v1277 = vadd.f32 0.0, %v1276
  %v1278 = vpop.f32.mrb[0].mxu0
  %v1279 = vadd.f32 0.0, %v1278
  %1280 = vmatprep.mubr.bf16.mxu0 0
  %1281 = vmatmul.mubr.bf16.gmra.mrb[0].mxu0 %v447
  %v1282 = vpop.f32.mrb[0].mxu0
  %v1283 = vadd.f32 0.0, %v1282
  %v1284 = vpop.f32.mrb[0].mxu0
  %v1285 = vadd.f32 0.0, %v1284
  %v1286 = vpop.f32.mrb[0].mxu0
  %v1287 = vadd.f32 0.0, %v1286
  %v1288 = vpop.f32.mrb[0].mxu0
  %v1289 = vadd.f32 0.0, %v1288
  %1290 = vmatprep.mubr.bf16.mxu0 0
  %1291 = vmatmul.mubr.bf16.gmra.mrb[0].mxu0 %v450
  %v1292 = vpop.f32.mrb[0].mxu0
  %v1293 = vadd.f32 0.0, %v1292
  %v1294 = vpop.f32.mrb[0].mxu0
  %v1295 = vadd.f32 0.0, %v1294
  %v1296 = vpop.f32.mrb[0].mxu0
  %v1297 = vadd.f32 0.0, %v1296
  %v1298 = vpop.f32.mrb[0].mxu0
  %v1299 = vadd.f32 0.0, %v1298
  %1300 = vmatprep.mubr.bf16.mxu0 0
  %1301 = vmatmul.mubr.bf16.gmra.mrb[0].mxu0 %v453
  %v1302 = vpop.f32.mrb[0].mxu0
  %v1303 = vadd.f32 0.0, %v1302
  %v1304 = vpop.f32.mrb[0].mxu0
  %v1305 = vadd.f32 0.0, %v1304
  %v1306 = vpop.f32.mrb[0].mxu0
  %v1307 = vadd.f32 0.0, %v1306
  %v1308 = vpop.f32.mrb[0].mxu0
  %v1309 = vadd.f32 0.0, %v1308
  %1310 = vmatprep.mubr.bf16.mxu0 0
  %1311 = vmatmul.mubr.bf16.gmra.mrb[0].mxu0 %v456
  %v1312 = vpop.f32.mrb[0].mxu0
  %v1313 = vadd.f32 0.0, %v1312
  %v1314 = vpop.f32.mrb[0].mxu0
  %v1315 = vadd.f32 0.0, %v1314
  %v1316 = vpop.f32.mrb[0].mxu0
  %v1317 = vadd.f32 0.0, %v1316
  %v1318 = vpop.f32.mrb[0].mxu0
  %v1319 = vadd.f32 0.0, %v1318
  %1320 = vmatprep.mubr.bf16.mxu0 0
  %1321 = vmatmul.mubr.bf16.gmra.mrb[0].mxu0 %v459
  %v1322 = vpop.f32.mrb[0].mxu0
  %v1323 = vadd.f32 0.0, %v1322
  %v1324 = vpop.f32.mrb[0].mxu0
  %v1325 = vadd.f32 0.0, %v1324
  %v1326 = vpop.f32.mrb[0].mxu0
  %v1327 = vadd.f32 0.0, %v1326
  %v1328 = vpop.f32.mrb[0].mxu0
  %v1329 = vadd.f32 0.0, %v1328
  %1330 = vmatprep.mubr.bf16.mxu0 0
  %1331 = vmatmul.mubr.bf16.gmra.mrb[0].mxu0 %v462
  %v1332 = vpop.f32.mrb[0].mxu0
  %v1333 = vadd.f32 0.0, %v1332
  %v1334 = vpop.f32.mrb[0].mxu0
  %v1335 = vadd.f32 0.0, %v1334
  %v1336 = vpop.f32.mrb[0].mxu0
  %v1337 = vadd.f32 0.0, %v1336
  %v1338 = vpop.f32.mrb[0].mxu0
  %v1339 = vadd.f32 0.0, %v1338
  %1340 = vmatprep.mubr.bf16.mxu0 0
  %1341 = vmatmul.mubr.bf16.gmra.mrb[0].mxu0 %v666
  %v1342 = vpop.f32.mrb[0].mxu0
  %v1343 = vadd.f32 0.0, %v1342
  %v1344 = vpop.f32.mrb[0].mxu0
  %v1345 = vadd.f32 0.0, %v1344
  %v1346 = vpop.f32.mrb[0].mxu0
  %v1347 = vadd.f32 0.0, %v1346
  %v1348 = vpop.f32.mrb[0].mxu0
  %v1349 = vadd.f32 0.0, %v1348
  %1350 = vmatprep.mubr.bf16.mxu0 0
  %1351 = vmatmul.mubr.bf16.gmra.mrb[0].mxu0 %v1186
  %v1352 = vpop.f32.mrb[0].mxu0
  %v1353 = vadd.f32 0.0, %v1352
  %v1354 = vpop.f32.mrb[0].mxu0
  %v1355 = vadd.f32 0.0, %v1354
  %v1356 = vpop.f32.mrb[0].mxu0
  %v1357 = vadd.f32 0.0, %v1356
  %v1358 = vpop.f32.mrb[0].mxu0
  %v1359 = vadd.f32 0.0, %v1358
  %1360 = vdwg.mxu0
  %v1361 = vadd.f32 %v1101, %v1223
  %v1362 = vadd.f32 %v1102, %v1225
  %v1363 = vadd.f32 %v1103, %v1227
  %v1364 = vadd.f32 %v1104, %v1229
  %v1365 = vadd.f32 %v1105, %v1233
  %v1366 = vadd.f32 %v1106, %v1235
  %v1367 = vadd.f32 %v1107, %v1237
  %v1368 = vadd.f32 %v1108, %v1239
  %v1369 = vadd.f32 %v1109, %v1243
  %v1370 = vadd.f32 %v1110, %v1245
  %v1371 = vadd.f32 %v1111, %v1247
  %v1372 = vadd.f32 %v1112, %v1249
  %v1373 = vadd.f32 %v1113, %v1253
  %v1374 = vadd.f32 %v1114, %v1255
  %v1375 = vadd.f32 %v1115, %v1257
  %v1376 = vadd.f32 %v1116, %v1259
  %v1377 = vadd.f32 %v1117, %v1263
  %v1378 = vadd.f32 %v1118, %v1265
  %v1379 = vadd.f32 %v1119, %v1267
  %v1380 = vadd.f32 %v1120, %v1269
  %v1381 = vadd.f32 %v1121, %v1273
  %v1382 = vadd.f32 %v1122, %v1275
  %v1383 = vadd.f32 %v1123, %v1277
  %v1384 = vadd.f32 %v1124, %v1279
  %v1385 = vadd.f32 %v1125, %v1283
  %v1386 = vadd.f32 %v1126, %v1285
  %v1387 = vadd.f32 %v1127, %v1287
  %v1388 = vadd.f32 %v1128, %v1289
  %v1389 = vadd.f32 %v1129, %v1293
  %v1390 = vadd.f32 %v1130, %v1295
  %v1391 = vadd.f32 %v1131, %v1297
  %v1392 = vadd.f32 %v1132, %v1299
  %v1393 = vadd.f32 %v1133, %v1303
  %v1394 = vadd.f32 %v1134, %v1305
  %v1395 = vadd.f32 %v1135, %v1307
  %v1396 = vadd.f32 %v1136, %v1309
  %v1397 = vadd.f32 %v1137, %v1313
  %v1398 = vadd.f32 %v1138, %v1315
  %v1399 = vadd.f32 %v1139, %v1317
  %v1400 = vadd.f32 %v1140, %v1319
  %v1401 = vadd.f32 %v1141, %v1323
  %v1402 = vadd.f32 %v1142, %v1325
  %v1403 = vadd.f32 %v1143, %v1327
  %v1404 = vadd.f32 %v1144, %v1329
  %v1405 = vadd.f32 %v1145, %v1333
  %v1406 = vadd.f32 %v1146, %v1335
  %v1407 = vadd.f32 %v1147, %v1337
  %v1408 = vadd.f32 %v1148, %v1339
  %v1409 = vadd.f32 %v1149, %v1343
  %v1410 = vadd.f32 %v1150, %v1345
  %v1411 = vadd.f32 %v1151, %v1347
  %v1412 = vadd.f32 %v1152, %v1349
  %v1413 = vadd.f32 %v1153, %v1353
  %v1414 = vadd.f32 %v1154, %v1355
  %v1415 = vadd.f32 %v1155, %v1357
  %v1416 = vadd.f32 %v1156, %v1359
  %v1417 = vld [vmem:[%s2] sm:$0x3]
  %v1419 = vlaneseq
  %v1420 = vshrl.u32 %v1419, 7
  %v1421 = vsub.s32 0, %v1420
  %v1422 = vrot.slane %v1417, %v1421
  %v1423 = vlaneseq
  %v1424 = vshrl.u32 %v1423, 7
  %v1425 = vsub.s32 1, %v1424
  %v1426 = vrot.slane %v1417, %v1425
  %v1429 = vadd.f32 %v1361, %v1422
  %v1430 = vadd.f32 %v1362, %v1426
  %v1431 = vadd.f32 %v1363, %v1422
  %v1432 = vadd.f32 %v1364, %v1426
  %v1433 = vadd.f32 %v1365, %v1422
  %v1434 = vadd.f32 %v1366, %v1426
  %v1435 = vadd.f32 %v1367, %v1422
  %v1436 = vadd.f32 %v1368, %v1426
  %v1437 = vadd.f32 %v1369, %v1422
  %v1438 = vadd.f32 %v1370, %v1426
  %v1439 = vadd.f32 %v1371, %v1422
  %v1440 = vadd.f32 %v1372, %v1426
  %v1441 = vadd.f32 %v1373, %v1422
  %v1442 = vadd.f32 %v1374, %v1426
  %v1443 = vadd.f32 %v1375, %v1422
  %v1444 = vadd.f32 %v1376, %v1426
  %v1445 = vadd.f32 %v1377, %v1422
  %v1446 = vadd.f32 %v1378, %v1426
  %v1447 = vadd.f32 %v1379, %v1422
  %v1448 = vadd.f32 %v1380, %v1426
  %v1449 = vadd.f32 %v1381, %v1422
  %v1450 = vadd.f32 %v1382, %v1426
  %v1451 = vadd.f32 %v1383, %v1422
  %v1452 = vadd.f32 %v1384, %v1426
  %v1453 = vadd.f32 %v1385, %v1422
  %v1454 = vadd.f32 %v1386, %v1426
  %v1455 = vadd.f32 %v1387, %v1422
  %v1456 = vadd.f32 %v1388, %v1426
  %v1457 = vadd.f32 %v1389, %v1422
  %v1458 = vadd.f32 %v1390, %v1426
  %v1459 = vadd.f32 %v1391, %v1422
  %v1460 = vadd.f32 %v1392, %v1426
  %v1461 = vadd.f32 %v1393, %v1422
  %v1462 = vadd.f32 %v1394, %v1426
  %v1463 = vadd.f32 %v1395, %v1422
  %v1464 = vadd.f32 %v1396, %v1426
  %v1465 = vadd.f32 %v1397, %v1422
  %v1466 = vadd.f32 %v1398, %v1426
  %v1467 = vadd.f32 %v1399, %v1422
  %v1468 = vadd.f32 %v1400, %v1426
  %v1469 = vadd.f32 %v1401, %v1422
  %v1470 = vadd.f32 %v1402, %v1426
  %v1471 = vadd.f32 %v1403, %v1422
  %v1472 = vadd.f32 %v1404, %v1426
  %v1473 = vadd.f32 %v1405, %v1422
  %v1474 = vadd.f32 %v1406, %v1426
  %v1475 = vadd.f32 %v1407, %v1422
  %v1476 = vadd.f32 %v1408, %v1426
  %v1477 = vadd.f32 %v1409, %v1422
  %v1478 = vadd.f32 %v1410, %v1426
  %v1479 = vadd.f32 %v1411, %v1422
  %v1480 = vadd.f32 %v1412, %v1426
  %v1481 = vadd.f32 %v1413, %v1422
  %v1482 = vadd.f32 %v1414, %v1426
  %v1483 = vadd.f32 %v1415, %v1422
  %v1484 = vadd.f32 %v1416, %v1426
  %v1485 = vmax.f32 %v1429, 0.0
  %v1486 = vmax.f32 %v1430, 0.0
  %v1487 = vmax.f32 %v1431, 0.0
  %v1488 = vmax.f32 %v1432, 0.0
  %v1489 = vmax.f32 %v1433, 0.0
  %v1490 = vmax.f32 %v1434, 0.0
  %v1491 = vmax.f32 %v1435, 0.0
  %v1492 = vmax.f32 %v1436, 0.0
  %v1493 = vmax.f32 %v1437, 0.0
  %v1494 = vmax.f32 %v1438, 0.0
  %v1495 = vmax.f32 %v1439, 0.0
  %v1496 = vmax.f32 %v1440, 0.0
  %v1497 = vmax.f32 %v1441, 0.0
  %v1498 = vmax.f32 %v1442, 0.0
  %v1499 = vmax.f32 %v1443, 0.0
  %v1500 = vmax.f32 %v1444, 0.0
  %v1501 = vmax.f32 %v1445, 0.0
  %v1502 = vmax.f32 %v1446, 0.0
  %v1503 = vmax.f32 %v1447, 0.0
  %v1504 = vmax.f32 %v1448, 0.0
  %v1505 = vmax.f32 %v1449, 0.0
  %v1506 = vmax.f32 %v1450, 0.0
  %v1507 = vmax.f32 %v1451, 0.0
  %v1508 = vmax.f32 %v1452, 0.0
  %v1509 = vmax.f32 %v1453, 0.0
  %v1510 = vmax.f32 %v1454, 0.0
  %v1511 = vmax.f32 %v1455, 0.0
  %v1512 = vmax.f32 %v1456, 0.0
  %v1513 = vmax.f32 %v1457, 0.0
  %v1514 = vmax.f32 %v1458, 0.0
  %v1515 = vmax.f32 %v1459, 0.0
  %v1516 = vmax.f32 %v1460, 0.0
  %v1517 = vmax.f32 %v1461, 0.0
  %v1518 = vmax.f32 %v1462, 0.0
  %v1519 = vmax.f32 %v1463, 0.0
  %v1520 = vmax.f32 %v1464, 0.0
  %v1521 = vmax.f32 %v1465, 0.0
  %v1522 = vmax.f32 %v1466, 0.0
  %v1523 = vmax.f32 %v1467, 0.0
  %v1524 = vmax.f32 %v1468, 0.0
  %v1525 = vmax.f32 %v1469, 0.0
  %v1526 = vmax.f32 %v1470, 0.0
  %v1527 = vmax.f32 %v1471, 0.0
  %v1528 = vmax.f32 %v1472, 0.0
  %v1529 = vmax.f32 %v1473, 0.0
  %v1530 = vmax.f32 %v1474, 0.0
  %v1531 = vmax.f32 %v1475, 0.0
  %v1532 = vmax.f32 %v1476, 0.0
  %v1533 = vmax.f32 %v1477, 0.0
  %v1534 = vmax.f32 %v1478, 0.0
  %v1535 = vmax.f32 %v1479, 0.0
  %v1536 = vmax.f32 %v1480, 0.0
  %v1537 = vmax.f32 %v1481, 0.0
  %v1538 = vmax.f32 %v1482, 0.0
  %v1539 = vmax.f32 %v1483, 0.0
  %v1540 = vmax.f32 %v1484, 0.0
  %v1541 = vmax.f32 %v1485, %v1486
  %v1542 = vmax.f32 %v1487, %v1488
  %v1543 = vmax.f32 %v1489, %v1490
  %v1544 = vmax.f32 %v1491, %v1492
  %v1545 = vmax.f32 %v1493, %v1494
  %v1546 = vmax.f32 %v1495, %v1496
  %v1547 = vmax.f32 %v1497, %v1498
  %v1548 = vmax.f32 %v1499, %v1500
  %v1549 = vmax.f32 %v1501, %v1502
  %v1550 = vmax.f32 %v1503, %v1504
  %v1551 = vmax.f32 %v1505, %v1506
  %v1552 = vmax.f32 %v1507, %v1508
  %v1553 = vmax.f32 %v1509, %v1510
  %v1554 = vmax.f32 %v1511, %v1512
  %v1555 = vmax.f32 %v1513, %v1514
  %v1556 = vmax.f32 %v1515, %v1516
  %v1557 = vmax.f32 %v1517, %v1518
  %v1558 = vmax.f32 %v1519, %v1520
  %v1559 = vmax.f32 %v1521, %v1522
  %v1560 = vmax.f32 %v1523, %v1524
  %v1561 = vmax.f32 %v1525, %v1526
  %v1562 = vmax.f32 %v1527, %v1528
  %v1563 = vmax.f32 %v1529, %v1530
  %v1564 = vmax.f32 %v1531, %v1532
  %v1565 = vmax.f32 %v1533, %v1534
  %v1566 = vmax.f32 %v1535, %v1536
  %v1567 = vmax.f32 %v1537, %v1538
  %v1568 = vmax.f32 %v1539, %v1540
  %v1569 = vmax.f32 %v1541, %v1542
  %v1570 = vmax.f32 %v1543, %v1544
  %v1571 = vmax.f32 %v1545, %v1546
  %v1572 = vmax.f32 %v1547, %v1548
  %v1573 = vmax.f32 %v1549, %v1550
  %v1574 = vmax.f32 %v1551, %v1552
  %v1575 = vmax.f32 %v1553, %v1554
  %v1576 = vmax.f32 %v1555, %v1556
  %v1577 = vmax.f32 %v1557, %v1558
  %v1578 = vmax.f32 %v1559, %v1560
  %v1579 = vmax.f32 %v1561, %v1562
  %v1580 = vmax.f32 %v1563, %v1564
  %v1581 = vmax.f32 %v1565, %v1566
  %v1582 = vmax.f32 %v1567, %v1568
  %v1583 = vpack.c.bf16 %v1570, %v1569
  %v1584 = vpack.c.bf16 %v1572, %v1571
  %v1585 = vpack.c.bf16 %v1574, %v1573
  %v1586 = vpack.c.bf16 %v1576, %v1575
  %v1587 = vpack.c.bf16 %v1578, %v1577
  %v1588 = vpack.c.bf16 %v1580, %v1579
  %v1589 = vpack.c.bf16 %v1582, %v1581
  %v1590 = vld [vmem:[%s3] sm:$0xff]
  %v1591 = vld [vmem:[%s3 + $0x8] sm:$0xff]
  %v1592 = vld [vmem:[%s3 + $0x10] sm:$0xff]
  %v1593 = vld [vmem:[%s3 + $0x18] sm:$0xff]
  %v1594 = vld [vmem:[%s3 + $0x20] sm:$0xff]
  %v1595 = vld [vmem:[%s3 + $0x28] sm:$0xff]
  %v1596 = vld [vmem:[%s3 + $0x30] sm:$0xff]
  %v1597 = vld [vmem:[%s3 + $0x38] sm:$0xff]
  %v1598 = vld [vmem:[%s3 + $0x40] sm:$0xff]
  %v1599 = vld [vmem:[%s3 + $0x48] sm:$0xff]
  %v1600 = vld [vmem:[%s3 + $0x50] sm:$0xff]
  %v1601 = vld [vmem:[%s3 + $0x58] sm:$0xff]
  %v1602 = vld [vmem:[%s3 + $0x60] sm:$0xff]
  %v1603 = vld [vmem:[%s3 + $0x68] sm:$0xff]
  %v1604 = vld [vmem:[%s3 + $0x70] sm:$0xff]
  %v1605 = vld [vmem:[%s3 + $0x78] sm:$0xff]
  %s1606 = scalar_lea.vmem %s3, 128
  %v1607 = vld [vmem:[%s1606] sm:$0xff]
  %v1608 = vld [vmem:[%s1606 + $0x8] sm:$0xff]
  %v1609 = vld [vmem:[%s1606 + $0x10] sm:$0xff]
  %v1610 = vld [vmem:[%s1606 + $0x18] sm:$0xff]
  %v1611 = vld [vmem:[%s1606 + $0x20] sm:$0xff]
  %v1612 = vld [vmem:[%s1606 + $0x28] sm:$0xff]
  %v1613 = vld [vmem:[%s1606 + $0x30] sm:$0xff]
  %v1614 = vld [vmem:[%s1606 + $0x38] sm:$0xff]
  %v1615 = vld [vmem:[%s1606 + $0x40] sm:$0xff]
  %v1616 = vld [vmem:[%s1606 + $0x48] sm:$0xff]
  %v1617 = vld [vmem:[%s1606 + $0x50] sm:$0xff]
  %v1618 = vld [vmem:[%s1606 + $0x58] sm:$0xff]
  %v1619 = vld [vmem:[%s1606 + $0x60] sm:$0xff]
  %v1620 = vld [vmem:[%s1606 + $0x68] sm:$0xff]
  %v1621 = vld [vmem:[%s1606 + $0x70] sm:$0xff]
  %v1622 = vld [vmem:[%s1606 + $0x78] sm:$0xff]
  %vm1629 = vcmask 1043456
  %v1630 = vrot.slane %v1583, 4
  %v1631 = vrot.slane %v1584, 4
  %v1632 = vsel %vm1629, %v1630, %v1631
  %v1633 = vrot.slane %v1585, 4
  %v1634 = vsel %vm1629, %v1631, %v1633
  %v1635 = vrot.slane %v1586, 4
  %v1636 = vsel %vm1629, %v1633, %v1635
  %v1637 = vrot.slane %v1587, 4
  %v1638 = vsel %vm1629, %v1635, %v1637
  %v1639 = vrot.slane %v1588, 4
  %v1640 = vsel %vm1629, %v1637, %v1639
  %v1662 = vunpack.c.l.b16 %v1607
  %v1663 = vunpack.c.h.b16 %v1607
  %v1664 = vunpack.c.l.b16 %v1608
  %v1665 = vunpack.c.h.b16 %v1608
  %v1666 = vunpack.c.l.b16 %v1609
  %v1667 = vunpack.c.h.b16 %v1609
  %v1668 = vunpack.c.l.b16 %v1610
  %v1669 = vunpack.c.h.b16 %v1610
  %v1670 = vunpack.c.l.b16 %v1611
  %v1671 = vunpack.c.h.b16 %v1611
  %v1672 = vunpack.c.l.b16 %v1612
  %v1673 = vunpack.c.h.b16 %v1612
  %v1674 = vunpack.c.l.b16 %v1613
  %v1675 = vunpack.c.h.b16 %v1613
  %v1676 = vunpack.c.l.b16 %v1614
  %v1677 = vunpack.c.h.b16 %v1614
  %v1678 = vunpack.c.l.b16 %v1615
  %v1679 = vunpack.c.h.b16 %v1615
  %v1680 = vunpack.c.l.b16 %v1616
  %v1681 = vunpack.c.h.b16 %v1616
  %v1682 = vunpack.c.l.b16 %v1617
  %v1683 = vunpack.c.h.b16 %v1617
  %v1684 = vunpack.c.l.b16 %v1618
  %v1685 = vunpack.c.h.b16 %v1618
  %v1686 = vunpack.c.l.b16 %v1619
  %v1687 = vunpack.c.h.b16 %v1619
  %v1688 = vunpack.c.l.b16 %v1620
  %v1689 = vunpack.c.h.b16 %v1620
  %v1690 = vunpack.c.l.b16 %v1621
  %v1691 = vunpack.c.h.b16 %v1621
  %v1692 = vunpack.c.l.b16 %v1622
  %v1693 = vunpack.c.h.b16 %v1622
  %v1694 = vpack.c.b16 %v1664, %v1662
  %v1695 = vpack.c.b16 %v1665, %v1663
  %v1696 = vpack.c.b16 %v1668, %v1666
  %v1697 = vpack.c.b16 %v1669, %v1667
  %v1698 = vpack.c.b16 %v1672, %v1670
  %v1699 = vpack.c.b16 %v1673, %v1671
  %v1700 = vpack.c.b16 %v1676, %v1674
  %v1701 = vpack.c.b16 %v1677, %v1675
  %v1702 = vpack.c.b16 %v1680, %v1678
  %v1703 = vpack.c.b16 %v1681, %v1679
  %v1704 = vpack.c.b16 %v1684, %v1682
  %v1705 = vpack.c.b16 %v1685, %v1683
  %v1706 = vpack.c.b16 %v1688, %v1686
  %v1707 = vpack.c.b16 %v1689, %v1687
  %v1708 = vpack.c.b16 %v1692, %v1690
  %v1709 = vpack.c.b16 %v1693, %v1691
  %1726 = vmatprep.subr.bf16.mxu0 %v1695
  %1727 = vmatpush1.bf16.msra.mxu0 %v1694
  %1728 = vmatprep.subr.bf16.mxu0 %v1697
  %1729 = vmatpush1.bf16.msra.mxu0 %v1696
  %1730 = vmatprep.subr.bf16.mxu0 %v1699
  %1731 = vmatpush1.bf16.msra.mxu0 %v1698
  %1732 = vmatprep.subr.bf16.mxu0 %v1701
  %1733 = vmatpush1.bf16.msra.mxu0 %v1700
  %1734 = vmatprep.subr.bf16.mxu0 %v1703
  %1735 = vmatpush1.bf16.msra.mxu0 %v1702
  %1736 = vmatprep.subr.bf16.mxu0 %v1705
  %1737 = vmatpush1.bf16.msra.mxu0 %v1704
  %1738 = vmatprep.subr.bf16.mxu0 %v1707
  %1739 = vmatpush1.bf16.msra.mxu0 %v1706
  %1740 = vmatprep.subr.bf16.mxu0 %v1709
  %1741 = vmatpush1.bf16.msra.mxu0 %v1708
  %1742 = vmatprep.subr.bf16.mxu0 0
  %1743 = vmatpush1.bf16.msra.mxu0 0
  %1744 = vmatprep.subr.bf16.mxu0 0
  %1745 = vmatpush1.bf16.msra.mxu0 0
  %1746 = vmatprep.subr.bf16.mxu0 0
  %1747 = vmatpush1.bf16.msra.mxu0 0
  %1748 = vmatprep.subr.bf16.mxu0 0
  %1749 = vmatpush1.bf16.msra.mxu0 0
  %1750 = vmatprep.subr.bf16.mxu0 0
  %1751 = vmatpush1.bf16.msra.mxu0 0
  %1752 = vmatprep.subr.bf16.mxu0 0
  %1753 = vmatpush1.bf16.msra.mxu0 0
  %1754 = vmatprep.subr.bf16.mxu0 0
  %1755 = vmatpush1.bf16.msra.mxu0 0
  %1756 = vmatprep.subr.bf16.mxu0 0
  %1757 = vmatpush1.bf16.msra.mxu0 0
  %1758 = vmatprep.mubr.bf16.mxu0 0
  %1759 = vmatmul.mubr.bf16.gmra.mrb[0].mxu0 %v1632
  %v1760 = vpop.f32.mrb[0].mxu0
  %v1761 = vadd.f32 0.0, %v1760
  %v1762 = vpop.f32.mrb[0].mxu0
  %v1763 = vadd.f32 0.0, %v1762
  %v1764 = vpop.f32.mrb[0].mxu0
  %v1765 = vadd.f32 0.0, %v1764
  %v1766 = vpop.f32.mrb[0].mxu0
  %v1767 = vadd.f32 0.0, %v1766
  %1768 = vmatprep.mubr.bf16.mxu0 0
  %1769 = vmatmul.mubr.bf16.gmra.mrb[0].mxu0 %v1634
  %v1770 = vpop.f32.mrb[0].mxu0
  %v1771 = vadd.f32 0.0, %v1770
  %v1772 = vpop.f32.mrb[0].mxu0
  %v1773 = vadd.f32 0.0, %v1772
  %v1774 = vpop.f32.mrb[0].mxu0
  %v1775 = vadd.f32 0.0, %v1774
  %v1776 = vpop.f32.mrb[0].mxu0
  %v1777 = vadd.f32 0.0, %v1776
  %1778 = vmatprep.mubr.bf16.mxu0 0
  %1779 = vmatmul.mubr.bf16.gmra.mrb[0].mxu0 %v1636
  %v1780 = vpop.f32.mrb[0].mxu0
  %v1781 = vadd.f32 0.0, %v1780
  %v1782 = vpop.f32.mrb[0].mxu0
  %v1783 = vadd.f32 0.0, %v1782
  %v1784 = vpop.f32.mrb[0].mxu0
  %v1785 = vadd.f32 0.0, %v1784
  %v1786 = vpop.f32.mrb[0].mxu0
  %v1787 = vadd.f32 0.0, %v1786
  %1788 = vmatprep.mubr.bf16.mxu0 0
  %1789 = vmatmul.mubr.bf16.gmra.mrb[0].mxu0 %v1638
  %v1790 = vpop.f32.mrb[0].mxu0
  %v1791 = vadd.f32 0.0, %v1790
  %v1792 = vpop.f32.mrb[0].mxu0
  %v1793 = vadd.f32 0.0, %v1792
  %v1794 = vpop.f32.mrb[0].mxu0
  %v1795 = vadd.f32 0.0, %v1794
  %v1796 = vpop.f32.mrb[0].mxu0
  %v1797 = vadd.f32 0.0, %v1796
  %1798 = vmatprep.mubr.bf16.mxu0 0
  %1799 = vmatmul.mubr.bf16.gmra.mrb[0].mxu0 %v1640
  %v1800 = vpop.f32.mrb[0].mxu0
  %v1801 = vadd.f32 0.0, %v1800
  %v1802 = vpop.f32.mrb[0].mxu0
  %v1803 = vadd.f32 0.0, %v1802
  %v1804 = vpop.f32.mrb[0].mxu0
  %v1805 = vadd.f32 0.0, %v1804
  %v1806 = vpop.f32.mrb[0].mxu0
  %v1807 = vadd.f32 0.0, %v1806
  %1808 = vdwg.mxu0
  %v1825 = vunpack.c.l.b16 %v1590
  %v1826 = vunpack.c.h.b16 %v1590
  %v1827 = vunpack.c.l.b16 %v1591
  %v1828 = vunpack.c.h.b16 %v1591
  %v1829 = vunpack.c.l.b16 %v1592
  %v1830 = vunpack.c.h.b16 %v1592
  %v1831 = vunpack.c.l.b16 %v1593
  %v1832 = vunpack.c.h.b16 %v1593
  %v1833 = vunpack.c.l.b16 %v1594
  %v1834 = vunpack.c.h.b16 %v1594
  %v1835 = vunpack.c.l.b16 %v1595
  %v1836 = vunpack.c.h.b16 %v1595
  %v1837 = vunpack.c.l.b16 %v1596
  %v1838 = vunpack.c.h.b16 %v1596
  %v1839 = vunpack.c.l.b16 %v1597
  %v1840 = vunpack.c.h.b16 %v1597
  %v1841 = vunpack.c.l.b16 %v1598
  %v1842 = vunpack.c.h.b16 %v1598
  %v1843 = vunpack.c.l.b16 %v1599
  %v1844 = vunpack.c.h.b16 %v1599
  %v1845 = vunpack.c.l.b16 %v1600
  %v1846 = vunpack.c.h.b16 %v1600
  %v1847 = vunpack.c.l.b16 %v1601
  %v1848 = vunpack.c.h.b16 %v1601
  %v1849 = vunpack.c.l.b16 %v1602
  %v1850 = vunpack.c.h.b16 %v1602
  %v1851 = vunpack.c.l.b16 %v1603
  %v1852 = vunpack.c.h.b16 %v1603
  %v1853 = vunpack.c.l.b16 %v1604
  %v1854 = vunpack.c.h.b16 %v1604
  %v1855 = vunpack.c.l.b16 %v1605
  %v1856 = vunpack.c.h.b16 %v1605
  %v1857 = vpack.c.b16 %v1827, %v1825
  %v1858 = vpack.c.b16 %v1828, %v1826
  %v1859 = vpack.c.b16 %v1831, %v1829
  %v1860 = vpack.c.b16 %v1832, %v1830
  %v1861 = vpack.c.b16 %v1835, %v1833
  %v1862 = vpack.c.b16 %v1836, %v1834
  %v1863 = vpack.c.b16 %v1839, %v1837
  %v1864 = vpack.c.b16 %v1840, %v1838
  %v1865 = vpack.c.b16 %v1843, %v1841
  %v1866 = vpack.c.b16 %v1844, %v1842
  %v1867 = vpack.c.b16 %v1847, %v1845
  %v1868 = vpack.c.b16 %v1848, %v1846
  %v1869 = vpack.c.b16 %v1851, %v1849
  %v1870 = vpack.c.b16 %v1852, %v1850
  %v1871 = vpack.c.b16 %v1855, %v1853
  %v1872 = vpack.c.b16 %v1856, %v1854
  %1889 = vmatprep.subr.bf16.mxu0 %v1858
  %1890 = vmatpush1.bf16.msra.mxu0 %v1857
  %1891 = vmatprep.subr.bf16.mxu0 %v1860
  %1892 = vmatpush1.bf16.msra.mxu0 %v1859
  %1893 = vmatprep.subr.bf16.mxu0 %v1862
  %1894 = vmatpush1.bf16.msra.mxu0 %v1861
  %1895 = vmatprep.subr.bf16.mxu0 %v1864
  %1896 = vmatpush1.bf16.msra.mxu0 %v1863
  %1897 = vmatprep.subr.bf16.mxu0 %v1866
  %1898 = vmatpush1.bf16.msra.mxu0 %v1865
  %1899 = vmatprep.subr.bf16.mxu0 %v1868
  %1900 = vmatpush1.bf16.msra.mxu0 %v1867
  %1901 = vmatprep.subr.bf16.mxu0 %v1870
  %1902 = vmatpush1.bf16.msra.mxu0 %v1869
  %1903 = vmatprep.subr.bf16.mxu0 %v1872
  %1904 = vmatpush1.bf16.msra.mxu0 %v1871
  %1905 = vmatprep.subr.bf16.mxu0 0
  %1906 = vmatpush1.bf16.msra.mxu0 0
  %1907 = vmatprep.subr.bf16.mxu0 0
  %1908 = vmatpush1.bf16.msra.mxu0 0
  %1909 = vmatprep.subr.bf16.mxu0 0
  %1910 = vmatpush1.bf16.msra.mxu0 0
  %1911 = vmatprep.subr.bf16.mxu0 0
  %1912 = vmatpush1.bf16.msra.mxu0 0
  %1913 = vmatprep.subr.bf16.mxu0 0
  %1914 = vmatpush1.bf16.msra.mxu0 0
  %1915 = vmatprep.subr.bf16.mxu0 0
  %1916 = vmatpush1.bf16.msra.mxu0 0
  %1917 = vmatprep.subr.bf16.mxu0 0
  %1918 = vmatpush1.bf16.msra.mxu0 0
  %1919 = vmatprep.subr.bf16.mxu0 0
  %1920 = vmatpush1.bf16.msra.mxu0 0
  %1921 = vmatprep.mubr.bf16.mxu0 0
  %1922 = vmatmul.mubr.bf16.gmra.mrb[0].mxu0 %v1583
  %v1923 = vpop.f32.mrb[0].mxu0
  %v1924 = vadd.f32 %v1761, %v1923
  %v1925 = vpop.f32.mrb[0].mxu0
  %v1926 = vadd.f32 %v1763, %v1925
  %v1927 = vpop.f32.mrb[0].mxu0
  %v1928 = vadd.f32 %v1765, %v1927
  %v1929 = vpop.f32.mrb[0].mxu0
  %v1930 = vadd.f32 %v1767, %v1929
  %1931 = vmatprep.mubr.bf16.mxu0 0
  %1932 = vmatmul.mubr.bf16.gmra.mrb[0].mxu0 %v1584
  %v1933 = vpop.f32.mrb[0].mxu0
  %v1934 = vadd.f32 %v1771, %v1933
  %v1935 = vpop.f32.mrb[0].mxu0
  %v1936 = vadd.f32 %v1773, %v1935
  %v1937 = vpop.f32.mrb[0].mxu0
  %v1938 = vadd.f32 %v1775, %v1937
  %v1939 = vpop.f32.mrb[0].mxu0
  %v1940 = vadd.f32 %v1777, %v1939
  %1941 = vmatprep.mubr.bf16.mxu0 0
  %1942 = vmatmul.mubr.bf16.gmra.mrb[0].mxu0 %v1585
  %v1943 = vpop.f32.mrb[0].mxu0
  %v1944 = vadd.f32 %v1781, %v1943
  %v1945 = vpop.f32.mrb[0].mxu0
  %v1946 = vadd.f32 %v1783, %v1945
  %v1947 = vpop.f32.mrb[0].mxu0
  %v1948 = vadd.f32 %v1785, %v1947
  %v1949 = vpop.f32.mrb[0].mxu0
  %v1950 = vadd.f32 %v1787, %v1949
  %1951 = vmatprep.mubr.bf16.mxu0 0
  %1952 = vmatmul.mubr.bf16.gmra.mrb[0].mxu0 %v1586
  %v1953 = vpop.f32.mrb[0].mxu0
  %v1954 = vadd.f32 %v1791, %v1953
  %v1955 = vpop.f32.mrb[0].mxu0
  %v1956 = vadd.f32 %v1793, %v1955
  %v1957 = vpop.f32.mrb[0].mxu0
  %v1958 = vadd.f32 %v1795, %v1957
  %v1959 = vpop.f32.mrb[0].mxu0
  %v1960 = vadd.f32 %v1797, %v1959
  %1961 = vmatprep.mubr.bf16.mxu0 0
  %1962 = vmatmul.mubr.bf16.gmra.mrb[0].mxu0 %v1587
  %v1963 = vpop.f32.mrb[0].mxu0
  %v1964 = vadd.f32 %v1801, %v1963
  %v1965 = vpop.f32.mrb[0].mxu0
  %v1966 = vadd.f32 %v1803, %v1965
  %v1967 = vpop.f32.mrb[0].mxu0
  %v1968 = vadd.f32 %v1805, %v1967
  %v1969 = vpop.f32.mrb[0].mxu0
  %v1970 = vadd.f32 %v1807, %v1969
  %1971 = vdwg.mxu0
  %s1972 = scalar_lea.vmem %s3, 256
  %v1973 = vld [vmem:[%s1972] sm:$0xff]
  %v1974 = vld [vmem:[%s1972 + $0x8] sm:$0xff]
  %v1975 = vld [vmem:[%s1972 + $0x10] sm:$0xff]
  %v1976 = vld [vmem:[%s1972 + $0x18] sm:$0xff]
  %v1977 = vld [vmem:[%s1972 + $0x20] sm:$0xff]
  %v1978 = vld [vmem:[%s1972 + $0x28] sm:$0xff]
  %v1979 = vld [vmem:[%s1972 + $0x30] sm:$0xff]
  %v1980 = vld [vmem:[%s1972 + $0x38] sm:$0xff]
  %v1981 = vld [vmem:[%s1972 + $0x40] sm:$0xff]
  %v1982 = vld [vmem:[%s1972 + $0x48] sm:$0xff]
  %v1983 = vld [vmem:[%s1972 + $0x50] sm:$0xff]
  %v1984 = vld [vmem:[%s1972 + $0x58] sm:$0xff]
  %v1985 = vld [vmem:[%s1972 + $0x60] sm:$0xff]
  %v1986 = vld [vmem:[%s1972 + $0x68] sm:$0xff]
  %v1987 = vld [vmem:[%s1972 + $0x70] sm:$0xff]
  %v1988 = vld [vmem:[%s1972 + $0x78] sm:$0xff]
  %v2005 = vunpack.c.l.b16 %v1973
  %v2006 = vunpack.c.h.b16 %v1973
  %v2007 = vunpack.c.l.b16 %v1974
  %v2008 = vunpack.c.h.b16 %v1974
  %v2009 = vunpack.c.l.b16 %v1975
  %v2010 = vunpack.c.h.b16 %v1975
  %v2011 = vunpack.c.l.b16 %v1976
  %v2012 = vunpack.c.h.b16 %v1976
  %v2013 = vunpack.c.l.b16 %v1977
  %v2014 = vunpack.c.h.b16 %v1977
  %v2015 = vunpack.c.l.b16 %v1978
  %v2016 = vunpack.c.h.b16 %v1978
  %v2017 = vunpack.c.l.b16 %v1979
  %v2018 = vunpack.c.h.b16 %v1979
  %v2019 = vunpack.c.l.b16 %v1980
  %v2020 = vunpack.c.h.b16 %v1980
  %v2021 = vunpack.c.l.b16 %v1981
  %v2022 = vunpack.c.h.b16 %v1981
  %v2023 = vunpack.c.l.b16 %v1982
  %v2024 = vunpack.c.h.b16 %v1982
  %v2025 = vunpack.c.l.b16 %v1983
  %v2026 = vunpack.c.h.b16 %v1983
  %v2027 = vunpack.c.l.b16 %v1984
  %v2028 = vunpack.c.h.b16 %v1984
  %v2029 = vunpack.c.l.b16 %v1985
  %v2030 = vunpack.c.h.b16 %v1985
  %v2031 = vunpack.c.l.b16 %v1986
  %v2032 = vunpack.c.h.b16 %v1986
  %v2033 = vunpack.c.l.b16 %v1987
  %v2034 = vunpack.c.h.b16 %v1987
  %v2035 = vunpack.c.l.b16 %v1988
  %v2036 = vunpack.c.h.b16 %v1988
  %v2037 = vpack.c.b16 %v2007, %v2005
  %v2038 = vpack.c.b16 %v2008, %v2006
  %v2039 = vpack.c.b16 %v2011, %v2009
  %v2040 = vpack.c.b16 %v2012, %v2010
  %v2041 = vpack.c.b16 %v2015, %v2013
  %v2042 = vpack.c.b16 %v2016, %v2014
  %v2043 = vpack.c.b16 %v2019, %v2017
  %v2044 = vpack.c.b16 %v2020, %v2018
  %v2045 = vpack.c.b16 %v2023, %v2021
  %v2046 = vpack.c.b16 %v2024, %v2022
  %v2047 = vpack.c.b16 %v2027, %v2025
  %v2048 = vpack.c.b16 %v2028, %v2026
  %v2049 = vpack.c.b16 %v2031, %v2029
  %v2050 = vpack.c.b16 %v2032, %v2030
  %v2051 = vpack.c.b16 %v2035, %v2033
  %v2052 = vpack.c.b16 %v2036, %v2034
  %2069 = vmatprep.subr.bf16.mxu0 %v2038
  %2070 = vmatpush1.bf16.msra.mxu0 %v2037
  %2071 = vmatprep.subr.bf16.mxu0 %v2040
  %2072 = vmatpush1.bf16.msra.mxu0 %v2039
  %2073 = vmatprep.subr.bf16.mxu0 %v2042
  %2074 = vmatpush1.bf16.msra.mxu0 %v2041
  %2075 = vmatprep.subr.bf16.mxu0 %v2044
  %2076 = vmatpush1.bf16.msra.mxu0 %v2043
  %2077 = vmatprep.subr.bf16.mxu0 %v2046
  %2078 = vmatpush1.bf16.msra.mxu0 %v2045
  %2079 = vmatprep.subr.bf16.mxu0 %v2048
  %2080 = vmatpush1.bf16.msra.mxu0 %v2047
  %2081 = vmatprep.subr.bf16.mxu0 %v2050
  %2082 = vmatpush1.bf16.msra.mxu0 %v2049
  %2083 = vmatprep.subr.bf16.mxu0 %v2052
  %2084 = vmatpush1.bf16.msra.mxu0 %v2051
  %2085 = vmatprep.subr.bf16.mxu0 0
  %2086 = vmatpush1.bf16.msra.mxu0 0
  %2087 = vmatprep.subr.bf16.mxu0 0
  %2088 = vmatpush1.bf16.msra.mxu0 0
  %2089 = vmatprep.subr.bf16.mxu0 0
  %2090 = vmatpush1.bf16.msra.mxu0 0
  %2091 = vmatprep.subr.bf16.mxu0 0
  %2092 = vmatpush1.bf16.msra.mxu0 0
  %2093 = vmatprep.subr.bf16.mxu0 0
  %2094 = vmatpush1.bf16.msra.mxu0 0
  %2095 = vmatprep.subr.bf16.mxu0 0
  %2096 = vmatpush1.bf16.msra.mxu0 0
  %2097 = vmatprep.subr.bf16.mxu0 0
  %2098 = vmatpush1.bf16.msra.mxu0 0
  %2099 = vmatprep.subr.bf16.mxu0 0
  %2100 = vmatpush1.bf16.msra.mxu0 0
  %2101 = vmatprep.mubr.bf16.mxu0 0
  %2102 = vmatmul.mubr.bf16.gmra.mrb[0].mxu0 %v1584
  %v2103 = vpop.f32.mrb[0].mxu0
  %v2104 = vadd.f32 0.0, %v2103
  %v2105 = vpop.f32.mrb[0].mxu0
  %v2106 = vadd.f32 0.0, %v2105
  %v2107 = vpop.f32.mrb[0].mxu0
  %v2108 = vadd.f32 0.0, %v2107
  %v2109 = vpop.f32.mrb[0].mxu0
  %v2110 = vadd.f32 0.0, %v2109
  %2111 = vmatprep.mubr.bf16.mxu0 0
  %2112 = vmatmul.mubr.bf16.gmra.mrb[0].mxu0 %v1585
  %v2113 = vpop.f32.mrb[0].mxu0
  %v2114 = vadd.f32 0.0, %v2113
  %v2115 = vpop.f32.mrb[0].mxu0
  %v2116 = vadd.f32 0.0, %v2115
  %v2117 = vpop.f32.mrb[0].mxu0
  %v2118 = vadd.f32 0.0, %v2117
  %v2119 = vpop.f32.mrb[0].mxu0
  %v2120 = vadd.f32 0.0, %v2119
  %2121 = vmatprep.mubr.bf16.mxu0 0
  %2122 = vmatmul.mubr.bf16.gmra.mrb[0].mxu0 %v1586
  %v2123 = vpop.f32.mrb[0].mxu0
  %v2124 = vadd.f32 0.0, %v2123
  %v2125 = vpop.f32.mrb[0].mxu0
  %v2126 = vadd.f32 0.0, %v2125
  %v2127 = vpop.f32.mrb[0].mxu0
  %v2128 = vadd.f32 0.0, %v2127
  %v2129 = vpop.f32.mrb[0].mxu0
  %v2130 = vadd.f32 0.0, %v2129
  %2131 = vmatprep.mubr.bf16.mxu0 0
  %2132 = vmatmul.mubr.bf16.gmra.mrb[0].mxu0 %v1587
  %v2133 = vpop.f32.mrb[0].mxu0
  %v2134 = vadd.f32 0.0, %v2133
  %v2135 = vpop.f32.mrb[0].mxu0
  %v2136 = vadd.f32 0.0, %v2135
  %v2137 = vpop.f32.mrb[0].mxu0
  %v2138 = vadd.f32 0.0, %v2137
  %v2139 = vpop.f32.mrb[0].mxu0
  %v2140 = vadd.f32 0.0, %v2139
  %2141 = vmatprep.mubr.bf16.mxu0 0
  %2142 = vmatmul.mubr.bf16.gmra.mrb[0].mxu0 %v1588
  %v2143 = vpop.f32.mrb[0].mxu0
  %v2144 = vadd.f32 0.0, %v2143
  %v2145 = vpop.f32.mrb[0].mxu0
  %v2146 = vadd.f32 0.0, %v2145
  %v2147 = vpop.f32.mrb[0].mxu0
  %v2148 = vadd.f32 0.0, %v2147
  %v2149 = vpop.f32.mrb[0].mxu0
  %v2150 = vadd.f32 0.0, %v2149
  %2151 = vdwg.mxu0
  %v2152 = vadd.f32 %v1924, %v2104
  %v2153 = vadd.f32 %v1926, %v2106
  %v2154 = vadd.f32 %v1928, %v2108
  %v2155 = vadd.f32 %v1930, %v2110
  %v2156 = vadd.f32 %v1934, %v2114
  %v2157 = vadd.f32 %v1936, %v2116
  %v2158 = vadd.f32 %v1938, %v2118
  %v2159 = vadd.f32 %v1940, %v2120
  %v2160 = vadd.f32 %v1944, %v2124
  %v2161 = vadd.f32 %v1946, %v2126
  %v2162 = vadd.f32 %v1948, %v2128
  %v2163 = vadd.f32 %v1950, %v2130
  %v2164 = vadd.f32 %v1954, %v2134
  %v2165 = vadd.f32 %v1956, %v2136
  %v2166 = vadd.f32 %v1958, %v2138
  %v2167 = vadd.f32 %v1960, %v2140
  %v2168 = vadd.f32 %v1964, %v2144
  %v2169 = vadd.f32 %v1966, %v2146
  %v2170 = vadd.f32 %v1968, %v2148
  %v2171 = vadd.f32 %v1970, %v2150
  %s2172 = scalar_lea.vmem %s3, 384
  %v2173 = vld [vmem:[%s2172] sm:$0xff]
  %v2174 = vld [vmem:[%s2172 + $0x8] sm:$0xff]
  %v2175 = vld [vmem:[%s2172 + $0x10] sm:$0xff]
  %v2176 = vld [vmem:[%s2172 + $0x18] sm:$0xff]
  %v2177 = vld [vmem:[%s2172 + $0x20] sm:$0xff]
  %v2178 = vld [vmem:[%s2172 + $0x28] sm:$0xff]
  %v2179 = vld [vmem:[%s2172 + $0x30] sm:$0xff]
  %v2180 = vld [vmem:[%s2172 + $0x38] sm:$0xff]
  %v2181 = vld [vmem:[%s2172 + $0x40] sm:$0xff]
  %v2182 = vld [vmem:[%s2172 + $0x48] sm:$0xff]
  %v2183 = vld [vmem:[%s2172 + $0x50] sm:$0xff]
  %v2184 = vld [vmem:[%s2172 + $0x58] sm:$0xff]
  %v2185 = vld [vmem:[%s2172 + $0x60] sm:$0xff]
  %v2186 = vld [vmem:[%s2172 + $0x68] sm:$0xff]
  %v2187 = vld [vmem:[%s2172 + $0x70] sm:$0xff]
  %v2188 = vld [vmem:[%s2172 + $0x78] sm:$0xff]
  %v2190 = vrot.slane %v1589, 4
  %v2191 = vsel %vm1629, %v1639, %v2190
  %v2209 = vunpack.c.l.b16 %v2173
  %v2210 = vunpack.c.h.b16 %v2173
  %v2211 = vunpack.c.l.b16 %v2174
  %v2212 = vunpack.c.h.b16 %v2174
  %v2213 = vunpack.c.l.b16 %v2175
  %v2214 = vunpack.c.h.b16 %v2175
  %v2215 = vunpack.c.l.b16 %v2176
  %v2216 = vunpack.c.h.b16 %v2176
  %v2217 = vunpack.c.l.b16 %v2177
  %v2218 = vunpack.c.h.b16 %v2177
  %v2219 = vunpack.c.l.b16 %v2178
  %v2220 = vunpack.c.h.b16 %v2178
  %v2221 = vunpack.c.l.b16 %v2179
  %v2222 = vunpack.c.h.b16 %v2179
  %v2223 = vunpack.c.l.b16 %v2180
  %v2224 = vunpack.c.h.b16 %v2180
  %v2225 = vunpack.c.l.b16 %v2181
  %v2226 = vunpack.c.h.b16 %v2181
  %v2227 = vunpack.c.l.b16 %v2182
  %v2228 = vunpack.c.h.b16 %v2182
  %v2229 = vunpack.c.l.b16 %v2183
  %v2230 = vunpack.c.h.b16 %v2183
  %v2231 = vunpack.c.l.b16 %v2184
  %v2232 = vunpack.c.h.b16 %v2184
  %v2233 = vunpack.c.l.b16 %v2185
  %v2234 = vunpack.c.h.b16 %v2185
  %v2235 = vunpack.c.l.b16 %v2186
  %v2236 = vunpack.c.h.b16 %v2186
  %v2237 = vunpack.c.l.b16 %v2187
  %v2238 = vunpack.c.h.b16 %v2187
  %v2239 = vunpack.c.l.b16 %v2188
  %v2240 = vunpack.c.h.b16 %v2188
  %v2241 = vpack.c.b16 %v2211, %v2209
  %v2242 = vpack.c.b16 %v2212, %v2210
  %v2243 = vpack.c.b16 %v2215, %v2213
  %v2244 = vpack.c.b16 %v2216, %v2214
  %v2245 = vpack.c.b16 %v2219, %v2217
  %v2246 = vpack.c.b16 %v2220, %v2218
  %v2247 = vpack.c.b16 %v2223, %v2221
  %v2248 = vpack.c.b16 %v2224, %v2222
  %v2249 = vpack.c.b16 %v2227, %v2225
  %v2250 = vpack.c.b16 %v2228, %v2226
  %v2251 = vpack.c.b16 %v2231, %v2229
  %v2252 = vpack.c.b16 %v2232, %v2230
  %v2253 = vpack.c.b16 %v2235, %v2233
  %v2254 = vpack.c.b16 %v2236, %v2234
  %v2255 = vpack.c.b16 %v2239, %v2237
  %v2256 = vpack.c.b16 %v2240, %v2238
  %2273 = vmatprep.subr.bf16.mxu0 %v2242
  %2274 = vmatpush1.bf16.msra.mxu0 %v2241
  %2275 = vmatprep.subr.bf16.mxu0 %v2244
  %2276 = vmatpush1.bf16.msra.mxu0 %v2243
  %2277 = vmatprep.subr.bf16.mxu0 %v2246
  %2278 = vmatpush1.bf16.msra.mxu0 %v2245
  %2279 = vmatprep.subr.bf16.mxu0 %v2248
  %2280 = vmatpush1.bf16.msra.mxu0 %v2247
  %2281 = vmatprep.subr.bf16.mxu0 %v2250
  %2282 = vmatpush1.bf16.msra.mxu0 %v2249
  %2283 = vmatprep.subr.bf16.mxu0 %v2252
  %2284 = vmatpush1.bf16.msra.mxu0 %v2251
  %2285 = vmatprep.subr.bf16.mxu0 %v2254
  %2286 = vmatpush1.bf16.msra.mxu0 %v2253
  %2287 = vmatprep.subr.bf16.mxu0 %v2256
  %2288 = vmatpush1.bf16.msra.mxu0 %v2255
  %2289 = vmatprep.subr.bf16.mxu0 0
  %2290 = vmatpush1.bf16.msra.mxu0 0
  %2291 = vmatprep.subr.bf16.mxu0 0
  %2292 = vmatpush1.bf16.msra.mxu0 0
  %2293 = vmatprep.subr.bf16.mxu0 0
  %2294 = vmatpush1.bf16.msra.mxu0 0
  %2295 = vmatprep.subr.bf16.mxu0 0
  %2296 = vmatpush1.bf16.msra.mxu0 0
  %2297 = vmatprep.subr.bf16.mxu0 0
  %2298 = vmatpush1.bf16.msra.mxu0 0
  %2299 = vmatprep.subr.bf16.mxu0 0
  %2300 = vmatpush1.bf16.msra.mxu0 0
  %2301 = vmatprep.subr.bf16.mxu0 0
  %2302 = vmatpush1.bf16.msra.mxu0 0
  %2303 = vmatprep.subr.bf16.mxu0 0
  %2304 = vmatpush1.bf16.msra.mxu0 0
  %2305 = vmatprep.mubr.bf16.mxu0 0
  %2306 = vmatmul.mubr.bf16.gmra.mrb[0].mxu0 %v1634
  %v2307 = vpop.f32.mrb[0].mxu0
  %v2308 = vadd.f32 0.0, %v2307
  %v2309 = vpop.f32.mrb[0].mxu0
  %v2310 = vadd.f32 0.0, %v2309
  %v2311 = vpop.f32.mrb[0].mxu0
  %v2312 = vadd.f32 0.0, %v2311
  %v2313 = vpop.f32.mrb[0].mxu0
  %v2314 = vadd.f32 0.0, %v2313
  %2315 = vmatprep.mubr.bf16.mxu0 0
  %2316 = vmatmul.mubr.bf16.gmra.mrb[0].mxu0 %v1636
  %v2317 = vpop.f32.mrb[0].mxu0
  %v2318 = vadd.f32 0.0, %v2317
  %v2319 = vpop.f32.mrb[0].mxu0
  %v2320 = vadd.f32 0.0, %v2319
  %v2321 = vpop.f32.mrb[0].mxu0
  %v2322 = vadd.f32 0.0, %v2321
  %v2323 = vpop.f32.mrb[0].mxu0
  %v2324 = vadd.f32 0.0, %v2323
  %2325 = vmatprep.mubr.bf16.mxu0 0
  %2326 = vmatmul.mubr.bf16.gmra.mrb[0].mxu0 %v1638
  %v2327 = vpop.f32.mrb[0].mxu0
  %v2328 = vadd.f32 0.0, %v2327
  %v2329 = vpop.f32.mrb[0].mxu0
  %v2330 = vadd.f32 0.0, %v2329
  %v2331 = vpop.f32.mrb[0].mxu0
  %v2332 = vadd.f32 0.0, %v2331
  %v2333 = vpop.f32.mrb[0].mxu0
  %v2334 = vadd.f32 0.0, %v2333
  %2335 = vmatprep.mubr.bf16.mxu0 0
  %2336 = vmatmul.mubr.bf16.gmra.mrb[0].mxu0 %v1640
  %v2337 = vpop.f32.mrb[0].mxu0
  %v2338 = vadd.f32 0.0, %v2337
  %v2339 = vpop.f32.mrb[0].mxu0
  %v2340 = vadd.f32 0.0, %v2339
  %v2341 = vpop.f32.mrb[0].mxu0
  %v2342 = vadd.f32 0.0, %v2341
  %v2343 = vpop.f32.mrb[0].mxu0
  %v2344 = vadd.f32 0.0, %v2343
  %2345 = vmatprep.mubr.bf16.mxu0 0
  %2346 = vmatmul.mubr.bf16.gmra.mrb[0].mxu0 %v2191
  %v2347 = vpop.f32.mrb[0].mxu0
  %v2348 = vadd.f32 0.0, %v2347
  %v2349 = vpop.f32.mrb[0].mxu0
  %v2350 = vadd.f32 0.0, %v2349
  %v2351 = vpop.f32.mrb[0].mxu0
  %v2352 = vadd.f32 0.0, %v2351
  %v2353 = vpop.f32.mrb[0].mxu0
  %v2354 = vadd.f32 0.0, %v2353
  %2355 = vdwg.mxu0
  %v2356 = vadd.f32 %v2152, %v2308
  %v2357 = vadd.f32 %v2153, %v2310
  %v2358 = vadd.f32 %v2154, %v2312
  %v2359 = vadd.f32 %v2155, %v2314
  %v2360 = vadd.f32 %v2156, %v2318
  %v2361 = vadd.f32 %v2157, %v2320
  %v2362 = vadd.f32 %v2158, %v2322
  %v2363 = vadd.f32 %v2159, %v2324
  %v2364 = vadd.f32 %v2160, %v2328
  %v2365 = vadd.f32 %v2161, %v2330
  %v2366 = vadd.f32 %v2162, %v2332
  %v2367 = vadd.f32 %v2163, %v2334
  %v2368 = vadd.f32 %v2164, %v2338
  %v2369 = vadd.f32 %v2165, %v2340
  %v2370 = vadd.f32 %v2166, %v2342
  %v2371 = vadd.f32 %v2167, %v2344
  %v2372 = vadd.f32 %v2168, %v2348
  %v2373 = vadd.f32 %v2169, %v2350
  %v2374 = vadd.f32 %v2170, %v2352
  %v2375 = vadd.f32 %v2171, %v2354
  %s2376 = scalar_lea.vmem %s3, 512
  %v2377 = vld [vmem:[%s2376] sm:$0xff]
  %v2378 = vld [vmem:[%s2376 + $0x8] sm:$0xff]
  %v2379 = vld [vmem:[%s2376 + $0x10] sm:$0xff]
  %v2380 = vld [vmem:[%s2376 + $0x18] sm:$0xff]
  %v2381 = vld [vmem:[%s2376 + $0x20] sm:$0xff]
  %v2382 = vld [vmem:[%s2376 + $0x28] sm:$0xff]
  %v2383 = vld [vmem:[%s2376 + $0x30] sm:$0xff]
  %v2384 = vld [vmem:[%s2376 + $0x38] sm:$0xff]
  %v2385 = vld [vmem:[%s2376 + $0x40] sm:$0xff]
  %v2386 = vld [vmem:[%s2376 + $0x48] sm:$0xff]
  %v2387 = vld [vmem:[%s2376 + $0x50] sm:$0xff]
  %v2388 = vld [vmem:[%s2376 + $0x58] sm:$0xff]
  %v2389 = vld [vmem:[%s2376 + $0x60] sm:$0xff]
  %v2390 = vld [vmem:[%s2376 + $0x68] sm:$0xff]
  %v2391 = vld [vmem:[%s2376 + $0x70] sm:$0xff]
  %v2392 = vld [vmem:[%s2376 + $0x78] sm:$0xff]
  %v2409 = vunpack.c.l.b16 %v2377
  %v2410 = vunpack.c.h.b16 %v2377
  %v2411 = vunpack.c.l.b16 %v2378
  %v2412 = vunpack.c.h.b16 %v2378
  %v2413 = vunpack.c.l.b16 %v2379
  %v2414 = vunpack.c.h.b16 %v2379
  %v2415 = vunpack.c.l.b16 %v2380
  %v2416 = vunpack.c.h.b16 %v2380
  %v2417 = vunpack.c.l.b16 %v2381
  %v2418 = vunpack.c.h.b16 %v2381
  %v2419 = vunpack.c.l.b16 %v2382
  %v2420 = vunpack.c.h.b16 %v2382
  %v2421 = vunpack.c.l.b16 %v2383
  %v2422 = vunpack.c.h.b16 %v2383
  %v2423 = vunpack.c.l.b16 %v2384
  %v2424 = vunpack.c.h.b16 %v2384
  %v2425 = vunpack.c.l.b16 %v2385
  %v2426 = vunpack.c.h.b16 %v2385
  %v2427 = vunpack.c.l.b16 %v2386
  %v2428 = vunpack.c.h.b16 %v2386
  %v2429 = vunpack.c.l.b16 %v2387
  %v2430 = vunpack.c.h.b16 %v2387
  %v2431 = vunpack.c.l.b16 %v2388
  %v2432 = vunpack.c.h.b16 %v2388
  %v2433 = vunpack.c.l.b16 %v2389
  %v2434 = vunpack.c.h.b16 %v2389
  %v2435 = vunpack.c.l.b16 %v2390
  %v2436 = vunpack.c.h.b16 %v2390
  %v2437 = vunpack.c.l.b16 %v2391
  %v2438 = vunpack.c.h.b16 %v2391
  %v2439 = vunpack.c.l.b16 %v2392
  %v2440 = vunpack.c.h.b16 %v2392
  %v2441 = vpack.c.b16 %v2411, %v2409
  %v2442 = vpack.c.b16 %v2412, %v2410
  %v2443 = vpack.c.b16 %v2415, %v2413
  %v2444 = vpack.c.b16 %v2416, %v2414
  %v2445 = vpack.c.b16 %v2419, %v2417
  %v2446 = vpack.c.b16 %v2420, %v2418
  %v2447 = vpack.c.b16 %v2423, %v2421
  %v2448 = vpack.c.b16 %v2424, %v2422
  %v2449 = vpack.c.b16 %v2427, %v2425
  %v2450 = vpack.c.b16 %v2428, %v2426
  %v2451 = vpack.c.b16 %v2431, %v2429
  %v2452 = vpack.c.b16 %v2432, %v2430
  %v2453 = vpack.c.b16 %v2435, %v2433
  %v2454 = vpack.c.b16 %v2436, %v2434
  %v2455 = vpack.c.b16 %v2439, %v2437
  %v2456 = vpack.c.b16 %v2440, %v2438
  %2473 = vmatprep.subr.bf16.mxu0 %v2442
  %2474 = vmatpush1.bf16.msra.mxu0 %v2441
  %2475 = vmatprep.subr.bf16.mxu0 %v2444
  %2476 = vmatpush1.bf16.msra.mxu0 %v2443
  %2477 = vmatprep.subr.bf16.mxu0 %v2446
  %2478 = vmatpush1.bf16.msra.mxu0 %v2445
  %2479 = vmatprep.subr.bf16.mxu0 %v2448
  %2480 = vmatpush1.bf16.msra.mxu0 %v2447
  %2481 = vmatprep.subr.bf16.mxu0 %v2450
  %2482 = vmatpush1.bf16.msra.mxu0 %v2449
  %2483 = vmatprep.subr.bf16.mxu0 %v2452
  %2484 = vmatpush1.bf16.msra.mxu0 %v2451
  %2485 = vmatprep.subr.bf16.mxu0 %v2454
  %2486 = vmatpush1.bf16.msra.mxu0 %v2453
  %2487 = vmatprep.subr.bf16.mxu0 %v2456
  %2488 = vmatpush1.bf16.msra.mxu0 %v2455
  %2489 = vmatprep.subr.bf16.mxu0 0
  %2490 = vmatpush1.bf16.msra.mxu0 0
  %2491 = vmatprep.subr.bf16.mxu0 0
  %2492 = vmatpush1.bf16.msra.mxu0 0
  %2493 = vmatprep.subr.bf16.mxu0 0
  %2494 = vmatpush1.bf16.msra.mxu0 0
  %2495 = vmatprep.subr.bf16.mxu0 0
  %2496 = vmatpush1.bf16.msra.mxu0 0
  %2497 = vmatprep.subr.bf16.mxu0 0
  %2498 = vmatpush1.bf16.msra.mxu0 0
  %2499 = vmatprep.subr.bf16.mxu0 0
  %2500 = vmatpush1.bf16.msra.mxu0 0
  %2501 = vmatprep.subr.bf16.mxu0 0
  %2502 = vmatpush1.bf16.msra.mxu0 0
  %2503 = vmatprep.subr.bf16.mxu0 0
  %2504 = vmatpush1.bf16.msra.mxu0 0
  %2505 = vmatprep.mubr.bf16.mxu0 0
  %2506 = vmatmul.mubr.bf16.gmra.mrb[0].mxu0 %v1585
  %v2507 = vpop.f32.mrb[0].mxu0
  %v2508 = vadd.f32 0.0, %v2507
  %v2509 = vpop.f32.mrb[0].mxu0
  %v2510 = vadd.f32 0.0, %v2509
  %v2511 = vpop.f32.mrb[0].mxu0
  %v2512 = vadd.f32 0.0, %v2511
  %v2513 = vpop.f32.mrb[0].mxu0
  %v2514 = vadd.f32 0.0, %v2513
  %2515 = vmatprep.mubr.bf16.mxu0 0
  %2516 = vmatmul.mubr.bf16.gmra.mrb[0].mxu0 %v1586
  %v2517 = vpop.f32.mrb[0].mxu0
  %v2518 = vadd.f32 0.0, %v2517
  %v2519 = vpop.f32.mrb[0].mxu0
  %v2520 = vadd.f32 0.0, %v2519
  %v2521 = vpop.f32.mrb[0].mxu0
  %v2522 = vadd.f32 0.0, %v2521
  %v2523 = vpop.f32.mrb[0].mxu0
  %v2524 = vadd.f32 0.0, %v2523
  %2525 = vmatprep.mubr.bf16.mxu0 0
  %2526 = vmatmul.mubr.bf16.gmra.mrb[0].mxu0 %v1587
  %v2527 = vpop.f32.mrb[0].mxu0
  %v2528 = vadd.f32 0.0, %v2527
  %v2529 = vpop.f32.mrb[0].mxu0
  %v2530 = vadd.f32 0.0, %v2529
  %v2531 = vpop.f32.mrb[0].mxu0
  %v2532 = vadd.f32 0.0, %v2531
  %v2533 = vpop.f32.mrb[0].mxu0
  %v2534 = vadd.f32 0.0, %v2533
  %2535 = vmatprep.mubr.bf16.mxu0 0
  %2536 = vmatmul.mubr.bf16.gmra.mrb[0].mxu0 %v1588
  %v2537 = vpop.f32.mrb[0].mxu0
  %v2538 = vadd.f32 0.0, %v2537
  %v2539 = vpop.f32.mrb[0].mxu0
  %v2540 = vadd.f32 0.0, %v2539
  %v2541 = vpop.f32.mrb[0].mxu0
  %v2542 = vadd.f32 0.0, %v2541
  %v2543 = vpop.f32.mrb[0].mxu0
  %v2544 = vadd.f32 0.0, %v2543
  %2545 = vmatprep.mubr.bf16.mxu0 0
  %2546 = vmatmul.mubr.bf16.gmra.mrb[0].mxu0 %v1589
  %v2547 = vpop.f32.mrb[0].mxu0
  %v2548 = vadd.f32 0.0, %v2547
  %v2549 = vpop.f32.mrb[0].mxu0
  %v2550 = vadd.f32 0.0, %v2549
  %v2551 = vpop.f32.mrb[0].mxu0
  %v2552 = vadd.f32 0.0, %v2551
  %v2553 = vpop.f32.mrb[0].mxu0
  %v2554 = vadd.f32 0.0, %v2553
  %2555 = vdwg.mxu0
  %v2556 = vadd.f32 %v2356, %v2508
  %v2557 = vadd.f32 %v2357, %v2510
  %v2558 = vadd.f32 %v2358, %v2512
  %v2559 = vadd.f32 %v2359, %v2514
  %v2560 = vadd.f32 %v2360, %v2518
  %v2561 = vadd.f32 %v2361, %v2520
  %v2562 = vadd.f32 %v2362, %v2522
  %v2563 = vadd.f32 %v2363, %v2524
  %v2564 = vadd.f32 %v2364, %v2528
  %v2565 = vadd.f32 %v2365, %v2530
  %v2566 = vadd.f32 %v2366, %v2532
  %v2567 = vadd.f32 %v2367, %v2534
  %v2568 = vadd.f32 %v2368, %v2538
  %v2569 = vadd.f32 %v2369, %v2540
  %v2570 = vadd.f32 %v2370, %v2542
  %v2571 = vadd.f32 %v2371, %v2544
  %v2572 = vadd.f32 %v2372, %v2548
  %v2573 = vadd.f32 %v2373, %v2550
  %v2574 = vadd.f32 %v2374, %v2552
  %v2575 = vadd.f32 %v2375, %v2554
  %v2576 = vld [vmem:[%s4] sm:$0x3]
  %v2578 = vlaneseq
  %v2579 = vshrl.u32 %v2578, 7
  %v2580 = vsub.s32 0, %v2579
  %v2581 = vrot.slane %v2576, %v2580
  %v2582 = vlaneseq
  %v2583 = vshrl.u32 %v2582, 7
  %v2584 = vsub.s32 1, %v2583
  %v2585 = vrot.slane %v2576, %v2584
  %v2588 = vadd.f32 %v2556, %v2581
  %v2589 = vadd.f32 %v2557, %v2585
  %v2590 = vadd.f32 %v2558, %v2581
  %v2591 = vadd.f32 %v2559, %v2585
  %v2592 = vadd.f32 %v2560, %v2581
  %v2593 = vadd.f32 %v2561, %v2585
  %v2594 = vadd.f32 %v2562, %v2581
  %v2595 = vadd.f32 %v2563, %v2585
  %v2596 = vadd.f32 %v2564, %v2581
  %v2597 = vadd.f32 %v2565, %v2585
  %v2598 = vadd.f32 %v2566, %v2581
  %v2599 = vadd.f32 %v2567, %v2585
  %v2600 = vadd.f32 %v2568, %v2581
  %v2601 = vadd.f32 %v2569, %v2585
  %v2602 = vadd.f32 %v2570, %v2581
  %v2603 = vadd.f32 %v2571, %v2585
  %v2604 = vadd.f32 %v2572, %v2581
  %v2605 = vadd.f32 %v2573, %v2585
  %v2606 = vadd.f32 %v2574, %v2581
  %v2607 = vadd.f32 %v2575, %v2585
  %v2608 = vmax.f32 %v2588, 0.0
  %v2609 = vmax.f32 %v2589, 0.0
  %v2610 = vmax.f32 %v2590, 0.0
  %v2611 = vmax.f32 %v2591, 0.0
  %v2612 = vmax.f32 %v2592, 0.0
  %v2613 = vmax.f32 %v2593, 0.0
  %v2614 = vmax.f32 %v2594, 0.0
  %v2615 = vmax.f32 %v2595, 0.0
  %v2616 = vmax.f32 %v2596, 0.0
  %v2617 = vmax.f32 %v2597, 0.0
  %v2618 = vmax.f32 %v2598, 0.0
  %v2619 = vmax.f32 %v2599, 0.0
  %v2620 = vmax.f32 %v2600, 0.0
  %v2621 = vmax.f32 %v2601, 0.0
  %v2622 = vmax.f32 %v2602, 0.0
  %v2623 = vmax.f32 %v2603, 0.0
  %v2624 = vmax.f32 %v2604, 0.0
  %v2625 = vmax.f32 %v2605, 0.0
  %v2626 = vmax.f32 %v2606, 0.0
  %v2627 = vmax.f32 %v2607, 0.0
  %v2628 = vmax.f32 %v2608, %v2609
  %v2629 = vmax.f32 %v2610, %v2611
  %v2630 = vmax.f32 %v2612, %v2613
  %v2631 = vmax.f32 %v2614, %v2615
  %v2632 = vmax.f32 %v2616, %v2617
  %v2633 = vmax.f32 %v2618, %v2619
  %v2634 = vmax.f32 %v2620, %v2621
  %v2635 = vmax.f32 %v2622, %v2623
  %v2636 = vmax.f32 %v2624, %v2625
  %v2637 = vmax.f32 %v2626, %v2627
  %v2638 = vmax.f32 %v2628, %v2629
  %v2639 = vpack.c.bf16 %v2638, %v2638
  %v2640 = vmax.f32 %v2630, %v2631
  %v2641 = vpack.c.bf16 %v2640, %v2640
  %v2642 = vmax.f32 %v2632, %v2633
  %v2643 = vpack.c.bf16 %v2642, %v2642
  %v2644 = vmax.f32 %v2634, %v2635
  %v2645 = vpack.c.bf16 %v2644, %v2644
  %v2646 = vmax.f32 %v2636, %v2637
  %v2647 = vpack.c.bf16 %v2646, %v2646
  %v2648 = vld [vmem:[%s5] sm:$0xf]
  %v2649 = vld [vmem:[%s5 + $0x4] sm:$0xf]
  %v2650 = vld [vmem:[%s5 + $0x8] sm:$0xf]
  %v2651 = vld [vmem:[%s5 + $0xc] sm:$0xf]
  %v2652 = vld [vmem:[%s5 + $0x10] sm:$0xf]
  %v2653 = vld [vmem:[%s5 + $0x14] sm:$0xf]
  %v2654 = vld [vmem:[%s5 + $0x18] sm:$0xf]
  %v2655 = vld [vmem:[%s5 + $0x1c] sm:$0xf]
  %v2656 = vld [vmem:[%s5 + $0x20] sm:$0xf]
  %v2657 = vld [vmem:[%s5 + $0x24] sm:$0xf]
  %v2658 = vld [vmem:[%s5 + $0x28] sm:$0xf]
  %v2659 = vld [vmem:[%s5 + $0x2c] sm:$0xf]
  %v2660 = vld [vmem:[%s5 + $0x30] sm:$0xf]
  %v2661 = vld [vmem:[%s5 + $0x34] sm:$0xf]
  %v2662 = vld [vmem:[%s5 + $0x38] sm:$0xf]
  %v2663 = vld [vmem:[%s5 + $0x3c] sm:$0xf]
  %s2664 = scalar_lea.vmem %s5, 64
  %v2665 = vld [vmem:[%s2664] sm:$0xf]
  %v2666 = vld [vmem:[%s2664 + $0x4] sm:$0xf]
  %v2667 = vld [vmem:[%s2664 + $0x8] sm:$0xf]
  %v2668 = vld [vmem:[%s2664 + $0xc] sm:$0xf]
  %v2669 = vld [vmem:[%s2664 + $0x10] sm:$0xf]
  %v2670 = vld [vmem:[%s2664 + $0x14] sm:$0xf]
  %v2671 = vld [vmem:[%s2664 + $0x18] sm:$0xf]
  %v2672 = vld [vmem:[%s2664 + $0x1c] sm:$0xf]
  %v2673 = vld [vmem:[%s2664 + $0x20] sm:$0xf]
  %v2674 = vld [vmem:[%s2664 + $0x24] sm:$0xf]
  %v2675 = vld [vmem:[%s2664 + $0x28] sm:$0xf]
  %v2676 = vld [vmem:[%s2664 + $0x2c] sm:$0xf]
  %v2677 = vld [vmem:[%s2664 + $0x30] sm:$0xf]
  %v2678 = vld [vmem:[%s2664 + $0x34] sm:$0xf]
  %v2679 = vld [vmem:[%s2664 + $0x38] sm:$0xf]
  %v2680 = vld [vmem:[%s2664 + $0x3c] sm:$0xf]
  %v2697 = vunpack.c.l.b16 %v2665
  %v2698 = vunpack.c.l.b16 %v2666
  %v2699 = vunpack.c.l.b16 %v2667
  %v2700 = vunpack.c.l.b16 %v2668
  %v2701 = vunpack.c.l.b16 %v2669
  %v2702 = vunpack.c.l.b16 %v2670
  %v2703 = vunpack.c.l.b16 %v2671
  %v2704 = vunpack.c.l.b16 %v2672
  %v2705 = vunpack.c.l.b16 %v2673
  %v2706 = vunpack.c.l.b16 %v2674
  %v2707 = vunpack.c.l.b16 %v2675
  %v2708 = vunpack.c.l.b16 %v2676
  %v2709 = vunpack.c.l.b16 %v2677
  %v2710 = vunpack.c.l.b16 %v2678
  %v2711 = vunpack.c.l.b16 %v2679
  %v2712 = vunpack.c.l.b16 %v2680
  %v2713 = vpack.c.b16 %v2698, %v2697
  %v2714 = vpack.c.b16 %v2700, %v2699
  %v2715 = vpack.c.b16 %v2702, %v2701
  %v2716 = vpack.c.b16 %v2704, %v2703
  %v2717 = vpack.c.b16 %v2706, %v2705
  %v2718 = vpack.c.b16 %v2708, %v2707
  %v2719 = vpack.c.b16 %v2710, %v2709
  %v2720 = vpack.c.b16 %v2712, %v2711
  %2729 = vmatprep.subr.bf16.mxu0 0
  %2730 = vmatpush1.bf16.msra.mxu0 %v2713
  %2731 = vmatprep.subr.bf16.mxu0 0
  %2732 = vmatpush1.bf16.msra.mxu0 %v2714
  %2733 = vmatprep.subr.bf16.mxu0 0
  %2734 = vmatpush1.bf16.msra.mxu0 %v2715
  %2735 = vmatprep.subr.bf16.mxu0 0
  %2736 = vmatpush1.bf16.msra.mxu0 %v2716
  %2737 = vmatprep.subr.bf16.mxu0 0
  %2738 = vmatpush1.bf16.msra.mxu0 %v2717
  %2739 = vmatprep.subr.bf16.mxu0 0
  %2740 = vmatpush1.bf16.msra.mxu0 %v2718
  %2741 = vmatprep.subr.bf16.mxu0 0
  %2742 = vmatpush1.bf16.msra.mxu0 %v2719
  %2743 = vmatprep.subr.bf16.mxu0 0
  %2744 = vmatpush1.bf16.msra.mxu0 %v2720
  %2745 = vmatprep.subr.bf16.mxu0 0
  %2746 = vmatpush1.bf16.msra.mxu0 0
  %2747 = vmatprep.subr.bf16.mxu0 0
  %2748 = vmatpush1.bf16.msra.mxu0 0
  %2749 = vmatprep.subr.bf16.mxu0 0
  %2750 = vmatpush1.bf16.msra.mxu0 0
  %2751 = vmatprep.subr.bf16.mxu0 0
  %2752 = vmatpush1.bf16.msra.mxu0 0
  %2753 = vmatprep.subr.bf16.mxu0 0
  %2754 = vmatpush1.bf16.msra.mxu0 0
  %2755 = vmatprep.subr.bf16.mxu0 0
  %2756 = vmatpush1.bf16.msra.mxu0 0
  %2757 = vmatprep.subr.bf16.mxu0 0
  %2758 = vmatpush1.bf16.msra.mxu0 0
  %2759 = vmatprep.subr.bf16.mxu0 0
  %2760 = vmatpush1.bf16.msra.mxu0 0
  %2761 = vmatprep.mubr.bf16.mxu0 0
  %2762 = vmatmul.mubr.bf16.gmra.mrb[0].mxu0 %v2641
  %v2763 = vpop.f32.mrb[0].mxu0
  %v2764 = vadd.f32 0.0, %v2763
  %v2765 = vpop.f32.mrb[0].mxu0
  %v2766 = vpop.f32.mrb[0].mxu0
  %v2767 = vpop.f32.mrb[0].mxu0
  %2768 = vdwg.mxu0
  %v2785 = vunpack.c.l.b16 %v2648
  %v2786 = vunpack.c.l.b16 %v2649
  %v2787 = vunpack.c.l.b16 %v2650
  %v2788 = vunpack.c.l.b16 %v2651
  %v2789 = vunpack.c.l.b16 %v2652
  %v2790 = vunpack.c.l.b16 %v2653
  %v2791 = vunpack.c.l.b16 %v2654
  %v2792 = vunpack.c.l.b16 %v2655
  %v2793 = vunpack.c.l.b16 %v2656
  %v2794 = vunpack.c.l.b16 %v2657
  %v2795 = vunpack.c.l.b16 %v2658
  %v2796 = vunpack.c.l.b16 %v2659
  %v2797 = vunpack.c.l.b16 %v2660
  %v2798 = vunpack.c.l.b16 %v2661
  %v2799 = vunpack.c.l.b16 %v2662
  %v2800 = vunpack.c.l.b16 %v2663
  %v2801 = vpack.c.b16 %v2786, %v2785
  %v2802 = vpack.c.b16 %v2788, %v2787
  %v2803 = vpack.c.b16 %v2790, %v2789
  %v2804 = vpack.c.b16 %v2792, %v2791
  %v2805 = vpack.c.b16 %v2794, %v2793
  %v2806 = vpack.c.b16 %v2796, %v2795
  %v2807 = vpack.c.b16 %v2798, %v2797
  %v2808 = vpack.c.b16 %v2800, %v2799
  %2817 = vmatprep.subr.bf16.mxu0 0
  %2818 = vmatpush1.bf16.msra.mxu0 %v2801
  %2819 = vmatprep.subr.bf16.mxu0 0
  %2820 = vmatpush1.bf16.msra.mxu0 %v2802
  %2821 = vmatprep.subr.bf16.mxu0 0
  %2822 = vmatpush1.bf16.msra.mxu0 %v2803
  %2823 = vmatprep.subr.bf16.mxu0 0
  %2824 = vmatpush1.bf16.msra.mxu0 %v2804
  %2825 = vmatprep.subr.bf16.mxu0 0
  %2826 = vmatpush1.bf16.msra.mxu0 %v2805
  %2827 = vmatprep.subr.bf16.mxu0 0
  %2828 = vmatpush1.bf16.msra.mxu0 %v2806
  %2829 = vmatprep.subr.bf16.mxu0 0
  %2830 = vmatpush1.bf16.msra.mxu0 %v2807
  %2831 = vmatprep.subr.bf16.mxu0 0
  %2832 = vmatpush1.bf16.msra.mxu0 %v2808
  %2833 = vmatprep.subr.bf16.mxu0 0
  %2834 = vmatpush1.bf16.msra.mxu0 0
  %2835 = vmatprep.subr.bf16.mxu0 0
  %2836 = vmatpush1.bf16.msra.mxu0 0
  %2837 = vmatprep.subr.bf16.mxu0 0
  %2838 = vmatpush1.bf16.msra.mxu0 0
  %2839 = vmatprep.subr.bf16.mxu0 0
  %2840 = vmatpush1.bf16.msra.mxu0 0
  %2841 = vmatprep.subr.bf16.mxu0 0
  %2842 = vmatpush1.bf16.msra.mxu0 0
  %2843 = vmatprep.subr.bf16.mxu0 0
  %2844 = vmatpush1.bf16.msra.mxu0 0
  %2845 = vmatprep.subr.bf16.mxu0 0
  %2846 = vmatpush1.bf16.msra.mxu0 0
  %2847 = vmatprep.subr.bf16.mxu0 0
  %2848 = vmatpush1.bf16.msra.mxu0 0
  %2849 = vmatprep.mubr.bf16.mxu0 0
  %2850 = vmatmul.mubr.bf16.gmra.mrb[0].mxu0 %v2639
  %v2851 = vpop.f32.mrb[0].mxu0
  %v2852 = vadd.f32 %v2764, %v2851
  %v2853 = vpop.f32.mrb[0].mxu0
  %v2854 = vpop.f32.mrb[0].mxu0
  %v2855 = vpop.f32.mrb[0].mxu0
  %2856 = vdwg.mxu0
  %s2857 = scalar_lea.vmem %s5, 128
  %v2858 = vld [vmem:[%s2857] sm:$0xf]
  %v2859 = vld [vmem:[%s2857 + $0x4] sm:$0xf]
  %v2860 = vld [vmem:[%s2857 + $0x8] sm:$0xf]
  %v2861 = vld [vmem:[%s2857 + $0xc] sm:$0xf]
  %v2862 = vld [vmem:[%s2857 + $0x10] sm:$0xf]
  %v2863 = vld [vmem:[%s2857 + $0x14] sm:$0xf]
  %v2864 = vld [vmem:[%s2857 + $0x18] sm:$0xf]
  %v2865 = vld [vmem:[%s2857 + $0x1c] sm:$0xf]
  %v2866 = vld [vmem:[%s2857 + $0x20] sm:$0xf]
  %v2867 = vld [vmem:[%s2857 + $0x24] sm:$0xf]
  %v2868 = vld [vmem:[%s2857 + $0x28] sm:$0xf]
  %v2869 = vld [vmem:[%s2857 + $0x2c] sm:$0xf]
  %v2870 = vld [vmem:[%s2857 + $0x30] sm:$0xf]
  %v2871 = vld [vmem:[%s2857 + $0x34] sm:$0xf]
  %v2872 = vld [vmem:[%s2857 + $0x38] sm:$0xf]
  %v2873 = vld [vmem:[%s2857 + $0x3c] sm:$0xf]
  %v2890 = vunpack.c.l.b16 %v2858
  %v2891 = vunpack.c.l.b16 %v2859
  %v2892 = vunpack.c.l.b16 %v2860
  %v2893 = vunpack.c.l.b16 %v2861
  %v2894 = vunpack.c.l.b16 %v2862
  %v2895 = vunpack.c.l.b16 %v2863
  %v2896 = vunpack.c.l.b16 %v2864
  %v2897 = vunpack.c.l.b16 %v2865
  %v2898 = vunpack.c.l.b16 %v2866
  %v2899 = vunpack.c.l.b16 %v2867
  %v2900 = vunpack.c.l.b16 %v2868
  %v2901 = vunpack.c.l.b16 %v2869
  %v2902 = vunpack.c.l.b16 %v2870
  %v2903 = vunpack.c.l.b16 %v2871
  %v2904 = vunpack.c.l.b16 %v2872
  %v2905 = vunpack.c.l.b16 %v2873
  %v2906 = vpack.c.b16 %v2891, %v2890
  %v2907 = vpack.c.b16 %v2893, %v2892
  %v2908 = vpack.c.b16 %v2895, %v2894
  %v2909 = vpack.c.b16 %v2897, %v2896
  %v2910 = vpack.c.b16 %v2899, %v2898
  %v2911 = vpack.c.b16 %v2901, %v2900
  %v2912 = vpack.c.b16 %v2903, %v2902
  %v2913 = vpack.c.b16 %v2905, %v2904
  %2922 = vmatprep.subr.bf16.mxu0 0
  %2923 = vmatpush1.bf16.msra.mxu0 %v2906
  %2924 = vmatprep.subr.bf16.mxu0 0
  %2925 = vmatpush1.bf16.msra.mxu0 %v2907
  %2926 = vmatprep.subr.bf16.mxu0 0
  %2927 = vmatpush1.bf16.msra.mxu0 %v2908
  %2928 = vmatprep.subr.bf16.mxu0 0
  %2929 = vmatpush1.bf16.msra.mxu0 %v2909
  %2930 = vmatprep.subr.bf16.mxu0 0
  %2931 = vmatpush1.bf16.msra.mxu0 %v2910
  %2932 = vmatprep.subr.bf16.mxu0 0
  %2933 = vmatpush1.bf16.msra.mxu0 %v2911
  %2934 = vmatprep.subr.bf16.mxu0 0
  %2935 = vmatpush1.bf16.msra.mxu0 %v2912
  %2936 = vmatprep.subr.bf16.mxu0 0
  %2937 = vmatpush1.bf16.msra.mxu0 %v2913
  %2938 = vmatprep.subr.bf16.mxu0 0
  %2939 = vmatpush1.bf16.msra.mxu0 0
  %2940 = vmatprep.subr.bf16.mxu0 0
  %2941 = vmatpush1.bf16.msra.mxu0 0
  %2942 = vmatprep.subr.bf16.mxu0 0
  %2943 = vmatpush1.bf16.msra.mxu0 0
  %2944 = vmatprep.subr.bf16.mxu0 0
  %2945 = vmatpush1.bf16.msra.mxu0 0
  %2946 = vmatprep.subr.bf16.mxu0 0
  %2947 = vmatpush1.bf16.msra.mxu0 0
  %2948 = vmatprep.subr.bf16.mxu0 0
  %2949 = vmatpush1.bf16.msra.mxu0 0
  %2950 = vmatprep.subr.bf16.mxu0 0
  %2951 = vmatpush1.bf16.msra.mxu0 0
  %2952 = vmatprep.subr.bf16.mxu0 0
  %2953 = vmatpush1.bf16.msra.mxu0 0
  %2954 = vmatprep.mubr.bf16.mxu0 0
  %2955 = vmatmul.mubr.bf16.gmra.mrb[0].mxu0 %v2643
  %v2956 = vpop.f32.mrb[0].mxu0
  %v2957 = vadd.f32 0.0, %v2956
  %v2958 = vpop.f32.mrb[0].mxu0
  %v2959 = vpop.f32.mrb[0].mxu0
  %v2960 = vpop.f32.mrb[0].mxu0
  %2961 = vdwg.mxu0
  %v2962 = vadd.f32 %v2852, %v2957
  %s2963 = scalar_lea.vmem %s5, 192
  %v2964 = vld [vmem:[%s2963] sm:$0xf]
  %v2965 = vld [vmem:[%s2963 + $0x4] sm:$0xf]
  %v2966 = vld [vmem:[%s2963 + $0x8] sm:$0xf]
  %v2967 = vld [vmem:[%s2963 + $0xc] sm:$0xf]
  %v2968 = vld [vmem:[%s2963 + $0x10] sm:$0xf]
  %v2969 = vld [vmem:[%s2963 + $0x14] sm:$0xf]
  %v2970 = vld [vmem:[%s2963 + $0x18] sm:$0xf]
  %v2971 = vld [vmem:[%s2963 + $0x1c] sm:$0xf]
  %v2972 = vld [vmem:[%s2963 + $0x20] sm:$0xf]
  %v2973 = vld [vmem:[%s2963 + $0x24] sm:$0xf]
  %v2974 = vld [vmem:[%s2963 + $0x28] sm:$0xf]
  %v2975 = vld [vmem:[%s2963 + $0x2c] sm:$0xf]
  %v2976 = vld [vmem:[%s2963 + $0x30] sm:$0xf]
  %v2977 = vld [vmem:[%s2963 + $0x34] sm:$0xf]
  %v2978 = vld [vmem:[%s2963 + $0x38] sm:$0xf]
  %v2979 = vld [vmem:[%s2963 + $0x3c] sm:$0xf]
  %v2996 = vunpack.c.l.b16 %v2964
  %v2997 = vunpack.c.l.b16 %v2965
  %v2998 = vunpack.c.l.b16 %v2966
  %v2999 = vunpack.c.l.b16 %v2967
  %v3000 = vunpack.c.l.b16 %v2968
  %v3001 = vunpack.c.l.b16 %v2969
  %v3002 = vunpack.c.l.b16 %v2970
  %v3003 = vunpack.c.l.b16 %v2971
  %v3004 = vunpack.c.l.b16 %v2972
  %v3005 = vunpack.c.l.b16 %v2973
  %v3006 = vunpack.c.l.b16 %v2974
  %v3007 = vunpack.c.l.b16 %v2975
  %v3008 = vunpack.c.l.b16 %v2976
  %v3009 = vunpack.c.l.b16 %v2977
  %v3010 = vunpack.c.l.b16 %v2978
  %v3011 = vunpack.c.l.b16 %v2979
  %v3012 = vpack.c.b16 %v2997, %v2996
  %v3013 = vpack.c.b16 %v2999, %v2998
  %v3014 = vpack.c.b16 %v3001, %v3000
  %v3015 = vpack.c.b16 %v3003, %v3002
  %v3016 = vpack.c.b16 %v3005, %v3004
  %v3017 = vpack.c.b16 %v3007, %v3006
  %v3018 = vpack.c.b16 %v3009, %v3008
  %v3019 = vpack.c.b16 %v3011, %v3010
  %3028 = vmatprep.subr.bf16.mxu0 0
  %3029 = vmatpush1.bf16.msra.mxu0 %v3012
  %3030 = vmatprep.subr.bf16.mxu0 0
  %3031 = vmatpush1.bf16.msra.mxu0 %v3013
  %3032 = vmatprep.subr.bf16.mxu0 0
  %3033 = vmatpush1.bf16.msra.mxu0 %v3014
  %3034 = vmatprep.subr.bf16.mxu0 0
  %3035 = vmatpush1.bf16.msra.mxu0 %v3015
  %3036 = vmatprep.subr.bf16.mxu0 0
  %3037 = vmatpush1.bf16.msra.mxu0 %v3016
  %3038 = vmatprep.subr.bf16.mxu0 0
  %3039 = vmatpush1.bf16.msra.mxu0 %v3017
  %3040 = vmatprep.subr.bf16.mxu0 0
  %3041 = vmatpush1.bf16.msra.mxu0 %v3018
  %3042 = vmatprep.subr.bf16.mxu0 0
  %3043 = vmatpush1.bf16.msra.mxu0 %v3019
  %3044 = vmatprep.subr.bf16.mxu0 0
  %3045 = vmatpush1.bf16.msra.mxu0 0
  %3046 = vmatprep.subr.bf16.mxu0 0
  %3047 = vmatpush1.bf16.msra.mxu0 0
  %3048 = vmatprep.subr.bf16.mxu0 0
  %3049 = vmatpush1.bf16.msra.mxu0 0
  %3050 = vmatprep.subr.bf16.mxu0 0
  %3051 = vmatpush1.bf16.msra.mxu0 0
  %3052 = vmatprep.subr.bf16.mxu0 0
  %3053 = vmatpush1.bf16.msra.mxu0 0
  %3054 = vmatprep.subr.bf16.mxu0 0
  %3055 = vmatpush1.bf16.msra.mxu0 0
  %3056 = vmatprep.subr.bf16.mxu0 0
  %3057 = vmatpush1.bf16.msra.mxu0 0
  %3058 = vmatprep.subr.bf16.mxu0 0
  %3059 = vmatpush1.bf16.msra.mxu0 0
  %3060 = vmatprep.mubr.bf16.mxu0 0
  %3061 = vmatmul.mubr.bf16.gmra.mrb[0].mxu0 %v2645
  %v3062 = vpop.f32.mrb[0].mxu0
  %v3063 = vadd.f32 0.0, %v3062
  %v3064 = vpop.f32.mrb[0].mxu0
  %v3065 = vpop.f32.mrb[0].mxu0
  %v3066 = vpop.f32.mrb[0].mxu0
  %3067 = vdwg.mxu0
  %v3068 = vadd.f32 %v2962, %v3063
  %s3069 = scalar_lea.vmem %s5, 256
  %v3070 = vld [vmem:[%s3069] sm:$0xf]
  %v3071 = vld [vmem:[%s3069 + $0x4] sm:$0xf]
  %v3072 = vld [vmem:[%s3069 + $0x8] sm:$0xf]
  %v3073 = vld [vmem:[%s3069 + $0xc] sm:$0xf]
  %v3074 = vld [vmem:[%s3069 + $0x10] sm:$0xf]
  %v3075 = vld [vmem:[%s3069 + $0x14] sm:$0xf]
  %v3076 = vld [vmem:[%s3069 + $0x18] sm:$0xf]
  %v3077 = vld [vmem:[%s3069 + $0x1c] sm:$0xf]
  %v3078 = vld [vmem:[%s3069 + $0x20] sm:$0xf]
  %v3079 = vld [vmem:[%s3069 + $0x24] sm:$0xf]
  %v3080 = vld [vmem:[%s3069 + $0x28] sm:$0xf]
  %v3081 = vld [vmem:[%s3069 + $0x2c] sm:$0xf]
  %v3082 = vld [vmem:[%s3069 + $0x30] sm:$0xf]
  %v3083 = vld [vmem:[%s3069 + $0x34] sm:$0xf]
  %v3084 = vld [vmem:[%s3069 + $0x38] sm:$0xf]
  %v3085 = vld [vmem:[%s3069 + $0x3c] sm:$0xf]
  %v3102 = vunpack.c.l.b16 %v3070
  %v3103 = vunpack.c.l.b16 %v3071
  %v3104 = vunpack.c.l.b16 %v3072
  %v3105 = vunpack.c.l.b16 %v3073
  %v3106 = vunpack.c.l.b16 %v3074
  %v3107 = vunpack.c.l.b16 %v3075
  %v3108 = vunpack.c.l.b16 %v3076
  %v3109 = vunpack.c.l.b16 %v3077
  %v3110 = vunpack.c.l.b16 %v3078
  %v3111 = vunpack.c.l.b16 %v3079
  %v3112 = vunpack.c.l.b16 %v3080
  %v3113 = vunpack.c.l.b16 %v3081
  %v3114 = vunpack.c.l.b16 %v3082
  %v3115 = vunpack.c.l.b16 %v3083
  %v3116 = vunpack.c.l.b16 %v3084
  %v3117 = vunpack.c.l.b16 %v3085
  %v3118 = vpack.c.b16 %v3103, %v3102
  %v3119 = vpack.c.b16 %v3105, %v3104
  %v3120 = vpack.c.b16 %v3107, %v3106
  %v3121 = vpack.c.b16 %v3109, %v3108
  %v3122 = vpack.c.b16 %v3111, %v3110
  %v3123 = vpack.c.b16 %v3113, %v3112
  %v3124 = vpack.c.b16 %v3115, %v3114
  %v3125 = vpack.c.b16 %v3117, %v3116
  %3134 = vmatprep.subr.bf16.mxu0 0
  %3135 = vmatpush1.bf16.msra.mxu0 %v3118
  %3136 = vmatprep.subr.bf16.mxu0 0
  %3137 = vmatpush1.bf16.msra.mxu0 %v3119
  %3138 = vmatprep.subr.bf16.mxu0 0
  %3139 = vmatpush1.bf16.msra.mxu0 %v3120
  %3140 = vmatprep.subr.bf16.mxu0 0
  %3141 = vmatpush1.bf16.msra.mxu0 %v3121
  %3142 = vmatprep.subr.bf16.mxu0 0
  %3143 = vmatpush1.bf16.msra.mxu0 %v3122
  %3144 = vmatprep.subr.bf16.mxu0 0
  %3145 = vmatpush1.bf16.msra.mxu0 %v3123
  %3146 = vmatprep.subr.bf16.mxu0 0
  %3147 = vmatpush1.bf16.msra.mxu0 %v3124
  %3148 = vmatprep.subr.bf16.mxu0 0
  %3149 = vmatpush1.bf16.msra.mxu0 %v3125
  %3150 = vmatprep.subr.bf16.mxu0 0
  %3151 = vmatpush1.bf16.msra.mxu0 0
  %3152 = vmatprep.subr.bf16.mxu0 0
  %3153 = vmatpush1.bf16.msra.mxu0 0
  %3154 = vmatprep.subr.bf16.mxu0 0
  %3155 = vmatpush1.bf16.msra.mxu0 0
  %3156 = vmatprep.subr.bf16.mxu0 0
  %3157 = vmatpush1.bf16.msra.mxu0 0
  %3158 = vmatprep.subr.bf16.mxu0 0
  %3159 = vmatpush1.bf16.msra.mxu0 0
  %3160 = vmatprep.subr.bf16.mxu0 0
  %3161 = vmatpush1.bf16.msra.mxu0 0
  %3162 = vmatprep.subr.bf16.mxu0 0
  %3163 = vmatpush1.bf16.msra.mxu0 0
  %3164 = vmatprep.subr.bf16.mxu0 0
  %3165 = vmatpush1.bf16.msra.mxu0 0
  %3166 = vmatprep.mubr.bf16.mxu0 0
  %3167 = vmatmul.mubr.bf16.gmra.mrb[0].mxu0 %v2647
  %v3168 = vpop.f32.mrb[0].mxu0
  %v3169 = vadd.f32 0.0, %v3168
  %v3170 = vpop.f32.mrb[0].mxu0
  %v3171 = vpop.f32.mrb[0].mxu0
  %v3172 = vpop.f32.mrb[0].mxu0
  %3173 = vdwg.mxu0
  %v3174 = vadd.f32 %v3068, %v3169
  %v3175 = vld [vmem:[%s6] sm:$0x1]
  %v3177 = vlaneseq
  %v3178 = vshrl.u32 %v3177, 7
  %v3179 = vsub.s32 0, %v3178
  %v3180 = vrot.slane %v3175, %v3179
  %v3182 = vadd.f32 %v3174, %v3180
  %v3183 = vmax.f32 %v3182, 0.0
  %v3184 = vpack.c.bf16 %v3183, %v3183
  %v3185 = vld [vmem:[%s7] sm:$0xf]
  %v3186 = vld [vmem:[%s7 + $0x4] sm:$0xf]
  %v3187 = vld [vmem:[%s7 + $0x8] sm:$0xf]
  %v3188 = vld [vmem:[%s7 + $0xc] sm:$0xf]
  %v3189 = vld [vmem:[%s7 + $0x10] sm:$0xf]
  %v3190 = vld [vmem:[%s7 + $0x14] sm:$0xf]
  %v3191 = vld [vmem:[%s7 + $0x18] sm:$0xf]
  %v3192 = vld [vmem:[%s7 + $0x1c] sm:$0xf]
  %v3193 = vld [vmem:[%s7 + $0x20] sm:$0xf]
  %v3194 = vld [vmem:[%s7 + $0x24] sm:$0xf]
  %v3195 = vld [vmem:[%s7 + $0x28] sm:$0xf]
  %v3196 = vld [vmem:[%s7 + $0x2c] sm:$0xf]
  %v3197 = vld [vmem:[%s7 + $0x30] sm:$0xf]
  %v3198 = vld [vmem:[%s7 + $0x34] sm:$0xf]
  %v3199 = vld [vmem:[%s7 + $0x38] sm:$0xf]
  %v3200 = vld [vmem:[%s8] sm:$0x1]
  %v3202 = vlaneseq
  %v3203 = vshrl.u32 %v3202, 7
  %v3204 = vsub.s32 0, %v3203
  %v3205 = vrot.slane %v3200, %v3204
  %v3222 = vunpack.c.l.b16 %v3185
  %v3223 = vunpack.c.l.b16 %v3186
  %v3224 = vunpack.c.l.b16 %v3187
  %v3225 = vunpack.c.l.b16 %v3188
  %v3226 = vunpack.c.l.b16 %v3189
  %v3227 = vunpack.c.l.b16 %v3190
  %v3228 = vunpack.c.l.b16 %v3191
  %v3229 = vunpack.c.l.b16 %v3192
  %v3230 = vunpack.c.l.b16 %v3193
  %v3231 = vunpack.c.l.b16 %v3194
  %v3232 = vunpack.c.l.b16 %v3195
  %v3233 = vunpack.c.l.b16 %v3196
  %v3234 = vunpack.c.l.b16 %v3197
  %v3235 = vunpack.c.l.b16 %v3198
  %v3236 = vunpack.c.l.b16 %v3199
  %v3237 = vpack.c.b16 %v3223, %v3222
  %v3238 = vpack.c.b16 %v3225, %v3224
  %v3239 = vpack.c.b16 %v3227, %v3226
  %v3240 = vpack.c.b16 %v3229, %v3228
  %v3241 = vpack.c.b16 %v3231, %v3230
  %v3242 = vpack.c.b16 %v3233, %v3232
  %v3243 = vpack.c.b16 %v3235, %v3234
  %v3244 = vpack.c.b16 %v3236, %v3236
  %vm3252 = vcmask 982016
  %v3254 = vsel %vm3252, %v3184, 0
  %vm3256 = vcmask 1043456
  %v3258 = vsel %vm3256, %v3244, 0
  %3260 = vmatprep.subr.bf16.mxu0 0
  %3261 = vmatpush1.bf16.msra.mxu0 %v3237
  %3262 = vmatprep.subr.bf16.mxu0 0
  %3263 = vmatpush1.bf16.msra.mxu0 %v3238
  %3264 = vmatprep.subr.bf16.mxu0 0
  %3265 = vmatpush1.bf16.msra.mxu0 %v3239
  %3266 = vmatprep.subr.bf16.mxu0 0
  %3267 = vmatpush1.bf16.msra.mxu0 %v3240
  %3268 = vmatprep.subr.bf16.mxu0 0
  %3269 = vmatpush1.bf16.msra.mxu0 %v3241
  %3270 = vmatprep.subr.bf16.mxu0 0
  %3271 = vmatpush1.bf16.msra.mxu0 %v3242
  %3272 = vmatprep.subr.bf16.mxu0 0
  %3273 = vmatpush1.bf16.msra.mxu0 %v3243
  %3274 = vmatprep.subr.bf16.mxu0 0
  %3275 = vmatpush1.bf16.msra.mxu0 %v3258
  %3276 = vmatprep.subr.bf16.mxu0 0
  %3277 = vmatpush1.bf16.msra.mxu0 0
  %3278 = vmatprep.subr.bf16.mxu0 0
  %3279 = vmatpush1.bf16.msra.mxu0 0
  %3280 = vmatprep.subr.bf16.mxu0 0
  %3281 = vmatpush1.bf16.msra.mxu0 0
  %3282 = vmatprep.subr.bf16.mxu0 0
  %3283 = vmatpush1.bf16.msra.mxu0 0
  %3284 = vmatprep.subr.bf16.mxu0 0
  %3285 = vmatpush1.bf16.msra.mxu0 0
  %3286 = vmatprep.subr.bf16.mxu0 0
  %3287 = vmatpush1.bf16.msra.mxu0 0
  %3288 = vmatprep.subr.bf16.mxu0 0
  %3289 = vmatpush1.bf16.msra.mxu0 0
  %3290 = vmatprep.subr.bf16.mxu0 0
  %3291 = vmatpush1.bf16.msra.mxu0 0
  %3292 = vmatprep.mubr.bf16.mxu0 0
  %3293 = vmatmul.mubr.bf16.gmra.mrb[0].mxu0 %v3254
  %v3294 = vpop.f32.mrb[0].mxu0
  %v3295 = vadd.f32 %v3205, %v3294
  %v3296 = vpop.f32.mrb[0].mxu0
  %v3297 = vpop.f32.mrb[0].mxu0
  %v3298 = vpop.f32.mrb[0].mxu0
  %3299 = vdwg.mxu0
  %v3300 = vmax.f32 %v3295, 0.0
  %v3301 = vpack.c.bf16 %v3300, %v3300
  %v3302 = vld [vmem:[%s9] sm:$0xf]
  %v3303 = vld [vmem:[%s9 + $0x4] sm:$0xf]
  %v3304 = vld [vmem:[%s9 + $0x8] sm:$0xf]
  %v3305 = vld [vmem:[%s9 + $0xc] sm:$0xf]
  %v3306 = vld [vmem:[%s9 + $0x10] sm:$0xf]
  %v3307 = vld [vmem:[%s9 + $0x14] sm:$0xf]
  %v3308 = vld [vmem:[%s9 + $0x18] sm:$0xf]
  %v3309 = vld [vmem:[%s9 + $0x1c] sm:$0xf]
  %v3310 = vld [vmem:[%s9 + $0x20] sm:$0xf]
  %v3311 = vld [vmem:[%s9 + $0x24] sm:$0xf]
  %v3312 = vld [vmem:[%s9 + $0x28] sm:$0x3]
  %v3313 = vld [vmem:[%s10] sm:$0x1]
  %v3315 = vlaneseq
  %v3316 = vshrl.u32 %v3315, 7
  %v3317 = vsub.s32 0, %v3316
  %v3318 = vrot.slane %v3313, %v3317
  %v3331 = vunpack.c.l.b16 %v3302
  %v3332 = vunpack.c.l.b16 %v3303
  %v3333 = vunpack.c.l.b16 %v3304
  %v3334 = vunpack.c.l.b16 %v3305
  %v3335 = vunpack.c.l.b16 %v3306
  %v3336 = vunpack.c.l.b16 %v3307
  %v3337 = vunpack.c.l.b16 %v3308
  %v3338 = vunpack.c.l.b16 %v3309
  %v3339 = vunpack.c.l.b16 %v3310
  %v3340 = vunpack.c.l.b16 %v3311
  %v3341 = vunpack.c.l.b16 %v3312
  %v3342 = vpack.c.b16 %v3332, %v3331
  %v3343 = vpack.c.b16 %v3334, %v3333
  %v3344 = vpack.c.b16 %v3336, %v3335
  %v3345 = vpack.c.b16 %v3338, %v3337
  %v3346 = vpack.c.b16 %v3340, %v3339
  %v3347 = vpack.c.b16 %v3341, %v3341
  %vm3353 = vcmask 687104
  %v3355 = vsel %vm3353, %v3301, 0
  %vm3357 = vcmask 1041408
  %v3359 = vsel %vm3357, %v3347, 0
  %3361 = vmatprep.subr.bf16.mxu0 0
  %3362 = vmatpush1.bf16.msra.mxu0 %v3342
  %3363 = vmatprep.subr.bf16.mxu0 0
  %3364 = vmatpush1.bf16.msra.mxu0 %v3343
  %3365 = vmatprep.subr.bf16.mxu0 0
  %3366 = vmatpush1.bf16.msra.mxu0 %v3344
  %3367 = vmatprep.subr.bf16.mxu0 0
  %3368 = vmatpush1.bf16.msra.mxu0 %v3345
  %3369 = vmatprep.subr.bf16.mxu0 0
  %3370 = vmatpush1.bf16.msra.mxu0 %v3346
  %3371 = vmatprep.subr.bf16.mxu0 0
  %3372 = vmatpush1.bf16.msra.mxu0 %v3359
  %3373 = vmatprep.subr.bf16.mxu0 0
  %3374 = vmatpush1.bf16.msra.mxu0 0
  %3375 = vmatprep.subr.bf16.mxu0 0
  %3376 = vmatpush1.bf16.msra.mxu0 0
  %3377 = vmatprep.subr.bf16.mxu0 0
  %3378 = vmatpush1.bf16.msra.mxu0 0
  %3379 = vmatprep.subr.bf16.mxu0 0
  %3380 = vmatpush1.bf16.msra.mxu0 0
  %3381 = vmatprep.subr.bf16.mxu0 0
  %3382 = vmatpush1.bf16.msra.mxu0 0
  %3383 = vmatprep.subr.bf16.mxu0 0
  %3384 = vmatpush1.bf16.msra.mxu0 0
  %3385 = vmatprep.subr.bf16.mxu0 0
  %3386 = vmatpush1.bf16.msra.mxu0 0
  %3387 = vmatprep.subr.bf16.mxu0 0
  %3388 = vmatpush1.bf16.msra.mxu0 0
  %3389 = vmatprep.subr.bf16.mxu0 0
  %3390 = vmatpush1.bf16.msra.mxu0 0
  %3391 = vmatprep.subr.bf16.mxu0 0
  %3392 = vmatpush1.bf16.msra.mxu0 0
  %3393 = vmatprep.mubr.bf16.mxu0 0
  %3394 = vmatmul.mubr.bf16.gmra.mrb[0].mxu0 %v3355
  %v3395 = vpop.f32.mrb[0].mxu0
  %v3396 = vadd.f32 %v3318, %v3395
  %v3397 = vpop.f32.mrb[0].mxu0
  %v3398 = vpop.f32.mrb[0].mxu0
  %v3399 = vpop.f32.mrb[0].mxu0
  %3400 = vdwg.mxu0
  %3401 = vst [vmem:[%s11] sm:$0xff] %v3396
  // Predicated region
  $region46: #{_lambda_.1} parent=0 // pred_check
    _
  $region47: #{_lambda_.1} parent=0 // pred_check_branch
    %3403 = sbr.rel (0) target = $region49
  $region48: #{_lambda_.1} parent=0 // pred_region
    _
  $region49: #{_lambda_.1} parent=0 // pred_fallthru
    _
  // Predicated region
  $region50: #{_lambda_.1} parent=0 // pred_check
    _
  $region51: #{_lambda_.1} parent=0 // pred_check_branch
    %3405 = sbr.rel (0) target = $region53
  $region52: #{_lambda_.1} parent=0 // pred_region
    _
  $region53: #{_lambda_.1} parent=0 // pred_fallthru
    _

</llo_original>
